<compile_context>
chip_gen: v7x
topology: tpu7x:2x2x1
jax: 0.10.0
libtpu: 0.0.40
codegen_flags: <defaults>
</compile_context>

<pallas_src>
import functools
import math

import jax
import jax.numpy as jnp
from jax.experimental import pallas as pl
from jax.experimental.pallas import tpu as pltpu


_PAR = pltpu.CompilerParams(dimension_semantics=("parallel",))


# ---------------------------------------------------------------------------
# Pallas kernels
# ---------------------------------------------------------------------------

def _pairwise_score_kernel(q_ref, p_ref, o_ref):
    # q: (Nq, 3) queries, p: (3, Np) database.
    # score[i, j] = ||p_j||^2 - 2 <q_i, p_j>  ==  ||q_i - p_j||^2 - ||q_i||^2.
    # The dropped ||q_i||^2 is constant per row, so per-query top-k ordering is unchanged.
    q = q_ref[...]
    p = p_ref[...]
    pn = jnp.sum(p * p, axis=0, keepdims=True)                       # (1, Np) sublane reduce
    cross = jnp.dot(q, p, preferred_element_type=jnp.float32)        # (Nq, Np) MXU
    o_ref[...] = pn - 2.0 * cross


def _featurenet_kernel(gx_ref, w0_ref, w1_ref, w2_ref, o_ref, *, k, n):
    # gx: (3, k*N) centered neighbor offsets (neighbor index is the slow factor of the lane axis),
    # w0: (D, 3), w1/w2: (D, D), o: (D, N) = max over the k slabs of relu-conv-chain(gx).
    gx = gx_ref[...]
    h = jnp.maximum(jnp.dot(w0_ref[...], gx, preferred_element_type=jnp.float32), 0.0)
    h = jnp.maximum(jnp.dot(w1_ref[...], h, preferred_element_type=jnp.float32), 0.0)
    h = jnp.maximum(jnp.dot(w2_ref[...], h, preferred_element_type=jnp.float32), 0.0)
    out = h[:, 0:n]
    for j in range(1, k):                      # static slices at multiples of N (lane-aligned)
        out = jnp.maximum(out, h[:, j * n:(j + 1) * n])
    o_ref[...] = out


def _res_block_kernel(s_ref, a_ref, w1_ref, w2_ref, r_ref, o_ref, *, inv_kp1):
    # s: (Din, N) pre-ReLU points, a: (N, N) neighbor-count adjacency A[j, i] = #{m: idx[i, m] == j},
    # w1/w2: (Co, Din), r: (Co, N) residual.
    # out = (w1 @ relu(s) + w2 @ (relu(s) @ A)) / (k+1) + r
    s_relu = jnp.maximum(s_ref[...], 0.0)
    n_agg = jnp.dot(s_relu, a_ref[...], preferred_element_type=jnp.float32)     # (Din, N)
    center = jnp.dot(w1_ref[...], s_relu, preferred_element_type=jnp.float32)   # (Co, N)
    neigh = jnp.dot(w2_ref[...], n_agg, preferred_element_type=jnp.float32)     # (Co, N)
    o_ref[...] = (center + neigh) * inv_kp1 + r_ref[...]


def _res_block_dual_kernel(s_ref, a_ref, w1_ref, w2_ref, wc_ref, wn_ref,
                           r_ref, xyz_ref, o_ref, x_ref, *, inv_kp1):
    # Last block of an unpool stage: the feature update and the xyz unpool head share
    # relu(s) and the adjacency aggregation (single DMA of s and A, no duplicate work).
    s_relu = jnp.maximum(s_ref[...], 0.0)
    n_agg = jnp.dot(s_relu, a_ref[...], preferred_element_type=jnp.float32)
    center = jnp.dot(w1_ref[...], s_relu, preferred_element_type=jnp.float32)
    neigh = jnp.dot(w2_ref[...], n_agg, preferred_element_type=jnp.float32)
    o_ref[...] = (center + neigh) * inv_kp1 + r_ref[...]
    center_x = jnp.dot(wc_ref[...], s_relu, preferred_element_type=jnp.float32)
    neigh_x = jnp.dot(wn_ref[...], n_agg, preferred_element_type=jnp.float32)
    x_ref[...] = (center_x + neigh_x) * inv_kp1 + xyz_ref[...]


def _mean_adj_kernel(p_ref, a_ref, o_ref, *, inv_k):
    # p: (D, Ns), a: (Ns, Nq) neighbor counts -> o = (p @ a) / k  (mean over k gathered neighbors)
    o_ref[...] = jnp.dot(p_ref[...], a_ref[...],
                         preferred_element_type=jnp.float32) * inv_k


# ---------------------------------------------------------------------------
# Pallas wrappers
# ---------------------------------------------------------------------------

def pairwise_knn_score(query, db):
    # query: (B, 3, Nq), db: (B, 3, Np) -> (B, Nq, Np) ordering-equivalent distance scores.
    B, _, Nq = query.shape
    Np = db.shape[2]
    q_t = jnp.transpose(query, (0, 2, 1))      # tiny (B, Nq, 3) lhs; keeps a known-good NN matmul
    return pl.pallas_call(
        _pairwise_score_kernel,
        out_shape=jax.ShapeDtypeStruct((B, Nq, Np), jnp.float32),
        grid=(B,),
        in_specs=[pl.BlockSpec((None, Nq, 3), lambda b: (b, 0, 0)),
                  pl.BlockSpec((None, 3, Np), lambda b: (b, 0, 0))],
        out_specs=pl.BlockSpec((None, Nq, Np), lambda b: (b, 0, 0)),
        compiler_params=_PAR,
        cost_estimate=pl.CostEstimate(
            flops=B * 2 * 3 * Nq * Np, transcendentals=0,
            bytes_accessed=4 * B * (3 * Nq + 3 * Np + Nq * Np)),
    )(q_t, db)


def featurenet_apply(gx_flat, w0, w1, w2, k):
    # gx_flat: (B, 3, k*N) centered neighbor offsets -> (B, D, N)
    B, _, KN = gx_flat.shape
    N = KN // k
    D = w0.shape[0]
    kern = functools.partial(_featurenet_kernel, k=k, n=N)
    return pl.pallas_call(
        kern,
        out_shape=jax.ShapeDtypeStruct((B, D, N), jnp.float32),
        grid=(B,),
        in_specs=[pl.BlockSpec((None, 3, KN), lambda b: (b, 0, 0)),
                  pl.BlockSpec((D, 3), lambda b: (0, 0)),
                  pl.BlockSpec((D, D), lambda b: (0, 0)),
                  pl.BlockSpec((D, D), lambda b: (0, 0))],
        out_specs=pl.BlockSpec((None, D, N), lambda b: (b, 0, 0)),
        compiler_params=_PAR,
        cost_estimate=pl.CostEstimate(
            flops=B * 2 * KN * (3 * D + 2 * D * D), transcendentals=0,
            bytes_accessed=4 * (B * (3 * KN + D * N) + 3 * D + 2 * D * D)),
    )(gx_flat, w0, w1, w2)


def res_block(points, adj, w1, w2, residual, k):
    # points: (B, Din, N), adj: (B, N, N), residual: (B, Co, N) -> (B, Co, N)
    B, D, N = points.shape
    Co = w1.shape[0]
    kern = functools.partial(_res_block_kernel, inv_kp1=1.0 / float(k + 1))
    return pl.pallas_call(
        kern,
        out_shape=jax.ShapeDtypeStruct((B, Co, N), jnp.float32),
        grid=(B,),
        in_specs=[pl.BlockSpec((None, D, N), lambda b: (b, 0, 0)),
                  pl.BlockSpec((None, N, N), lambda b: (b, 0, 0)),
                  pl.BlockSpec((Co, D), lambda b: (0, 0)),
                  pl.BlockSpec((Co, D), lambda b: (0, 0)),
                  pl.BlockSpec((None, Co, N), lambda b: (b, 0, 0))],
        out_specs=pl.BlockSpec((None, Co, N), lambda b: (b, 0, 0)),
        compiler_params=_PAR,
        cost_estimate=pl.CostEstimate(
            flops=B * 2 * N * (D * N + 2 * Co * D), transcendentals=0,
            bytes_accessed=4 * (B * (D * N + N * N + 2 * Co * N) + 2 * Co * D)),
    )(points, adj, w1, w2, residual)


def res_block_dual(points, adj, w1, w2, wc, wn, residual, xyz, k):
    # Fused last block: returns (new_points (B, Co, N), new_xyz (B, 3, N)).
    B, D, N = points.shape
    Co = w1.shape[0]
    Cx = wc.shape[0]
    kern = functools.partial(_res_block_dual_kernel, inv_kp1=1.0 / float(k + 1))
    return pl.pallas_call(
        kern,
        out_shape=(jax.ShapeDtypeStruct((B, Co, N), jnp.float32),
                   jax.ShapeDtypeStruct((B, Cx, N), jnp.float32)),
        grid=(B,),
        in_specs=[pl.BlockSpec((None, D, N), lambda b: (b, 0, 0)),
                  pl.BlockSpec((None, N, N), lambda b: (b, 0, 0)),
                  pl.BlockSpec((Co, D), lambda b: (0, 0)),
                  pl.BlockSpec((Co, D), lambda b: (0, 0)),
                  pl.BlockSpec((Cx, D), lambda b: (0, 0)),
                  pl.BlockSpec((Cx, D), lambda b: (0, 0)),
                  pl.BlockSpec((None, Co, N), lambda b: (b, 0, 0)),
                  pl.BlockSpec((None, Cx, N), lambda b: (b, 0, 0))],
        out_specs=(pl.BlockSpec((None, Co, N), lambda b: (b, 0, 0)),
                   pl.BlockSpec((None, Cx, N), lambda b: (b, 0, 0))),
        compiler_params=_PAR,
        cost_estimate=pl.CostEstimate(
            flops=B * 2 * N * (D * N + 2 * (Co + Cx) * D), transcendentals=0,
            bytes_accessed=4 * (B * (D * N + N * N + 2 * Co * N + 2 * Cx * N)
                                + 2 * Co * D + 2 * Cx * D)),
    )(points, adj, w1, w2, wc, wn, residual, xyz)


def mean_adjacency(points, adj, k):
    # points: (B, D, Ns), adj: (B, Ns, Nq) -> (B, D, Nq) mean over the k gathered neighbors.
    B, D, Ns = points.shape
    Nq = adj.shape[2]
    kern = functools.partial(_mean_adj_kernel, inv_k=1.0 / float(k))
    return pl.pallas_call(
        kern,
        out_shape=jax.ShapeDtypeStruct((B, D, Nq), jnp.float32),
        grid=(B,),
        in_specs=[pl.BlockSpec((None, D, Ns), lambda b: (b, 0, 0)),
                  pl.BlockSpec((None, Ns, Nq), lambda b: (b, 0, 0))],
        out_specs=pl.BlockSpec((None, D, Nq), lambda b: (b, 0, 0)),
        compiler_params=_PAR,
        cost_estimate=pl.CostEstimate(
            flops=B * 2 * D * Ns * Nq, transcendentals=0,
            bytes_accessed=4 * B * (D * Ns + Ns * Nq + D * Nq)),
    )(points, adj)


# ---------------------------------------------------------------------------
# JAX glue: KNN top-k, adjacency build, small gathers (data-dependent, not in Pallas)
# ---------------------------------------------------------------------------

def knn_indices(query, db, k):
    # k nearest neighbors of each query point in db, sorted by ascending distance.
    # query/db: (B, 3, N*) -> idx: (B, Nq, k)
    score = pairwise_knn_score(query, db)   # (B, Nq, Np)  [Pallas]
    _, idx = jax.lax.top_k(-score, k)       # ascending distance ordering
    return idx


def build_adjacency(idx, n_src):
    # idx: (B, Nq, k) -> A: (B, n_src, Nq), A[b, j, i] = #{m : idx[b, i, m] == j}
    oh = jax.nn.one_hot(idx, n_src, axis=1, dtype=jnp.float32)   # (B, n_src, Nq, k)
    return jnp.sum(oh, axis=-1)


def gather_centered_flat(xyz, idx):
    # xyz: (B, 3, N), idx: (B, N, k) -> (B, 3, k*N)
    #   out[b, c, m*N + i] = xyz[b, c, idx[b, i, m]] - xyz[b, c, i]
    B, C, N = xyz.shape
    k = idx.shape[-1]

    def one(pts, ind):
        g = pts[:, ind.T]            # (3, k, N)
        g = g - pts[:, None, :]      # center on the query point
        return g.reshape(C, k * N)

    return jax.vmap(one)(xyz, idx)


# ---------------------------------------------------------------------------
# Model forward
# ---------------------------------------------------------------------------

def featurenet_forward(xyz, weights, k):
    # FeatureNet: knn-group xyz (drop self, center), 3x (conv1x1 + relu), max over k.
    idx = knn_indices(xyz, xyz, k + 1)[:, :, 1:]   # drop self -> (B, N, k)
    gx = gather_centered_flat(xyz, idx)            # (B, 3, k*N)
    return featurenet_apply(gx, weights[0], weights[1], weights[2], k)


def res_unpool_forward(xyz, points, params, k):
    # ResGraphConvUnpool: 12 residual graph-conv blocks + xyz unpool head on the last one.
    conv_ws = params["convs"]
    wc = params["unpool_center"]
    wn = params["unpool_neighbor"]
    N = xyz.shape[-1]
    idx = knn_indices(xyz, xyz, k + 1)[:, :, 1:]   # computed once (block 0), reused
    adj = build_adjacency(idx, N)                  # (B, N, N) neighbor-count matrix
    for i in range(len(conv_ws) - 1):
        w1, w2 = conv_ws[i]
        points = res_block(points, adj, w1, w2, points, k)
    w1, w2 = conv_ws[-1]
    points, new_xyz = res_block_dual(points, adj, w1, w2, wc, wn, points, xyz, k)
    return new_xyz, points


def generator_forward(params, xyz, k):
    points = featurenet_forward(xyz, params["feat"], k)                 # (B, feat_dim, N)
    new_xyz, points = res_unpool_forward(xyz, points, params["res1"], k)
    idx = knn_indices(new_xyz, xyz, k)                                  # (B, N, k), no self-drop
    adj = build_adjacency(idx, xyz.shape[-1])                           # (B, N, N)
    points = mean_adjacency(points, adj, k)                             # (B, dim, N)
    new_xyz, points = res_unpool_forward(new_xyz, points, params["res2"], k)
    return new_xyz                                                      # (B, 3, N)


# ---------------------------------------------------------------------------
# Deterministic parameter init (xavier uniform, matching nn.Conv2d 1x1 no-bias)
# ---------------------------------------------------------------------------

def init_params(key, feat_dim, res_conv_dim, num_blocks=12):
    assert feat_dim == res_conv_dim, "residual add requires feat_dim == res_conv_dim"
    n_keys = 3 + 2 * (2 * num_blocks + 2)
    keys = iter(jax.random.split(key, n_keys))

    def xavier(co, ci):
        bound = math.sqrt(6.0 / (ci + co))
        return jax.random.uniform(next(keys), (co, ci), jnp.float32, -bound, bound)

    feat = [xavier(feat_dim, 3), xavier(feat_dim, feat_dim), xavier(feat_dim, feat_dim)]

    def res(in_dim, dim):
        convs = [(xavier(dim, in_dim), xavier(dim, dim)) for _ in range(num_blocks)]
        return {"convs": convs,
                "unpool_center": xavier(3, dim),
                "unpool_neighbor": xavier(3, dim)}

    return {"feat": feat,
            "res1": res(feat_dim, res_conv_dim),
            "res2": res(res_conv_dim, res_conv_dim)}


# ---------------------------------------------------------------------------

if __name__ == "__main__":
    cfg = {"k": 4, "feat_dim": 32, "res_conv_dim": 32}
    B, N = 2, 128   # N=128 -> every kernel tile is lane-dense (no masked partial stores)

    key = jax.random.PRNGKey(0)
    pkey, xkey = jax.random.split(key)
    params = init_params(pkey, cfg["feat_dim"], cfg["res_conv_dim"])
    xyz = jax.random.normal(xkey, (B, 3, N), dtype=jnp.float32)   # (B, 3, N) point cloud

    fwd = jax.jit(functools.partial(generator_forward, k=cfg["k"]))
    out = fwd(params, xyz)
    jax.block_until_ready(out)
    assert out.shape == (B, 3, N) and out.dtype == jnp.float32
    print("KERNEL_OK")
</pallas_src>

<mosaic_0001>
module attributes {stable_mosaic.version = 11 : i64} {
  func.func @_pairwise_score_kernel(%arg0: i32, %arg1: memref<1x128x3xf32, #tpu.memory_space<vmem>>, %arg2: memref<1x3x128xf32, #tpu.memory_space<vmem>>, %arg3: memref<1x128x128xf32, #tpu.memory_space<vmem>>) attributes {dimension_semantics = [#tpu.dimension_semantics<parallel>], iteration_bounds = array<i64: 2>, scalar_prefetch = 0 : i64, scratch_operands = 0 : i64, tpu.core_type = #tpu.core_type<tc>, window_params = [{transform_indices = @transform_0, window_bounds = array<i64: 1, 128, 3>}, {transform_indices = @transform_1, window_bounds = array<i64: 1, 3, 128>}, {transform_indices = @transform_2, window_bounds = array<i64: 1, 128, 128>}]} {
    %c0 = arith.constant 0 : index
    %c0_0 = arith.constant 0 : index
    %c0_1 = arith.constant 0 : index
    %0 = vector.load %arg1[%c0, %c0_0, %c0_1] : memref<1x128x3xf32, #tpu.memory_space<vmem>>, vector<1x128x3xf32>
    %1 = vector.shape_cast %0 : vector<1x128x3xf32> to vector<128x3xf32>
    %c0_2 = arith.constant 0 : index
    %c0_3 = arith.constant 0 : index
    %c0_4 = arith.constant 0 : index
    %2 = vector.load %arg2[%c0_2, %c0_3, %c0_4] : memref<1x3x128xf32, #tpu.memory_space<vmem>>, vector<1x3x128xf32>
    %3 = vector.shape_cast %2 : vector<1x3x128xf32> to vector<3x128xf32>
    %4 = arith.mulf %3, %3 : vector<3x128xf32>
    %cst = arith.constant dense<0.000000e+00> : vector<128xf32>
    %5 = vector.multi_reduction <add>, %4, %cst [0] : vector<3x128xf32> to vector<128xf32>
    %6 = vector.shape_cast %5 : vector<128xf32> to vector<1x128xf32>
    %cst_5 = arith.constant dense<0.000000e+00> : vector<128x128xf32>
    %7 = tpu.matmul %1, %3, %cst_5 {dimension_numbers = #tpu.dot_dimension_numbers<[1], [0], [0], [1], [0, 0, 1, 1], [], []>} : vector<128x3xf32>, vector<3x128xf32>, vector<128x128xf32> -> vector<128x128xf32>
    %cst_6 = arith.constant 2.000000e+00 : f32
    %8 = vector.broadcast %cst_6 : f32 to vector<128x128xf32>
    %9 = arith.mulf %8, %7 : vector<128x128xf32>
    %10 = vector.broadcast %6 : vector<1x128xf32> to vector<128x128xf32>
    %11 = arith.subf %10, %9 : vector<128x128xf32>
    %c0_7 = arith.constant 0 : index
    %c0_8 = arith.constant 0 : index
    %c0_9 = arith.constant 0 : index
    %12 = vector.load %arg3[%c0_7, %c0_8, %c0_9] : memref<1x128x128xf32, #tpu.memory_space<vmem>>, vector<1x128x128xf32>
    %13 = vector.shape_cast %12 : vector<1x128x128xf32> to vector<128x128xf32>
    %14 = vector.shape_cast %11 : vector<128x128xf32> to vector<1x128x128xf32>
    tpu.vector_store %arg3[%c0_7, %c0_8, %c0_9], %14 {strides = array<i32>} : memref<1x128x128xf32, #tpu.memory_space<vmem>>, vector<1x128x128xf32>,
    return
  }
  func.func @transform_0(%arg0: i32) -> (i32, i32, i32) {
    %c0_i32 = arith.constant 0 : i32
    %c0_i32_0 = arith.constant 0 : i32
    %c0_i32_1 = arith.constant 0 : i32
    return %arg0, %c0_i32, %c0_i32_0 : i32, i32, i32
  }
  func.func @transform_1(%arg0: i32) -> (i32, i32, i32) {
    %c0_i32 = arith.constant 0 : i32
    %c0_i32_0 = arith.constant 0 : i32
    %c0_i32_1 = arith.constant 0 : i32
    return %arg0, %c0_i32, %c0_i32_0 : i32, i32, i32
  }
  func.func @transform_2(%arg0: i32) -> (i32, i32, i32) {
    %c0_i32 = arith.constant 0 : i32
    %c0_i32_0 = arith.constant 0 : i32
    %c0_i32_1 = arith.constant 0 : i32
    return %arg0, %c0_i32, %c0_i32_0 : i32, i32, i32
  }
}

module attributes {stable_mosaic.version = 11 : i64} {
  func.func @_featurenet_kernel(%arg0: i32, %arg1: memref<1x3x512xf32, #tpu.memory_space<vmem>>, %arg2: memref<32x3xf32, #tpu.memory_space<vmem>>, %arg3: memref<32x32xf32, #tpu.memory_space<vmem>>, %arg4: memref<32x32xf32, #tpu.memory_space<vmem>>, %arg5: memref<1x32x128xf32, #tpu.memory_space<vmem>>) attributes {dimension_semantics = [#tpu.dimension_semantics<parallel>], iteration_bounds = array<i64: 2>, scalar_prefetch = 0 : i64, scratch_operands = 0 : i64, tpu.core_type = #tpu.core_type<tc>, window_params = [{transform_indices = @transform_0, window_bounds = array<i64: 1, 3, 512>}, {pipeline_mode = #tpu.pipeline_mode<synchronous>, transform_indices = @transform_1, window_bounds = array<i64: 32, 3>}, {pipeline_mode = #tpu.pipeline_mode<synchronous>, transform_indices = @transform_2, window_bounds = array<i64: 32, 32>}, {pipeline_mode = #tpu.pipeline_mode<synchronous>, transform_indices = @transform_3, window_bounds = array<i64: 32, 32>}, {transform_indices = @transform_4, window_bounds = array<i64: 1, 32, 128>}]} {
    %c0 = arith.constant 0 : index
    %c0_0 = arith.constant 0 : index
    %c0_1 = arith.constant 0 : index
    %0 = vector.load %arg1[%c0, %c0_0, %c0_1] : memref<1x3x512xf32, #tpu.memory_space<vmem>>, vector<1x3x512xf32>
    %1 = vector.shape_cast %0 : vector<1x3x512xf32> to vector<3x512xf32>
    %c0_2 = arith.constant 0 : index
    %c0_3 = arith.constant 0 : index
    %2 = vector.load %arg2[%c0_2, %c0_3] : memref<32x3xf32, #tpu.memory_space<vmem>>, vector<32x3xf32>
    %cst = arith.constant dense<0.000000e+00> : vector<32x512xf32>
    %3 = tpu.matmul %2, %1, %cst {dimension_numbers = #tpu.dot_dimension_numbers<[1], [0], [0], [1], [0, 0, 1, 1], [], []>} : vector<32x3xf32>, vector<3x512xf32>, vector<32x512xf32> -> vector<32x512xf32>
    %cst_4 = arith.constant 0.000000e+00 : f32
    %4 = vector.broadcast %cst_4 : f32 to vector<32x512xf32>
    %5 = arith.maximumf %3, %4 : vector<32x512xf32>
    %c0_5 = arith.constant 0 : index
    %c0_6 = arith.constant 0 : index
    %6 = vector.load %arg3[%c0_5, %c0_6] : memref<32x32xf32, #tpu.memory_space<vmem>>, vector<32x32xf32>
    %cst_7 = arith.constant dense<0.000000e+00> : vector<32x512xf32>
    %7 = tpu.matmul %6, %5, %cst_7 {dimension_numbers = #tpu.dot_dimension_numbers<[1], [0], [0], [1], [0, 0, 1, 1], [], []>} : vector<32x32xf32>, vector<32x512xf32>, vector<32x512xf32> -> vector<32x512xf32>
    %cst_8 = arith.constant 0.000000e+00 : f32
    %8 = vector.broadcast %cst_8 : f32 to vector<32x512xf32>
    %9 = arith.maximumf %7, %8 : vector<32x512xf32>
    %c0_9 = arith.constant 0 : index
    %c0_10 = arith.constant 0 : index
    %10 = vector.load %arg4[%c0_9, %c0_10] : memref<32x32xf32, #tpu.memory_space<vmem>>, vector<32x32xf32>
    %cst_11 = arith.constant dense<0.000000e+00> : vector<32x512xf32>
    %11 = tpu.matmul %10, %9, %cst_11 {dimension_numbers = #tpu.dot_dimension_numbers<[1], [0], [0], [1], [0, 0, 1, 1], [], []>} : vector<32x32xf32>, vector<32x512xf32>, vector<32x512xf32> -> vector<32x512xf32>
    %cst_12 = arith.constant 0.000000e+00 : f32
    %12 = vector.broadcast %cst_12 : f32 to vector<32x512xf32>
    %13 = arith.maximumf %11, %12 : vector<32x512xf32>
    %14 = vector.extract_strided_slice %13 {offsets = [0, 0], sizes = [32, 128], strides = [1, 1]} : vector<32x512xf32> to vector<32x128xf32>
    %15 = vector.extract_strided_slice %13 {offsets = [0, 128], sizes = [32, 128], strides = [1, 1]} : vector<32x512xf32> to vector<32x128xf32>
    %16 = arith.maximumf %14, %15 : vector<32x128xf32>
    %17 = vector.extract_strided_slice %13 {offsets = [0, 256], sizes = [32, 128], strides = [1, 1]} : vector<32x512xf32> to vector<32x128xf32>
    %18 = arith.maximumf %16, %17 : vector<32x128xf32>
    %19 = vector.extract_strided_slice %13 {offsets = [0, 384], sizes = [32, 128], strides = [1, 1]} : vector<32x512xf32> to vector<32x128xf32>
    %20 = arith.maximumf %18, %19 : vector<32x128xf32>
    %c0_13 = arith.constant 0 : index
    %c0_14 = arith.constant 0 : index
    %c0_15 = arith.constant 0 : index
    %21 = vector.load %arg5[%c0_13, %c0_14, %c0_15] : memref<1x32x128xf32, #tpu.memory_space<vmem>>, vector<1x32x128xf32>
    %22 = vector.shape_cast %21 : vector<1x32x128xf32> to vector<32x128xf32>
    %23 = vector.shape_cast %20 : vector<32x128xf32> to vector<1x32x128xf32>
    tpu.vector_store %arg5[%c0_13, %c0_14, %c0_15], %23 {strides = array<i32>} : memref<1x32x128xf32, #tpu.memory_space<vmem>>, vector<1x32x128xf32>,
    return
  }
  func.func @transform_0(%arg0: i32) -> (i32, i32, i32) {
    %c0_i32 = arith.constant 0 : i32
    %c0_i32_0 = arith.constant 0 : i32
    %c0_i32_1 = arith.constant 0 : i32
    return %arg0, %c0_i32, %c0_i32_0 : i32, i32, i32
  }
  func.func @transform_1(%arg0: i32) -> (i32, i32) {
    %c0_i32 = arith.constant 0 : i32
    %c0_i32_0 = arith.constant 0 : i32
    %c0_i32_1 = arith.constant 0 : i32
    return %c0_i32, %c0_i32_0 : i32, i32
  }
  func.func @transform_2(%arg0: i32) -> (i32, i32) {
    %c0_i32 = arith.constant 0 : i32
    %c0_i32_0 = arith.constant 0 : i32
    %c0_i32_1 = arith.constant 0 : i32
    return %c0_i32, %c0_i32_0 : i32, i32
  }
  func.func @transform_3(%arg0: i32) -> (i32, i32) {
    %c0_i32 = arith.constant 0 : i32
    %c0_i32_0 = arith.constant 0 : i32
    %c0_i32_1 = arith.constant 0 : i32
    return %c0_i32, %c0_i32_0 : i32, i32
  }
  func.func @transform_4(%arg0: i32) -> (i32, i32, i32) {
    %c0_i32 = arith.constant 0 : i32
    %c0_i32_0 = arith.constant 0 : i32
    %c0_i32_1 = arith.constant 0 : i32
    return %arg0, %c0_i32, %c0_i32_0 : i32, i32, i32
  }
}

module attributes {stable_mosaic.version = 11 : i64} {
  func.func @_res_block_kernel(%arg0: i32, %arg1: memref<1x32x128xf32, #tpu.memory_space<vmem>>, %arg2: memref<1x128x128xf32, #tpu.memory_space<vmem>>, %arg3: memref<32x32xf32, #tpu.memory_space<vmem>>, %arg4: memref<32x32xf32, #tpu.memory_space<vmem>>, %arg5: memref<1x32x128xf32, #tpu.memory_space<vmem>>, %arg6: memref<1x32x128xf32, #tpu.memory_space<vmem>>) attributes {dimension_semantics = [#tpu.dimension_semantics<parallel>], iteration_bounds = array<i64: 2>, scalar_prefetch = 0 : i64, scratch_operands = 0 : i64, tpu.core_type = #tpu.core_type<tc>, window_params = [{transform_indices = @transform_0, window_bounds = array<i64: 1, 32, 128>}, {transform_indices = @transform_1, window_bounds = array<i64: 1, 128, 128>}, {pipeline_mode = #tpu.pipeline_mode<synchronous>, transform_indices = @transform_2, window_bounds = array<i64: 32, 32>}, {pipeline_mode = #tpu.pipeline_mode<synchronous>, transform_indices = @transform_3, window_bounds = array<i64: 32, 32>}, {transform_indices = @transform_4, window_bounds = array<i64: 1, 32, 128>}, {transform_indices = @transform_5, window_bounds = array<i64: 1, 32, 128>}]} {
    %c0 = arith.constant 0 : index
    %c0_0 = arith.constant 0 : index
    %c0_1 = arith.constant 0 : index
    %0 = vector.load %arg1[%c0, %c0_0, %c0_1] : memref<1x32x128xf32, #tpu.memory_space<vmem>>, vector<1x32x128xf32>
    %1 = vector.shape_cast %0 : vector<1x32x128xf32> to vector<32x128xf32>
    %cst = arith.constant 0.000000e+00 : f32
    %2 = vector.broadcast %cst : f32 to vector<32x128xf32>
    %3 = arith.maximumf %1, %2 : vector<32x128xf32>
    %c0_2 = arith.constant 0 : index
    %c0_3 = arith.constant 0 : index
    %c0_4 = arith.constant 0 : index
    %4 = vector.load %arg2[%c0_2, %c0_3, %c0_4] : memref<1x128x128xf32, #tpu.memory_space<vmem>>, vector<1x128x128xf32>
    %5 = vector.shape_cast %4 : vector<1x128x128xf32> to vector<128x128xf32>
    %cst_5 = arith.constant dense<0.000000e+00> : vector<32x128xf32>
    %6 = tpu.matmul %3, %5, %cst_5 {dimension_numbers = #tpu.dot_dimension_numbers<[1], [0], [0], [1], [0, 0, 1, 1], [], []>} : vector<32x128xf32>, vector<128x128xf32>, vector<32x128xf32> -> vector<32x128xf32>
    %c0_6 = arith.constant 0 : index
    %c0_7 = arith.constant 0 : index
    %7 = vector.load %arg3[%c0_6, %c0_7] : memref<32x32xf32, #tpu.memory_space<vmem>>, vector<32x32xf32>
    %cst_8 = arith.constant dense<0.000000e+00> : vector<32x128xf32>
    %8 = tpu.matmul %7, %3, %cst_8 {dimension_numbers = #tpu.dot_dimension_numbers<[1], [0], [0], [1], [0, 0, 1, 1], [], []>} : vector<32x32xf32>, vector<32x128xf32>, vector<32x128xf32> -> vector<32x128xf32>
    %c0_9 = arith.constant 0 : index
    %c0_10 = arith.constant 0 : index
    %9 = vector.load %arg4[%c0_9, %c0_10] : memref<32x32xf32, #tpu.memory_space<vmem>>, vector<32x32xf32>
    %cst_11 = arith.constant dense<0.000000e+00> : vector<32x128xf32>
    %10 = tpu.matmul %9, %6, %cst_11 {dimension_numbers = #tpu.dot_dimension_numbers<[1], [0], [0], [1], [0, 0, 1, 1], [], []>} : vector<32x32xf32>, vector<32x128xf32>, vector<32x128xf32> -> vector<32x128xf32>
    %11 = arith.addf %8, %10 : vector<32x128xf32>
    %cst_12 = arith.constant 2.000000e-01 : f32
    %12 = vector.broadcast %cst_12 : f32 to vector<32x128xf32>
    %13 = arith.mulf %11, %12 : vector<32x128xf32>
    %c0_13 = arith.constant 0 : index
    %c0_14 = arith.constant 0 : index
    %c0_15 = arith.constant 0 : index
    %14 = vector.load %arg5[%c0_13, %c0_14, %c0_15] : memref<1x32x128xf32, #tpu.memory_space<vmem>>, vector<1x32x128xf32>
    %15 = vector.shape_cast %14 : vector<1x32x128xf32> to vector<32x128xf32>
    %16 = arith.addf %13, %15 : vector<32x128xf32>
    %c0_16 = arith.constant 0 : index
    %c0_17 = arith.constant 0 : index
    %c0_18 = arith.constant 0 : index
    %17 = vector.load %arg6[%c0_16, %c0_17, %c0_18] : memref<1x32x128xf32, #tpu.memory_space<vmem>>, vector<1x32x128xf32>
    %18 = vector.shape_cast %17 : vector<1x32x128xf32> to vector<32x128xf32>
    %19 = vector.shape_cast %16 : vector<32x128xf32> to vector<1x32x128xf32>
    tpu.vector_store %arg6[%c0_16, %c0_17, %c0_18], %19 {strides = array<i32>} : memref<1x32x128xf32, #tpu.memory_space<vmem>>, vector<1x32x128xf32>,
    return
  }
  func.func @transform_0(%arg0: i32) -> (i32, i32, i32) {
    %c0_i32 = arith.constant 0 : i32
    %c0_i32_0 = arith.constant 0 : i32
    %c0_i32_1 = arith.constant 0 : i32
    return %arg0, %c0_i32, %c0_i32_0 : i32, i32, i32
  }
  func.func @transform_1(%arg0: i32) -> (i32, i32, i32) {
    %c0_i32 = arith.constant 0 : i32
    %c0_i32_0 = arith.constant 0 : i32
    %c0_i32_1 = arith.constant 0 : i32
    return %arg0, %c0_i32, %c0_i32_0 : i32, i32, i32
  }
  func.func @transform_2(%arg0: i32) -> (i32, i32) {
    %c0_i32 = arith.constant 0 : i32
    %c0_i32_0 = arith.constant 0 : i32
    %c0_i32_1 = arith.constant 0 : i32
    return %c0_i32, %c0_i32_0 : i32, i32
  }
  func.func @transform_3(%arg0: i32) -> (i32, i32) {
    %c0_i32 = arith.constant 0 : i32
    %c0_i32_0 = arith.constant 0 : i32
    %c0_i32_1 = arith.constant 0 : i32
    return %c0_i32, %c0_i32_0 : i32, i32
  }
  func.func @transform_4(%arg0: i32) -> (i32, i32, i32) {
    %c0_i32 = arith.constant 0 : i32
    %c0_i32_0 = arith.constant 0 : i32
    %c0_i32_1 = arith.constant 0 : i32
    return %arg0, %c0_i32, %c0_i32_0 : i32, i32, i32
  }
  func.func @transform_5(%arg0: i32) -> (i32, i32, i32) {
    %c0_i32 = arith.constant 0 : i32
    %c0_i32_0 = arith.constant 0 : i32
    %c0_i32_1 = arith.constant 0 : i32
    return %arg0, %c0_i32, %c0_i32_0 : i32, i32, i32
  }
}

module attributes {stable_mosaic.version = 11 : i64} {
  func.func @_mean_adj_kernel(%arg0: i32, %arg1: memref<1x32x128xf32, #tpu.memory_space<vmem>>, %arg2: memref<1x128x128xf32, #tpu.memory_space<vmem>>, %arg3: memref<1x32x128xf32, #tpu.memory_space<vmem>>) attributes {dimension_semantics = [#tpu.dimension_semantics<parallel>], iteration_bounds = array<i64: 2>, scalar_prefetch = 0 : i64, scratch_operands = 0 : i64, tpu.core_type = #tpu.core_type<tc>, window_params = [{transform_indices = @transform_0, window_bounds = array<i64: 1, 32, 128>}, {transform_indices = @transform_1, window_bounds = array<i64: 1, 128, 128>}, {transform_indices = @transform_2, window_bounds = array<i64: 1, 32, 128>}]} {
    %c0 = arith.constant 0 : index
    %c0_0 = arith.constant 0 : index
    %c0_1 = arith.constant 0 : index
    %0 = vector.load %arg1[%c0, %c0_0, %c0_1] : memref<1x32x128xf32, #tpu.memory_space<vmem>>, vector<1x32x128xf32>
    %1 = vector.shape_cast %0 : vector<1x32x128xf32> to vector<32x128xf32>
    %c0_2 = arith.constant 0 : index
    %c0_3 = arith.constant 0 : index
    %c0_4 = arith.constant 0 : index
    %2 = vector.load %arg2[%c0_2, %c0_3, %c0_4] : memref<1x128x128xf32, #tpu.memory_space<vmem>>, vector<1x128x128xf32>
    %3 = vector.shape_cast %2 : vector<1x128x128xf32> to vector<128x128xf32>
    %cst = arith.constant dense<0.000000e+00> : vector<32x128xf32>
    %4 = tpu.matmul %1, %3, %cst {dimension_numbers = #tpu.dot_dimension_numbers<[1], [0], [0], [1], [0, 0, 1, 1], [], []>} : vector<32x128xf32>, vector<128x128xf32>, vector<32x128xf32> -> vector<32x128xf32>
    %cst_5 = arith.constant 2.500000e-01 : f32
    %5 = vector.broadcast %cst_5 : f32 to vector<32x128xf32>
    %6 = arith.mulf %4, %5 : vector<32x128xf32>
    %c0_6 = arith.constant 0 : index
    %c0_7 = arith.constant 0 : index
    %c0_8 = arith.constant 0 : index
    %7 = vector.load %arg3[%c0_6, %c0_7, %c0_8] : memref<1x32x128xf32, #tpu.memory_space<vmem>>, vector<1x32x128xf32>
    %8 = vector.shape_cast %7 : vector<1x32x128xf32> to vector<32x128xf32>
    %9 = vector.shape_cast %6 : vector<32x128xf32> to vector<1x32x128xf32>
    tpu.vector_store %arg3[%c0_6, %c0_7, %c0_8], %9 {strides = array<i32>} : memref<1x32x128xf32, #tpu.memory_space<vmem>>, vector<1x32x128xf32>,
    return
  }
  func.func @transform_0(%arg0: i32) -> (i32, i32, i32) {
    %c0_i32 = arith.constant 0 : i32
    %c0_i32_0 = arith.constant 0 : i32
    %c0_i32_1 = arith.constant 0 : i32
    return %arg0, %c0_i32, %c0_i32_0 : i32, i32, i32
  }
  func.func @transform_1(%arg0: i32) -> (i32, i32, i32) {
    %c0_i32 = arith.constant 0 : i32
    %c0_i32_0 = arith.constant 0 : i32
    %c0_i32_1 = arith.constant 0 : i32
    return %arg0, %c0_i32, %c0_i32_0 : i32, i32, i32
  }
  func.func @transform_2(%arg0: i32) -> (i32, i32, i32) {
    %c0_i32 = arith.constant 0 : i32
    %c0_i32_0 = arith.constant 0 : i32
    %c0_i32_1 = arith.constant 0 : i32
    return %arg0, %c0_i32, %c0_i32_0 : i32, i32, i32
  }
}

module attributes {stable_mosaic.version = 11 : i64} {
  func.func @_res_block_dual_kernel(%arg0: i32, %arg1: memref<1x32x128xf32, #tpu.memory_space<vmem>>, %arg2: memref<1x128x128xf32, #tpu.memory_space<vmem>>, %arg3: memref<32x32xf32, #tpu.memory_space<vmem>>, %arg4: memref<32x32xf32, #tpu.memory_space<vmem>>, %arg5: memref<3x32xf32, #tpu.memory_space<vmem>>, %arg6: memref<3x32xf32, #tpu.memory_space<vmem>>, %arg7: memref<1x32x128xf32, #tpu.memory_space<vmem>>, %arg8: memref<1x3x128xf32, #tpu.memory_space<vmem>>, %arg9: memref<1x32x128xf32, #tpu.memory_space<vmem>>, %arg10: memref<1x3x128xf32, #tpu.memory_space<vmem>>) attributes {dimension_semantics = [#tpu.dimension_semantics<parallel>], iteration_bounds = array<i64: 2>, scalar_prefetch = 0 : i64, scratch_operands = 0 : i64, tpu.core_type = #tpu.core_type<tc>, window_params = [{transform_indices = @transform_0, window_bounds = array<i64: 1, 32, 128>}, {transform_indices = @transform_1, window_bounds = array<i64: 1, 128, 128>}, {pipeline_mode = #tpu.pipeline_mode<synchronous>, transform_indices = @transform_2, window_bounds = array<i64: 32, 32>}, {pipeline_mode = #tpu.pipeline_mode<synchronous>, transform_indices = @transform_3, window_bounds = array<i64: 32, 32>}, {pipeline_mode = #tpu.pipeline_mode<synchronous>, transform_indices = @transform_4, window_bounds = array<i64: 3, 32>}, {pipeline_mode = #tpu.pipeline_mode<synchronous>, transform_indices = @transform_5, window_bounds = array<i64: 3, 32>}, {transform_indices = @transform_6, window_bounds = array<i64: 1, 32, 128>}, {transform_indices = @transform_7, window_bounds = array<i64: 1, 3, 128>}, {transform_indices = @transform_8, window_bounds = array<i64: 1, 32, 128>}, {transform_indices = @transform_9, window_bounds = array<i64: 1, 3, 128>}]} {
    %c0 = arith.constant 0 : index
    %c0_0 = arith.constant 0 : index
    %c0_1 = arith.constant 0 : index
    %0 = vector.load %arg1[%c0, %c0_0, %c0_1] : memref<1x32x128xf32, #tpu.memory_space<vmem>>, vector<1x32x128xf32>
    %1 = vector.shape_cast %0 : vector<1x32x128xf32> to vector<32x128xf32>
    %cst = arith.constant 0.000000e+00 : f32
    %2 = vector.broadcast %cst : f32 to vector<32x128xf32>
    %3 = arith.maximumf %1, %2 : vector<32x128xf32>
    %c0_2 = arith.constant 0 : index
    %c0_3 = arith.constant 0 : index
    %c0_4 = arith.constant 0 : index
    %4 = vector.load %arg2[%c0_2, %c0_3, %c0_4] : memref<1x128x128xf32, #tpu.memory_space<vmem>>, vector<1x128x128xf32>
    %5 = vector.shape_cast %4 : vector<1x128x128xf32> to vector<128x128xf32>
    %cst_5 = arith.constant dense<0.000000e+00> : vector<32x128xf32>
    %6 = tpu.matmul %3, %5, %cst_5 {dimension_numbers = #tpu.dot_dimension_numbers<[1], [0], [0], [1], [0, 0, 1, 1], [], []>} : vector<32x128xf32>, vector<128x128xf32>, vector<32x128xf32> -> vector<32x128xf32>
    %c0_6 = arith.constant 0 : index
    %c0_7 = arith.constant 0 : index
    %7 = vector.load %arg3[%c0_6, %c0_7] : memref<32x32xf32, #tpu.memory_space<vmem>>, vector<32x32xf32>
    %cst_8 = arith.constant dense<0.000000e+00> : vector<32x128xf32>
    %8 = tpu.matmul %7, %3, %cst_8 {dimension_numbers = #tpu.dot_dimension_numbers<[1], [0], [0], [1], [0, 0, 1, 1], [], []>} : vector<32x32xf32>, vector<32x128xf32>, vector<32x128xf32> -> vector<32x128xf32>
    %c0_9 = arith.constant 0 : index
    %c0_10 = arith.constant 0 : index
    %9 = vector.load %arg4[%c0_9, %c0_10] : memref<32x32xf32, #tpu.memory_space<vmem>>, vector<32x32xf32>
    %cst_11 = arith.constant dense<0.000000e+00> : vector<32x128xf32>
    %10 = tpu.matmul %9, %6, %cst_11 {dimension_numbers = #tpu.dot_dimension_numbers<[1], [0], [0], [1], [0, 0, 1, 1], [], []>} : vector<32x32xf32>, vector<32x128xf32>, vector<32x128xf32> -> vector<32x128xf32>
    %11 = arith.addf %8, %10 : vector<32x128xf32>
    %cst_12 = arith.constant 2.000000e-01 : f32
    %12 = vector.broadcast %cst_12 : f32 to vector<32x128xf32>
    %13 = arith.mulf %11, %12 : vector<32x128xf32>
    %c0_13 = arith.constant 0 : index
    %c0_14 = arith.constant 0 : index
    %c0_15 = arith.constant 0 : index
    %14 = vector.load %arg7[%c0_13, %c0_14, %c0_15] : memref<1x32x128xf32, #tpu.memory_space<vmem>>, vector<1x32x128xf32>
    %15 = vector.shape_cast %14 : vector<1x32x128xf32> to vector<32x128xf32>
    %16 = arith.addf %13, %15 : vector<32x128xf32>
    %c0_16 = arith.constant 0 : index
    %c0_17 = arith.constant 0 : index
    %c0_18 = arith.constant 0 : index
    %17 = vector.load %arg9[%c0_16, %c0_17, %c0_18] : memref<1x32x128xf32, #tpu.memory_space<vmem>>, vector<1x32x128xf32>
    %18 = vector.shape_cast %17 : vector<1x32x128xf32> to vector<32x128xf32>
    %19 = vector.shape_cast %16 : vector<32x128xf32> to vector<1x32x128xf32>
    tpu.vector_store %arg9[%c0_16, %c0_17, %c0_18], %19 {strides = array<i32>} : memref<1x32x128xf32, #tpu.memory_space<vmem>>, vector<1x32x128xf32>,
    %c0_19 = arith.constant 0 : index
    %c0_20 = arith.constant 0 : index
    %20 = vector.load %arg5[%c0_19, %c0_20] : memref<3x32xf32, #tpu.memory_space<vmem>>, vector<3x32xf32>
    %cst_21 = arith.constant dense<0.000000e+00> : vector<3x128xf32>
    %21 = tpu.matmul %20, %3, %cst_21 {dimension_numbers = #tpu.dot_dimension_numbers<[1], [0], [0], [1], [0, 0, 1, 1], [], []>} : vector<3x32xf32>, vector<32x128xf32>, vector<3x128xf32> -> vector<3x128xf32>
    %c0_22 = arith.constant 0 : index
    %c0_23 = arith.constant 0 : index
    %22 = vector.load %arg6[%c0_22, %c0_23] : memref<3x32xf32, #tpu.memory_space<vmem>>, vector<3x32xf32>
    %cst_24 = arith.constant dense<0.000000e+00> : vector<3x128xf32>
    %23 = tpu.matmul %22, %6, %cst_24 {dimension_numbers = #tpu.dot_dimension_numbers<[1], [0], [0], [1], [0, 0, 1, 1], [], []>} : vector<3x32xf32>, vector<32x128xf32>, vector<3x128xf32> -> vector<3x128xf32>
    %24 = arith.addf %21, %23 : vector<3x128xf32>
    %cst_25 = arith.constant 2.000000e-01 : f32
    %25 = vector.broadcast %cst_25 : f32 to vector<3x128xf32>
    %26 = arith.mulf %24, %25 : vector<3x128xf32>
    %c0_26 = arith.constant 0 : index
    %c0_27 = arith.constant 0 : index
    %c0_28 = arith.constant 0 : index
    %27 = vector.load %arg8[%c0_26, %c0_27, %c0_28] : memref<1x3x128xf32, #tpu.memory_space<vmem>>, vector<1x3x128xf32>
    %28 = vector.shape_cast %27 : vector<1x3x128xf32> to vector<3x128xf32>
    %29 = arith.addf %26, %28 : vector<3x128xf32>
    %c0_29 = arith.constant 0 : index
    %c0_30 = arith.constant 0 : index
    %c0_31 = arith.constant 0 : index
    %30 = vector.load %arg10[%c0_29, %c0_30, %c0_31] : memref<1x3x128xf32, #tpu.memory_space<vmem>>, vector<1x3x128xf32>
    %31 = vector.shape_cast %30 : vector<1x3x128xf32> to vector<3x128xf32>
    %32 = vector.shape_cast %29 : vector<3x128xf32> to vector<1x3x128xf32>
    tpu.vector_store %arg10[%c0_29, %c0_30, %c0_31], %32 {strides = array<i32>} : memref<1x3x128xf32, #tpu.memory_space<vmem>>, vector<1x3x128xf32>,
    return
  }
  func.func @transform_0(%arg0: i32) -> (i32, i32, i32) {
    %c0_i32 = arith.constant 0 : i32
    %c0_i32_0 = arith.constant 0 : i32
    %c0_i32_1 = arith.constant 0 : i32
    return %arg0, %c0_i32, %c0_i32_0 : i32, i32, i32
  }
  func.func @transform_1(%arg0: i32) -> (i32, i32, i32) {
    %c0_i32 = arith.constant 0 : i32
    %c0_i32_0 = arith.constant 0 : i32
    %c0_i32_1 = arith.constant 0 : i32
    return %arg0, %c0_i32, %c0_i32_0 : i32, i32, i32
  }
  func.func @transform_2(%arg0: i32) -> (i32, i32) {
    %c0_i32 = arith.constant 0 : i32
    %c0_i32_0 = arith.constant 0 : i32
    %c0_i32_1 = arith.constant 0 : i32
    return %c0_i32, %c0_i32_0 : i32, i32
  }
  func.func @transform_3(%arg0: i32) -> (i32, i32) {
    %c0_i32 = arith.constant 0 : i32
    %c0_i32_0 = arith.constant 0 : i32
    %c0_i32_1 = arith.constant 0 : i32
    return %c0_i32, %c0_i32_0 : i32, i32
  }
  func.func @transform_4(%arg0: i32) -> (i32, i32) {
    %c0_i32 = arith.constant 0 : i32
    %c0_i32_0 = arith.constant 0 : i32
    %c0_i32_1 = arith.constant 0 : i32
    return %c0_i32, %c0_i32_0 : i32, i32
  }
  func.func @transform_5(%arg0: i32) -> (i32, i32) {
    %c0_i32 = arith.constant 0 : i32
    %c0_i32_0 = arith.constant 0 : i32
    %c0_i32_1 = arith.constant 0 : i32
    return %c0_i32, %c0_i32_0 : i32, i32
  }
  func.func @transform_6(%arg0: i32) -> (i32, i32, i32) {
    %c0_i32 = arith.constant 0 : i32
    %c0_i32_0 = arith.constant 0 : i32
    %c0_i32_1 = arith.constant 0 : i32
    return %arg0, %c0_i32, %c0_i32_0 : i32, i32, i32
  }
  func.func @transform_7(%arg0: i32) -> (i32, i32, i32) {
    %c0_i32 = arith.constant 0 : i32
    %c0_i32_0 = arith.constant 0 : i32
    %c0_i32_1 = arith.constant 0 : i32
    return %arg0, %c0_i32, %c0_i32_0 : i32, i32, i32
  }
  func.func @transform_8(%arg0: i32) -> (i32, i32, i32) {
    %c0_i32 = arith.constant 0 : i32
    %c0_i32_0 = arith.constant 0 : i32
    %c0_i32_1 = arith.constant 0 : i32
    return %arg0, %c0_i32, %c0_i32_0 : i32, i32, i32
  }
  func.func @transform_9(%arg0: i32) -> (i32, i32, i32) {
    %c0_i32 = arith.constant 0 : i32
    %c0_i32_0 = arith.constant 0 : i32
    %c0_i32_1 = arith.constant 0 : i32
    return %arg0, %c0_i32, %c0_i32_0 : i32, i32, i32
  }
}

module attributes {stable_mosaic.version = 11 : i64} {
  func.func @_res_block_dual_kernel(%arg0: i32, %arg1: memref<1x32x128xf32, #tpu.memory_space<vmem>>, %arg2: memref<1x128x128xf32, #tpu.memory_space<vmem>>, %arg3: memref<32x32xf32, #tpu.memory_space<vmem>>, %arg4: memref<32x32xf32, #tpu.memory_space<vmem>>, %arg5: memref<3x32xf32, #tpu.memory_space<vmem>>, %arg6: memref<3x32xf32, #tpu.memory_space<vmem>>, %arg7: memref<1x32x128xf32, #tpu.memory_space<vmem>>, %arg8: memref<1x3x128xf32, #tpu.memory_space<vmem>>, %arg9: memref<1x32x128xf32, #tpu.memory_space<vmem>>, %arg10: memref<1x3x128xf32, #tpu.memory_space<vmem>>) attributes {dimension_semantics = [#tpu.dimension_semantics<parallel>], iteration_bounds = array<i64: 2>, scalar_prefetch = 0 : i64, scratch_operands = 0 : i64, tpu.core_type = #tpu.core_type<tc>, window_params = [{transform_indices = @transform_0, window_bounds = array<i64: 1, 32, 128>}, {transform_indices = @transform_1, window_bounds = array<i64: 1, 128, 128>}, {pipeline_mode = #tpu.pipeline_mode<synchronous>, transform_indices = @transform_2, window_bounds = array<i64: 32, 32>}, {pipeline_mode = #tpu.pipeline_mode<synchronous>, transform_indices = @transform_3, window_bounds = array<i64: 32, 32>}, {pipeline_mode = #tpu.pipeline_mode<synchronous>, transform_indices = @transform_4, window_bounds = array<i64: 3, 32>}, {pipeline_mode = #tpu.pipeline_mode<synchronous>, transform_indices = @transform_5, window_bounds = array<i64: 3, 32>}, {transform_indices = @transform_6, window_bounds = array<i64: 1, 32, 128>}, {transform_indices = @transform_7, window_bounds = array<i64: 1, 3, 128>}, {transform_indices = @transform_8, window_bounds = array<i64: 1, 32, 128>}, {transform_indices = @transform_9, window_bounds = array<i64: 1, 3, 128>}]} {
    %c0 = arith.constant 0 : index
    %c0_0 = arith.constant 0 : index
    %c0_1 = arith.constant 0 : index
    %0 = vector.load %arg1[%c0, %c0_0, %c0_1] : memref<1x32x128xf32, #tpu.memory_space<vmem>>, vector<1x32x128xf32>
    %1 = vector.shape_cast %0 : vector<1x32x128xf32> to vector<32x128xf32>
    %cst = arith.constant 0.000000e+00 : f32
    %2 = vector.broadcast %cst : f32 to vector<32x128xf32>
    %3 = arith.maximumf %1, %2 : vector<32x128xf32>
    %c0_2 = arith.constant 0 : index
    %c0_3 = arith.constant 0 : index
    %c0_4 = arith.constant 0 : index
    %4 = vector.load %arg2[%c0_2, %c0_3, %c0_4] : memref<1x128x128xf32, #tpu.memory_space<vmem>>, vector<1x128x128xf32>
    %5 = vector.shape_cast %4 : vector<1x128x128xf32> to vector<128x128xf32>
    %cst_5 = arith.constant dense<0.000000e+00> : vector<32x128xf32>
    %6 = tpu.matmul %3, %5, %cst_5 {dimension_numbers = #tpu.dot_dimension_numbers<[1], [0], [0], [1], [0, 0, 1, 1], [], []>} : vector<32x128xf32>, vector<128x128xf32>, vector<32x128xf32> -> vector<32x128xf32>
    %c0_6 = arith.constant 0 : index
    %c0_7 = arith.constant 0 : index
    %7 = vector.load %arg3[%c0_6, %c0_7] : memref<32x32xf32, #tpu.memory_space<vmem>>, vector<32x32xf32>
    %cst_8 = arith.constant dense<0.000000e+00> : vector<32x128xf32>
    %8 = tpu.matmul %7, %3, %cst_8 {dimension_numbers = #tpu.dot_dimension_numbers<[1], [0], [0], [1], [0, 0, 1, 1], [], []>} : vector<32x32xf32>, vector<32x128xf32>, vector<32x128xf32> -> vector<32x128xf32>
    %c0_9 = arith.constant 0 : index
    %c0_10 = arith.constant 0 : index
    %9 = vector.load %arg4[%c0_9, %c0_10] : memref<32x32xf32, #tpu.memory_space<vmem>>, vector<32x32xf32>
    %cst_11 = arith.constant dense<0.000000e+00> : vector<32x128xf32>
    %10 = tpu.matmul %9, %6, %cst_11 {dimension_numbers = #tpu.dot_dimension_numbers<[1], [0], [0], [1], [0, 0, 1, 1], [], []>} : vector<32x32xf32>, vector<32x128xf32>, vector<32x128xf32> -> vector<32x128xf32>
    %11 = arith.addf %8, %10 : vector<32x128xf32>
    %cst_12 = arith.constant 2.000000e-01 : f32
    %12 = vector.broadcast %cst_12 : f32 to vector<32x128xf32>
    %13 = arith.mulf %11, %12 : vector<32x128xf32>
    %c0_13 = arith.constant 0 : index
    %c0_14 = arith.constant 0 : index
    %c0_15 = arith.constant 0 : index
    %14 = vector.load %arg7[%c0_13, %c0_14, %c0_15] : memref<1x32x128xf32, #tpu.memory_space<vmem>>, vector<1x32x128xf32>
    %15 = vector.shape_cast %14 : vector<1x32x128xf32> to vector<32x128xf32>
    %16 = arith.addf %13, %15 : vector<32x128xf32>
    %c0_16 = arith.constant 0 : index
    %c0_17 = arith.constant 0 : index
    %c0_18 = arith.constant 0 : index
    %17 = vector.load %arg9[%c0_16, %c0_17, %c0_18] : memref<1x32x128xf32, #tpu.memory_space<vmem>>, vector<1x32x128xf32>
    %18 = vector.shape_cast %17 : vector<1x32x128xf32> to vector<32x128xf32>
    %19 = vector.shape_cast %16 : vector<32x128xf32> to vector<1x32x128xf32>
    tpu.vector_store %arg9[%c0_16, %c0_17, %c0_18], %19 {strides = array<i32>} : memref<1x32x128xf32, #tpu.memory_space<vmem>>, vector<1x32x128xf32>,
    %c0_19 = arith.constant 0 : index
    %c0_20 = arith.constant 0 : index
    %20 = vector.load %arg5[%c0_19, %c0_20] : memref<3x32xf32, #tpu.memory_space<vmem>>, vector<3x32xf32>
    %cst_21 = arith.constant dense<0.000000e+00> : vector<3x128xf32>
    %21 = tpu.matmul %20, %3, %cst_21 {dimension_numbers = #tpu.dot_dimension_numbers<[1], [0], [0], [1], [0, 0, 1, 1], [], []>} : vector<3x32xf32>, vector<32x128xf32>, vector<3x128xf32> -> vector<3x128xf32>
    %c0_22 = arith.constant 0 : index
    %c0_23 = arith.constant 0 : index
    %22 = vector.load %arg6[%c0_22, %c0_23] : memref<3x32xf32, #tpu.memory_space<vmem>>, vector<3x32xf32>
    %cst_24 = arith.constant dense<0.000000e+00> : vector<3x128xf32>
    %23 = tpu.matmul %22, %6, %cst_24 {dimension_numbers = #tpu.dot_dimension_numbers<[1], [0], [0], [1], [0, 0, 1, 1], [], []>} : vector<3x32xf32>, vector<32x128xf32>, vector<3x128xf32> -> vector<3x128xf32>
    %24 = arith.addf %21, %23 : vector<3x128xf32>
    %cst_25 = arith.constant 2.000000e-01 : f32
    %25 = vector.broadcast %cst_25 : f32 to vector<3x128xf32>
    %26 = arith.mulf %24, %25 : vector<3x128xf32>
    %c0_26 = arith.constant 0 : index
    %c0_27 = arith.constant 0 : index
    %c0_28 = arith.constant 0 : index
    %27 = vector.load %arg8[%c0_26, %c0_27, %c0_28] : memref<1x3x128xf32, #tpu.memory_space<vmem>>, vector<1x3x128xf32>
    %28 = vector.shape_cast %27 : vector<1x3x128xf32> to vector<3x128xf32>
    %29 = arith.addf %26, %28 : vector<3x128xf32>
    %c0_29 = arith.constant 0 : index
    %c0_30 = arith.constant 0 : index
    %c0_31 = arith.constant 0 : index
    %30 = vector.load %arg10[%c0_29, %c0_30, %c0_31] : memref<1x3x128xf32, #tpu.memory_space<vmem>>, vector<1x3x128xf32>
    %31 = vector.shape_cast %30 : vector<1x3x128xf32> to vector<3x128xf32>
    %32 = vector.shape_cast %29 : vector<3x128xf32> to vector<1x3x128xf32>
    tpu.vector_store %arg10[%c0_29, %c0_30, %c0_31], %32 {strides = array<i32>} : memref<1x3x128xf32, #tpu.memory_space<vmem>>, vector<1x3x128xf32>,
    return
  }
  func.func @transform_0(%arg0: i32) -> (i32, i32, i32) {
    %c0_i32 = arith.constant 0 : i32
    %c0_i32_0 = arith.constant 0 : i32
    %c0_i32_1 = arith.constant 0 : i32
    return %arg0, %c0_i32, %c0_i32_0 : i32, i32, i32
  }
  func.func @transform_1(%arg0: i32) -> (i32, i32, i32) {
    %c0_i32 = arith.constant 0 : i32
    %c0_i32_0 = arith.constant 0 : i32
    %c0_i32_1 = arith.constant 0 : i32
    return %arg0, %c0_i32, %c0_i32_0 : i32, i32, i32
  }
  func.func @transform_2(%arg0: i32) -> (i32, i32) {
    %c0_i32 = arith.constant 0 : i32
    %c0_i32_0 = arith.constant 0 : i32
    %c0_i32_1 = arith.constant 0 : i32
    return %c0_i32, %c0_i32_0 : i32, i32
  }
  func.func @transform_3(%arg0: i32) -> (i32, i32) {
    %c0_i32 = arith.constant 0 : i32
    %c0_i32_0 = arith.constant 0 : i32
    %c0_i32_1 = arith.constant 0 : i32
    return %c0_i32, %c0_i32_0 : i32, i32
  }
  func.func @transform_4(%arg0: i32) -> (i32, i32) {
    %c0_i32 = arith.constant 0 : i32
    %c0_i32_0 = arith.constant 0 : i32
    %c0_i32_1 = arith.constant 0 : i32
    return %c0_i32, %c0_i32_0 : i32, i32
  }
  func.func @transform_5(%arg0: i32) -> (i32, i32) {
    %c0_i32 = arith.constant 0 : i32
    %c0_i32_0 = arith.constant 0 : i32
    %c0_i32_1 = arith.constant 0 : i32
    return %c0_i32, %c0_i32_0 : i32, i32
  }
  func.func @transform_6(%arg0: i32) -> (i32, i32, i32) {
    %c0_i32 = arith.constant 0 : i32
    %c0_i32_0 = arith.constant 0 : i32
    %c0_i32_1 = arith.constant 0 : i32
    return %arg0, %c0_i32, %c0_i32_0 : i32, i32, i32
  }
  func.func @transform_7(%arg0: i32) -> (i32, i32, i32) {
    %c0_i32 = arith.constant 0 : i32
    %c0_i32_0 = arith.constant 0 : i32
    %c0_i32_1 = arith.constant 0 : i32
    return %arg0, %c0_i32, %c0_i32_0 : i32, i32, i32
  }
  func.func @transform_8(%arg0: i32) -> (i32, i32, i32) {
    %c0_i32 = arith.constant 0 : i32
    %c0_i32_0 = arith.constant 0 : i32
    %c0_i32_1 = arith.constant 0 : i32
    return %arg0, %c0_i32, %c0_i32_0 : i32, i32, i32
  }
  func.func @transform_9(%arg0: i32) -> (i32, i32, i32) {
    %c0_i32 = arith.constant 0 : i32
    %c0_i32_0 = arith.constant 0 : i32
    %c0_i32_1 = arith.constant 0 : i32
    return %arg0, %c0_i32, %c0_i32_0 : i32, i32, i32
  }
}

</mosaic_0001>

<llo_original>
// kernel: neg.4
$region0: #{neg.4}
  #allocation0 [shape = 's32[1]{0}', space=sflag, size = 0x4, scoped, tag = 'scoped memory for neg.4']
  %s0 = inlined_call_operand.vmem [shape: f32[2,128,128], index: 0, kind: input, shape index: {}]
  %s1 = inlined_call_operand.vmem [shape: f32[2,128,128], index: 1, kind: output, shape index: {}]
  %v2 = vld [vmem:[%s0] sm:$0xff]
  %3 = xla_tuple %v2
  %4 = xla_tuple %3
  %v5 = vxor.u32 %v2, 2147483648
  %6 = xla_tuple %v5
  %7 = vst [vmem:[%s1] sm:$0xff] %v5
  %s8 = scalar_lea.vmem %s0, 128
  %v9 = vld [vmem:[%s8] sm:$0xff]
  %10 = xla_tuple %v9
  %11 = xla_tuple %10
  %v12 = vxor.u32 %v9, 2147483648
  %13 = xla_tuple %v12
  %s14 = scalar_lea.vmem %s1, 128
  %15 = vst [vmem:[%s14] sm:$0xff] %v12
  %s16 = scalar_lea.vmem %s0, 8
  %v17 = vld [vmem:[%s16] sm:$0xff]
  %18 = xla_tuple %v17
  %19 = xla_tuple %18
  %v20 = vxor.u32 %v17, 2147483648
  %21 = xla_tuple %v20
  %s22 = scalar_lea.vmem %s1, 8
  %23 = vst [vmem:[%s22] sm:$0xff] %v20
  %s24 = scalar_lea.vmem %s0, 136
  %v25 = vld [vmem:[%s24] sm:$0xff]
  %26 = xla_tuple %v25
  %27 = xla_tuple %26
  %v28 = vxor.u32 %v25, 2147483648
  %29 = xla_tuple %v28
  %s30 = scalar_lea.vmem %s1, 136
  %31 = vst [vmem:[%s30] sm:$0xff] %v28
  %s32 = scalar_lea.vmem %s0, 16
  %v33 = vld [vmem:[%s32] sm:$0xff]
  %34 = xla_tuple %v33
  %35 = xla_tuple %34
  %v36 = vxor.u32 %v33, 2147483648
  %37 = xla_tuple %v36
  %s38 = scalar_lea.vmem %s1, 16
  %39 = vst [vmem:[%s38] sm:$0xff] %v36
  %s40 = scalar_lea.vmem %s0, 144
  %v41 = vld [vmem:[%s40] sm:$0xff]
  %42 = xla_tuple %v41
  %43 = xla_tuple %42
  %v44 = vxor.u32 %v41, 2147483648
  %45 = xla_tuple %v44
  %s46 = scalar_lea.vmem %s1, 144
  %47 = vst [vmem:[%s46] sm:$0xff] %v44
  %s48 = scalar_lea.vmem %s0, 24
  %v49 = vld [vmem:[%s48] sm:$0xff]
  %50 = xla_tuple %v49
  %51 = xla_tuple %50
  %v52 = vxor.u32 %v49, 2147483648
  %53 = xla_tuple %v52
  %s54 = scalar_lea.vmem %s1, 24
  %55 = vst [vmem:[%s54] sm:$0xff] %v52
  %s56 = scalar_lea.vmem %s0, 152
  %v57 = vld [vmem:[%s56] sm:$0xff]
  %58 = xla_tuple %v57
  %59 = xla_tuple %58
  %v60 = vxor.u32 %v57, 2147483648
  %61 = xla_tuple %v60
  %s62 = scalar_lea.vmem %s1, 152
  %63 = vst [vmem:[%s62] sm:$0xff] %v60
  %s64 = scalar_lea.vmem %s0, 32
  %v65 = vld [vmem:[%s64] sm:$0xff]
  %66 = xla_tuple %v65
  %67 = xla_tuple %66
  %v68 = vxor.u32 %v65, 2147483648
  %69 = xla_tuple %v68
  %s70 = scalar_lea.vmem %s1, 32
  %71 = vst [vmem:[%s70] sm:$0xff] %v68
  %s72 = scalar_lea.vmem %s0, 160
  %v73 = vld [vmem:[%s72] sm:$0xff]
  %74 = xla_tuple %v73
  %75 = xla_tuple %74
  %v76 = vxor.u32 %v73, 2147483648
  %77 = xla_tuple %v76
  %s78 = scalar_lea.vmem %s1, 160
  %79 = vst [vmem:[%s78] sm:$0xff] %v76
  %s80 = scalar_lea.vmem %s0, 40
  %v81 = vld [vmem:[%s80] sm:$0xff]
  %82 = xla_tuple %v81
  %83 = xla_tuple %82
  %v84 = vxor.u32 %v81, 2147483648
  %85 = xla_tuple %v84
  %s86 = scalar_lea.vmem %s1, 40
  %87 = vst [vmem:[%s86] sm:$0xff] %v84
  %s88 = scalar_lea.vmem %s0, 168
  %v89 = vld [vmem:[%s88] sm:$0xff]
  %90 = xla_tuple %v89
  %91 = xla_tuple %90
  %v92 = vxor.u32 %v89, 2147483648
  %93 = xla_tuple %v92
  %s94 = scalar_lea.vmem %s1, 168
  %95 = vst [vmem:[%s94] sm:$0xff] %v92
  %s96 = scalar_lea.vmem %s0, 48
  %v97 = vld [vmem:[%s96] sm:$0xff]
  %98 = xla_tuple %v97
  %99 = xla_tuple %98
  %v100 = vxor.u32 %v97, 2147483648
  %101 = xla_tuple %v100
  %s102 = scalar_lea.vmem %s1, 48
  %103 = vst [vmem:[%s102] sm:$0xff] %v100
  %s104 = scalar_lea.vmem %s0, 176
  %v105 = vld [vmem:[%s104] sm:$0xff]
  %106 = xla_tuple %v105
  %107 = xla_tuple %106
  %v108 = vxor.u32 %v105, 2147483648
  %109 = xla_tuple %v108
  %s110 = scalar_lea.vmem %s1, 176
  %111 = vst [vmem:[%s110] sm:$0xff] %v108
  %s112 = scalar_lea.vmem %s0, 56
  %v113 = vld [vmem:[%s112] sm:$0xff]
  %114 = xla_tuple %v113
  %115 = xla_tuple %114
  %v116 = vxor.u32 %v113, 2147483648
  %117 = xla_tuple %v116
  %s118 = scalar_lea.vmem %s1, 56
  %119 = vst [vmem:[%s118] sm:$0xff] %v116
  %s120 = scalar_lea.vmem %s0, 184
  %v121 = vld [vmem:[%s120] sm:$0xff]
  %122 = xla_tuple %v121
  %123 = xla_tuple %122
  %v124 = vxor.u32 %v121, 2147483648
  %125 = xla_tuple %v124
  %s126 = scalar_lea.vmem %s1, 184
  %127 = vst [vmem:[%s126] sm:$0xff] %v124
  %s128 = scalar_lea.vmem %s0, 64
  %v129 = vld [vmem:[%s128] sm:$0xff]
  %130 = xla_tuple %v129
  %131 = xla_tuple %130
  %v132 = vxor.u32 %v129, 2147483648
  %133 = xla_tuple %v132
  %s134 = scalar_lea.vmem %s1, 64
  %135 = vst [vmem:[%s134] sm:$0xff] %v132
  %s136 = scalar_lea.vmem %s0, 192
  %v137 = vld [vmem:[%s136] sm:$0xff]
  %138 = xla_tuple %v137
  %139 = xla_tuple %138
  %v140 = vxor.u32 %v137, 2147483648
  %141 = xla_tuple %v140
  %s142 = scalar_lea.vmem %s1, 192
  %143 = vst [vmem:[%s142] sm:$0xff] %v140
  %s144 = scalar_lea.vmem %s0, 72
  %v145 = vld [vmem:[%s144] sm:$0xff]
  %146 = xla_tuple %v145
  %147 = xla_tuple %146
  %v148 = vxor.u32 %v145, 2147483648
  %149 = xla_tuple %v148
  %s150 = scalar_lea.vmem %s1, 72
  %151 = vst [vmem:[%s150] sm:$0xff] %v148
  %s152 = scalar_lea.vmem %s0, 200
  %v153 = vld [vmem:[%s152] sm:$0xff]
  %154 = xla_tuple %v153
  %155 = xla_tuple %154
  %v156 = vxor.u32 %v153, 2147483648
  %157 = xla_tuple %v156
  %s158 = scalar_lea.vmem %s1, 200
  %159 = vst [vmem:[%s158] sm:$0xff] %v156
  %s160 = scalar_lea.vmem %s0, 80
  %v161 = vld [vmem:[%s160] sm:$0xff]
  %162 = xla_tuple %v161
  %163 = xla_tuple %162
  %v164 = vxor.u32 %v161, 2147483648
  %165 = xla_tuple %v164
  %s166 = scalar_lea.vmem %s1, 80
  %167 = vst [vmem:[%s166] sm:$0xff] %v164
  %s168 = scalar_lea.vmem %s0, 208
  %v169 = vld [vmem:[%s168] sm:$0xff]
  %170 = xla_tuple %v169
  %171 = xla_tuple %170
  %v172 = vxor.u32 %v169, 2147483648
  %173 = xla_tuple %v172
  %s174 = scalar_lea.vmem %s1, 208
  %175 = vst [vmem:[%s174] sm:$0xff] %v172
  %s176 = scalar_lea.vmem %s0, 88
  %v177 = vld [vmem:[%s176] sm:$0xff]
  %178 = xla_tuple %v177
  %179 = xla_tuple %178
  %v180 = vxor.u32 %v177, 2147483648
  %181 = xla_tuple %v180
  %s182 = scalar_lea.vmem %s1, 88
  %183 = vst [vmem:[%s182] sm:$0xff] %v180
  %s184 = scalar_lea.vmem %s0, 216
  %v185 = vld [vmem:[%s184] sm:$0xff]
  %186 = xla_tuple %v185
  %187 = xla_tuple %186
  %v188 = vxor.u32 %v185, 2147483648
  %189 = xla_tuple %v188
  %s190 = scalar_lea.vmem %s1, 216
  %191 = vst [vmem:[%s190] sm:$0xff] %v188
  %s192 = scalar_lea.vmem %s0, 96
  %v193 = vld [vmem:[%s192] sm:$0xff]
  %194 = xla_tuple %v193
  %195 = xla_tuple %194
  %v196 = vxor.u32 %v193, 2147483648
  %197 = xla_tuple %v196
  %s198 = scalar_lea.vmem %s1, 96
  %199 = vst [vmem:[%s198] sm:$0xff] %v196
  %s200 = scalar_lea.vmem %s0, 224
  %v201 = vld [vmem:[%s200] sm:$0xff]
  %202 = xla_tuple %v201
  %203 = xla_tuple %202
  %v204 = vxor.u32 %v201, 2147483648
  %205 = xla_tuple %v204
  %s206 = scalar_lea.vmem %s1, 224
  %207 = vst [vmem:[%s206] sm:$0xff] %v204
  %s208 = scalar_lea.vmem %s0, 104
  %v209 = vld [vmem:[%s208] sm:$0xff]
  %210 = xla_tuple %v209
  %211 = xla_tuple %210
  %v212 = vxor.u32 %v209, 2147483648
  %213 = xla_tuple %v212
  %s214 = scalar_lea.vmem %s1, 104
  %215 = vst [vmem:[%s214] sm:$0xff] %v212
  %s216 = scalar_lea.vmem %s0, 232
  %v217 = vld [vmem:[%s216] sm:$0xff]
  %218 = xla_tuple %v217
  %219 = xla_tuple %218
  %v220 = vxor.u32 %v217, 2147483648
  %221 = xla_tuple %v220
  %s222 = scalar_lea.vmem %s1, 232
  %223 = vst [vmem:[%s222] sm:$0xff] %v220
  %s224 = scalar_lea.vmem %s0, 112
  %v225 = vld [vmem:[%s224] sm:$0xff]
  %226 = xla_tuple %v225
  %227 = xla_tuple %226
  %v228 = vxor.u32 %v225, 2147483648
  %229 = xla_tuple %v228
  %s230 = scalar_lea.vmem %s1, 112
  %231 = vst [vmem:[%s230] sm:$0xff] %v228
  %s232 = scalar_lea.vmem %s0, 240
  %v233 = vld [vmem:[%s232] sm:$0xff]
  %234 = xla_tuple %v233
  %235 = xla_tuple %234
  %v236 = vxor.u32 %v233, 2147483648
  %237 = xla_tuple %v236
  %s238 = scalar_lea.vmem %s1, 240
  %239 = vst [vmem:[%s238] sm:$0xff] %v236
  %s240 = scalar_lea.vmem %s0, 120
  %v241 = vld [vmem:[%s240] sm:$0xff]
  %242 = xla_tuple %v241
  %243 = xla_tuple %242
  %v244 = vxor.u32 %v241, 2147483648
  %245 = xla_tuple %v244
  %s246 = scalar_lea.vmem %s1, 120
  %247 = vst [vmem:[%s246] sm:$0xff] %v244
  %s248 = scalar_lea.vmem %s0, 248
  %v249 = vld [vmem:[%s248] sm:$0xff]
  %250 = xla_tuple %v249
  %251 = xla_tuple %250
  %v252 = vxor.u32 %v249, 2147483648
  %253 = xla_tuple %v252
  %s254 = scalar_lea.vmem %s1, 248
  %255 = vst [vmem:[%s254] sm:$0xff] %v252

// kernel: generator_forward.30
$region0: #{generator_forward.30}
  #allocation0 [shape = 'u32[]', space=smem, size = 0x4, offset = 0x4, fixed_abs, tag = 'smem constant byte address 0x4 - core index']
  #allocation1 [shape = 'u32[144,128]{1,0:T(1,128)}', space=vmem, size = 0x12000, scoped, tag = 'internal scratch']
  %s0 = inlined_call_operand.vmem [shape: f32[2,128,3], index: 0, kind: input, shape index: {}]
  %s1 = inlined_call_operand.vmem [shape: f32[2,3,128], index: 1, kind: input, shape index: {}]
  %s2 = inlined_call_operand.vmem [shape: f32[2,128,128], index: 2, kind: output, shape index: {}]
  %s3 = sld [smem:[#allocation0]]
  $region41: #{generator_forward.30} parent=0
    _
  %s5 = ssub.s32 1, %s3
  %s6 = scalar_select 0, %s5, %s3
  loop: start=0, step=1, limit=4
  $region2: #{generator_forward.30} parent=0 // loop_pre_header
    _
  $region3: #{generator_forward.30} parent=0 // loop_header
    %s8 = sphi 0, %s12
    %p9 = scmp.ge.s32.totalorder %s8, 4
    %s18 = sphi 0, %s20
    %s21 = sphi 0, %s18
    %s22 = sphi 0, %s21
    %s38 = sphi 0, %s22
    %s44 = sphi 0, %s46
    %s47 = sphi 0, %s44
    %s48 = sphi 0, %s47
    %s64 = sphi 0, %s48
    %s70 = sphi 0, %s72
    %s73 = sphi 0, %s70
    %s74 = sphi 0, %s73
    %s90 = sphi 0, %s74
  $region4: #{generator_forward.30} parent=0 // loop_header_branch
    %11 = sbr.rel (%p9) target = $region8
  $region5: #{generator_forward.30} parent=0 // loop_body
    %s13 = ssub.s32 %s8, 1
    %s14 = ssub.s32 %s8, 2
    %s15 = sadd.s32 %s8, 1
    %s16 = ssub.s32 %s8, %s15
    %p17 = scmp.eq.s32.totalorder %s16, 0
    %s19 = sadd.s32 %s18, 1
    %s20 = scalar_select %p17, %s18, %s19
    %p23 = pneg %p17
    %p24 = scmp.eq.s32.totalorder %s8, 1
    %p25 = por %p23, %p24
    %p26 = scmp.ne.s32.totalorder %s18, %s21
    %p27 = scmp.eq.s32.totalorder %s8, 0
    %p28 = por %p26, %p27
    %p29 = scmp.ne.s32.totalorder %s18, %s21
    %p30 = scmp.eq.s32.totalorder %s13, 1
    %p31 = por %p29, %p30
    %p32 = scmp.ne.s32.totalorder %s21, %s22
    %p33 = scmp.eq.s32.totalorder %s13, 0
    %p34 = por %p32, %p33
    %p35 = scmp.ne.s32.totalorder %s21, %s22
    %p36 = scmp.eq.s32.totalorder %s14, 1
    %p37 = por %p35, %p36
    %p39 = scmp.ne.s32.totalorder %s22, %s38
    %p40 = scmp.eq.s32.totalorder %s14, 0
    %p41 = por %p39, %p40
    %s42 = ssub.s32 %s8, %s15
    %p43 = scmp.eq.s32.totalorder %s42, 0
    %s45 = sadd.s32 %s44, 1
    %s46 = scalar_select %p43, %s44, %s45
    %p49 = pneg %p43
    %p50 = scmp.eq.s32.totalorder %s8, 1
    %p51 = por %p49, %p50
    %p52 = scmp.ne.s32.totalorder %s44, %s47
    %p53 = scmp.eq.s32.totalorder %s8, 0
    %p54 = por %p52, %p53
    %p55 = scmp.ne.s32.totalorder %s44, %s47
    %p56 = scmp.eq.s32.totalorder %s13, 1
    %p57 = por %p55, %p56
    %p58 = scmp.ne.s32.totalorder %s47, %s48
    %p59 = scmp.eq.s32.totalorder %s13, 0
    %p60 = por %p58, %p59
    %p61 = scmp.ne.s32.totalorder %s47, %s48
    %p62 = scmp.eq.s32.totalorder %s14, 1
    %p63 = por %p61, %p62
    %p65 = scmp.ne.s32.totalorder %s48, %s64
    %p66 = scmp.eq.s32.totalorder %s14, 0
    %p67 = por %p65, %p66
    %s68 = ssub.s32 %s8, %s15
    %p69 = scmp.eq.s32.totalorder %s68, 0
    %s71 = sadd.s32 %s70, 1
    %s72 = scalar_select %p69, %s70, %s71
    %p75 = pneg %p69
    %p76 = scmp.eq.s32.totalorder %s8, 1
    %p77 = por %p75, %p76
    %p78 = scmp.ne.s32.totalorder %s70, %s73
    %p79 = scmp.eq.s32.totalorder %s8, 0
    %p80 = por %p78, %p79
    %p81 = scmp.ne.s32.totalorder %s70, %s73
    %p82 = scmp.eq.s32.totalorder %s13, 1
    %p83 = por %p81, %p82
    %p84 = scmp.ne.s32.totalorder %s73, %s74
    %p85 = scmp.eq.s32.totalorder %s13, 0
    %p86 = por %p84, %p85
    %p87 = scmp.ne.s32.totalorder %s73, %s74
    %p88 = scmp.eq.s32.totalorder %s14, 1
    %p89 = por %p87, %p88
    %p91 = scmp.ne.s32.totalorder %s74, %s90
    %p92 = scmp.eq.s32.totalorder %s14, 0
    %p93 = por %p91, %p92
    %p94 = scmp.le.s32.totalorder 1, %s8
    %p95 = scmp.lt.s32.totalorder %s8, 3
    %p96 = pnand %p94, %p95
    %p97 = pneg %p96
    // Predicated region
    $region9: #{generator_forward.30} parent=5 // pred_check
      _
    $region10: #{generator_forward.30} parent=5 // pred_check_branch
      %99 = sbr.rel (%p96) target = $region12
    $region11: #{generator_forward.30} parent=5 // pred_region
      %s100 = ssub.s32 %s8, 1
    $region12: #{generator_forward.30} parent=5 // pred_fallthru
      _
    %p101 = scmp.lt.s32.totalorder %s8, 2
    // Predicated region
    $region13: #{generator_forward.30} parent=5 // pred_check
      %p102 = pneg %p101
    $region14: #{generator_forward.30} parent=5 // pred_check_branch
      %104 = sbr.rel (%p102) target = $region16
    $region15: #{generator_forward.30} parent=5 // pred_region
      // Predicated region
      $region17: #{generator_forward.30} parent=15 // pred_check
        %p105 = pneg %p28
      $region18: #{generator_forward.30} parent=15 // pred_check_branch
        %107 = sbr.rel (%p105) target = $region20
      $region19: #{generator_forward.30} parent=15 // pred_region
        %p108 = scmp.lt.s32.totalorder %s8, 1
        %s109 = scalar_select %p108, %s8, 1
        %s110 = smul.addr %s109, 16
        %s111 = smul.addr %s110, 8
        %s112 = scalar_lea.vmem %s0, %s111
      $region20: #{generator_forward.30} parent=15 // pred_fallthru
        _
      // Predicated region
      $region21: #{generator_forward.30} parent=15 // pred_check
        %p113 = pneg %p54
      $region22: #{generator_forward.30} parent=15 // pred_check_branch
        %115 = sbr.rel (%p113) target = $region24
      $region23: #{generator_forward.30} parent=15 // pred_region
        %p116 = scmp.lt.s32.totalorder %s8, 1
        %s117 = scalar_select %p116, %s8, 1
        %s118 = smul.addr %s117, 4
        %s119 = scalar_lea.vmem %s1, %s118
      $region24: #{generator_forward.30} parent=15 // pred_fallthru
        _
    $region16: #{generator_forward.30} parent=5 // pred_fallthru
      _
    %p120 = scmp.le.s32.totalorder 1, %s8
    %p121 = scmp.lt.s32.totalorder %s8, 3
    %p122 = pnand %p120, %p121
    %p123 = pneg %p122
    // Predicated region
    $region25: #{generator_forward.30} parent=5 // pred_check
      _
    $region26: #{generator_forward.30} parent=5 // pred_check_branch
      %125 = sbr.rel (%p122) target = $region28
    $region27: #{generator_forward.30} parent=5 // pred_region
      %s126 = ssub.s32 %s8, 1
      %p127 = scmp.lt.s32.totalorder %s13, 1
      %s128 = scalar_select %p127, %s13, 1
      %s129 = smul.addr %s128, 16
      %s130 = smul.addr %s129, 8
      %s131 = scalar_lea.vmem %s0, %s130
      %p132 = pneg %p34
      %p133 = pneg %p31
      %p134 = scmp.lt.s32.totalorder %s13, 1
      %s135 = scalar_select %p134, %s13, 1
      %s136 = smul.addr %s135, 4
      %s137 = scalar_lea.vmem %s1, %s136
      %p138 = pneg %p60
      %p139 = pneg %p57
      %p140 = pneg %p86
      %p141 = pneg %p83
      %p142 = scmp.lt.s32.totalorder %s13, 1
      %s143 = scalar_select %p142, %s13, 1
      %s144 = smul.addr %s143, 16
      %s145 = smul.addr %s144, 8
      %s146 = scalar_lea.vmem %s2, %s145
      %p147 = scmp.lt.s32.totalorder %s13, 1
      %s148 = scalar_select %p147, %s13, 1
      %s149 = smul.addr %s148, 16
      %s150 = smul.addr %s149, 8
      %s151 = scalar_lea.vmem %s0, %s150
      %p152 = scmp.lt.s32.totalorder %s13, 1
      %s153 = scalar_select %p152, %s13, 1
      %s154 = smul.addr %s153, 4
      %s155 = scalar_lea.vmem %s1, %s154
      %p156 = scmp.lt.s32.totalorder %s13, 1
      %s157 = scalar_select %p156, %s13, 1
      %s158 = smul.addr %s157, 16
      %s159 = smul.addr %s158, 8
      %s160 = scalar_lea.vmem %s2, %s159
      %v161 = vld [vmem:[%s151] sm:$0xff]
      %v162 = vld [vmem:[%s151 + $0x8] sm:$0xff]
      %v163 = vld [vmem:[%s151 + $0x10] sm:$0xff]
      %v164 = vld [vmem:[%s151 + $0x18] sm:$0xff]
      %v165 = vld [vmem:[%s151 + $0x20] sm:$0xff]
      %v166 = vld [vmem:[%s151 + $0x28] sm:$0xff]
      %v167 = vld [vmem:[%s151 + $0x30] sm:$0xff]
      %v168 = vld [vmem:[%s151 + $0x38] sm:$0xff]
      %v169 = vld [vmem:[%s151 + $0x40] sm:$0xff]
      %v170 = vld [vmem:[%s151 + $0x48] sm:$0xff]
      %v171 = vld [vmem:[%s151 + $0x50] sm:$0xff]
      %v172 = vld [vmem:[%s151 + $0x58] sm:$0xff]
      %v173 = vld [vmem:[%s151 + $0x60] sm:$0xff]
      %v174 = vld [vmem:[%s151 + $0x68] sm:$0xff]
      %v175 = vld [vmem:[%s151 + $0x70] sm:$0xff]
      %v176 = vld [vmem:[%s151 + $0x78] sm:$0xff]
      %v177 = vld [vmem:[%s155] sm:$0x7]
      %v178 = vmul.f32 %v177, %v177
      %vm179 = vcmask 1042432
      %v180 = vsel %vm179, %v178, 0.0
      %v181 = vrot.slane %v180, 4
      %v182 = vadd.f32 %v180, %v181
      %v183 = vrot.slane %v182, 2
      %v184 = vadd.f32 %v182, %v183
      %v185 = vrot.slane %v184, 1
      %v186 = vadd.f32 %v184, %v185
      %vm187 = vcmask 23552
      %v189 = vsel %vm187, %v161, 0
      %v192 = vsel %vm187, %v162, 0
      %v195 = vsel %vm187, %v163, 0
      %v198 = vsel %vm187, %v164, 0
      %v201 = vsel %vm187, %v165, 0
      %v204 = vsel %vm187, %v166, 0
      %v207 = vsel %vm187, %v167, 0
      %v210 = vsel %vm187, %v168, 0
      %v213 = vsel %vm187, %v169, 0
      %v216 = vsel %vm187, %v170, 0
      %v219 = vsel %vm187, %v171, 0
      %v222 = vsel %vm187, %v172, 0
      %v225 = vsel %vm187, %v173, 0
      %v228 = vsel %vm187, %v174, 0
      %v231 = vsel %vm187, %v175, 0
      %v234 = vsel %vm187, %v176, 0
      %v237 = vsel %vm179, %v177, 0
      %239 = vmatprep.subr.mxu0 0.0
      %240 = vmatpush1.msra.mxu0 %v237
      %241 = vmatprep.subr.mxu0 0.0
      %242 = vmatpush1.msra.mxu0 0.0
      %243 = vmatprep.subr.mxu0 0.0
      %244 = vmatpush1.msra.mxu0 0.0
      %245 = vmatprep.subr.mxu0 0.0
      %246 = vmatpush1.msra.mxu0 0.0
      %247 = vmatprep.subr.mxu0 0.0
      %248 = vmatpush1.msra.mxu0 0.0
      %249 = vmatprep.subr.mxu0 0.0
      %250 = vmatpush1.msra.mxu0 0.0
      %251 = vmatprep.subr.mxu0 0.0
      %252 = vmatpush1.msra.mxu0 0.0
      %253 = vmatprep.subr.mxu0 0.0
      %254 = vmatpush1.msra.mxu0 0.0
      %255 = vmatprep.subr.mxu0 0.0
      %256 = vmatpush1.msra.mxu0 0.0
      %257 = vmatprep.subr.mxu0 0.0
      %258 = vmatpush1.msra.mxu0 0.0
      %259 = vmatprep.subr.mxu0 0.0
      %260 = vmatpush1.msra.mxu0 0.0
      %261 = vmatprep.subr.mxu0 0.0
      %262 = vmatpush1.msra.mxu0 0.0
      %263 = vmatprep.subr.mxu0 0.0
      %264 = vmatpush1.msra.mxu0 0.0
      %265 = vmatprep.subr.mxu0 0.0
      %266 = vmatpush1.msra.mxu0 0.0
      %267 = vmatprep.subr.mxu0 0.0
      %268 = vmatpush1.msra.mxu0 0.0
      %269 = vmatprep.subr.mxu0 0.0
      %270 = vmatpush1.msra.mxu0 0.0
      %271 = vmatprep.subr.mxu0 0.0
      %272 = vmatpush1.msra.mxu0 0.0
      %273 = vmatprep.subr.mxu0 0.0
      %274 = vmatpush1.msra.mxu0 0.0
      %275 = vmatprep.subr.mxu0 0.0
      %276 = vmatpush1.msra.mxu0 0.0
      %277 = vmatprep.subr.mxu0 0.0
      %278 = vmatpush1.msra.mxu0 0.0
      %279 = vmatprep.subr.mxu0 0.0
      %280 = vmatpush1.msra.mxu0 0.0
      %281 = vmatprep.subr.mxu0 0.0
      %282 = vmatpush1.msra.mxu0 0.0
      %283 = vmatprep.subr.mxu0 0.0
      %284 = vmatpush1.msra.mxu0 0.0
      %285 = vmatprep.subr.mxu0 0.0
      %286 = vmatpush1.msra.mxu0 0.0
      %287 = vmatprep.subr.mxu0 0.0
      %288 = vmatpush1.msra.mxu0 0.0
      %289 = vmatprep.subr.mxu0 0.0
      %290 = vmatpush1.msra.mxu0 0.0
      %291 = vmatprep.subr.mxu0 0.0
      %292 = vmatpush1.msra.mxu0 0.0
      %293 = vmatprep.subr.mxu0 0.0
      %294 = vmatpush1.msra.mxu0 0.0
      %295 = vmatprep.subr.mxu0 0.0
      %296 = vmatpush1.msra.mxu0 0.0
      %297 = vmatprep.subr.mxu0 0.0
      %298 = vmatpush1.msra.mxu0 0.0
      %299 = vmatprep.subr.mxu0 0.0
      %300 = vmatpush1.msra.mxu0 0.0
      %301 = vmatprep.subr.mxu0 0.0
      %302 = vmatpush1.msra.mxu0 0.0
      %303 = vmatprep.mubr.f32.mxu0 0.0
      %304 = vmatmul.mubr.f32.gmra.mrb[0].mxu0 %v189
      %v305 = vpop.f32.mrb[0].mxu0
      %v306 = vadd.f32 0.0, %v305
      %v307 = vpop.f32.mrb[0].mxu0
      %308 = vmatprep.mubr.f32.mxu0 0.0
      %309 = vmatmul.mubr.f32.gmra.mrb[0].mxu0 %v192
      %v310 = vpop.f32.mrb[0].mxu0
      %v311 = vadd.f32 0.0, %v310
      %v312 = vpop.f32.mrb[0].mxu0
      %313 = vmatprep.mubr.f32.mxu0 0.0
      %314 = vmatmul.mubr.f32.gmra.mrb[0].mxu0 %v195
      %v315 = vpop.f32.mrb[0].mxu0
      %v316 = vadd.f32 0.0, %v315
      %v317 = vpop.f32.mrb[0].mxu0
      %318 = vmatprep.mubr.f32.mxu0 0.0
      %319 = vmatmul.mubr.f32.gmra.mrb[0].mxu0 %v198
      %v320 = vpop.f32.mrb[0].mxu0
      %v321 = vadd.f32 0.0, %v320
      %v322 = vpop.f32.mrb[0].mxu0
      %323 = vmatprep.mubr.f32.mxu0 0.0
      %324 = vmatmul.mubr.f32.gmra.mrb[0].mxu0 %v201
      %v325 = vpop.f32.mrb[0].mxu0
      %v326 = vadd.f32 0.0, %v325
      %v327 = vpop.f32.mrb[0].mxu0
      %328 = vmatprep.mubr.f32.mxu0 0.0
      %329 = vmatmul.mubr.f32.gmra.mrb[0].mxu0 %v204
      %v330 = vpop.f32.mrb[0].mxu0
      %v331 = vadd.f32 0.0, %v330
      %v332 = vpop.f32.mrb[0].mxu0
      %333 = vmatprep.mubr.f32.mxu0 0.0
      %334 = vmatmul.mubr.f32.gmra.mrb[0].mxu0 %v207
      %v335 = vpop.f32.mrb[0].mxu0
      %v336 = vadd.f32 0.0, %v335
      %v337 = vpop.f32.mrb[0].mxu0
      %338 = vmatprep.mubr.f32.mxu0 0.0
      %339 = vmatmul.mubr.f32.gmra.mrb[0].mxu0 %v210
      %v340 = vpop.f32.mrb[0].mxu0
      %v341 = vadd.f32 0.0, %v340
      %v342 = vpop.f32.mrb[0].mxu0
      %343 = vmatprep.mubr.f32.mxu0 0.0
      %344 = vmatmul.mubr.f32.gmra.mrb[0].mxu0 %v213
      %v345 = vpop.f32.mrb[0].mxu0
      %v346 = vadd.f32 0.0, %v345
      %v347 = vpop.f32.mrb[0].mxu0
      %348 = vmatprep.mubr.f32.mxu0 0.0
      %349 = vmatmul.mubr.f32.gmra.mrb[0].mxu0 %v216
      %v350 = vpop.f32.mrb[0].mxu0
      %v351 = vadd.f32 0.0, %v350
      %v352 = vpop.f32.mrb[0].mxu0
      %353 = vmatprep.mubr.f32.mxu0 0.0
      %354 = vmatmul.mubr.f32.gmra.mrb[0].mxu0 %v219
      %v355 = vpop.f32.mrb[0].mxu0
      %v356 = vadd.f32 0.0, %v355
      %v357 = vpop.f32.mrb[0].mxu0
      %358 = vmatprep.mubr.f32.mxu0 0.0
      %359 = vmatmul.mubr.f32.gmra.mrb[0].mxu0 %v222
      %v360 = vpop.f32.mrb[0].mxu0
      %v361 = vadd.f32 0.0, %v360
      %v362 = vpop.f32.mrb[0].mxu0
      %363 = vmatprep.mubr.f32.mxu0 0.0
      %364 = vmatmul.mubr.f32.gmra.mrb[0].mxu0 %v225
      %v365 = vpop.f32.mrb[0].mxu0
      %v366 = vadd.f32 0.0, %v365
      %v367 = vpop.f32.mrb[0].mxu0
      %368 = vmatprep.mubr.f32.mxu0 0.0
      %369 = vmatmul.mubr.f32.gmra.mrb[0].mxu0 %v228
      %v370 = vpop.f32.mrb[0].mxu0
      %v371 = vadd.f32 0.0, %v370
      %v372 = vpop.f32.mrb[0].mxu0
      %373 = vmatprep.mubr.f32.mxu0 0.0
      %374 = vmatmul.mubr.f32.gmra.mrb[0].mxu0 %v231
      %v375 = vpop.f32.mrb[0].mxu0
      %v376 = vadd.f32 0.0, %v375
      %v377 = vpop.f32.mrb[0].mxu0
      %378 = vmatprep.mubr.f32.mxu0 0.0
      %379 = vmatmul.mubr.f32.gmra.mrb[0].mxu0 %v234
      %v380 = vpop.f32.mrb[0].mxu0
      %v381 = vadd.f32 0.0, %v380
      %v382 = vpop.f32.mrb[0].mxu0
      %383 = vdwg.mxu0
      %v384 = vmul.f32 %v306, 2.0
      %v385 = vmul.f32 %v311, 2.0
      %v386 = vmul.f32 %v316, 2.0
      %v387 = vmul.f32 %v321, 2.0
      %v388 = vmul.f32 %v326, 2.0
      %v389 = vmul.f32 %v331, 2.0
      %v390 = vmul.f32 %v336, 2.0
      %v391 = vmul.f32 %v341, 2.0
      %v392 = vmul.f32 %v346, 2.0
      %v393 = vmul.f32 %v351, 2.0
      %v394 = vmul.f32 %v356, 2.0
      %v395 = vmul.f32 %v361, 2.0
      %v396 = vmul.f32 %v366, 2.0
      %v397 = vmul.f32 %v371, 2.0
      %v398 = vmul.f32 %v376, 2.0
      %v399 = vmul.f32 %v381, 2.0
      %v400 = vsub.f32 %v186, %v384
      %v401 = vsub.f32 %v186, %v385
      %v402 = vsub.f32 %v186, %v386
      %v403 = vsub.f32 %v186, %v387
      %v404 = vsub.f32 %v186, %v388
      %v405 = vsub.f32 %v186, %v389
      %v406 = vsub.f32 %v186, %v390
      %v407 = vsub.f32 %v186, %v391
      %v408 = vsub.f32 %v186, %v392
      %v409 = vsub.f32 %v186, %v393
      %v410 = vsub.f32 %v186, %v394
      %v411 = vsub.f32 %v186, %v395
      %v412 = vsub.f32 %v186, %v396
      %v413 = vsub.f32 %v186, %v397
      %v414 = vsub.f32 %v186, %v398
      %v415 = vsub.f32 %v186, %v399
      %416 = vst [vmem:[%s160] sm:$0xff] %v400
      %417 = vst [vmem:[%s160 + $0x8] sm:$0xff] %v401
      %418 = vst [vmem:[%s160 + $0x10] sm:$0xff] %v402
      %419 = vst [vmem:[%s160 + $0x18] sm:$0xff] %v403
      %420 = vst [vmem:[%s160 + $0x20] sm:$0xff] %v404
      %421 = vst [vmem:[%s160 + $0x28] sm:$0xff] %v405
      %422 = vst [vmem:[%s160 + $0x30] sm:$0xff] %v406
      %423 = vst [vmem:[%s160 + $0x38] sm:$0xff] %v407
      %424 = vst [vmem:[%s160 + $0x40] sm:$0xff] %v408
      %425 = vst [vmem:[%s160 + $0x48] sm:$0xff] %v409
      %426 = vst [vmem:[%s160 + $0x50] sm:$0xff] %v410
      %427 = vst [vmem:[%s160 + $0x58] sm:$0xff] %v411
      %428 = vst [vmem:[%s160 + $0x60] sm:$0xff] %v412
      %429 = vst [vmem:[%s160 + $0x68] sm:$0xff] %v413
      %430 = vst [vmem:[%s160 + $0x70] sm:$0xff] %v414
      %431 = vst [vmem:[%s160 + $0x78] sm:$0xff] %v415
      %p432 = scmp.lt.s32.totalorder %s13, 1
      %s433 = scalar_select %p432, %s13, 1
      %s434 = smul.addr %s433, 16
      %s435 = smul.addr %s434, 8
      %s436 = scalar_lea.vmem %s2, %s435
      // Predicated region
      $region29: #{generator_forward.30} parent=27 // pred_check
        %p437 = pneg %p83
      $region30: #{generator_forward.30} parent=27 // pred_check_branch
        %439 = sbr.rel (%p437) target = $region32
      $region31: #{generator_forward.30} parent=27 // pred_region
        _
      $region32: #{generator_forward.30} parent=27 // pred_fallthru
        _
    $region28: #{generator_forward.30} parent=5 // pred_fallthru
      _
    %p440 = scmp.le.s32.totalorder 2, %s8
    // Predicated region
    $region33: #{generator_forward.30} parent=5 // pred_check
      %p441 = pneg %p440
    $region34: #{generator_forward.30} parent=5 // pred_check_branch
      %443 = sbr.rel (%p441) target = $region36
    $region35: #{generator_forward.30} parent=5 // pred_region
      %s444 = ssub.s32 %s8, 2
      // Predicated region
      $region37: #{generator_forward.30} parent=35 // pred_check
        %p445 = pneg %p89
      $region38: #{generator_forward.30} parent=35 // pred_check_branch
        %447 = sbr.rel (%p445) target = $region40
      $region39: #{generator_forward.30} parent=35 // pred_region
        %p448 = scmp.lt.s32.totalorder %s14, 1
        %s449 = scalar_select %p448, %s14, 1
        %s450 = smul.addr %s449, 16
        %s451 = smul.addr %s450, 8
        %s452 = scalar_lea.vmem %s2, %s451
      $region40: #{generator_forward.30} parent=35 // pred_fallthru
        _
    $region36: #{generator_forward.30} parent=5 // pred_fallthru
      _
  $region6: #{generator_forward.30} parent=0 // loop_footer
    %s12 = sadd.s32 1, %s8
  $region7: #{generator_forward.30} parent=0 // loop_footer_branch
    %7 = sbr.rel target = $region3
  $region8: #{generator_forward.30} parent=0 // loop_exit
    _

// kernel: generator_forward.31
$region0: #{generator_forward.31}
  #allocation0 [shape = 'u32[]', space=smem, size = 0x4, offset = 0x4, fixed_abs, tag = 'smem constant byte address 0x4 - core index']
  #allocation1 [shape = 'u32[144,128]{1,0:T(1,128)}', space=vmem, size = 0x12000, scoped, tag = 'internal scratch']
  %s0 = inlined_call_operand.vmem [shape: f32[2,3,512], index: 0, kind: input, shape index: {}]
  %s1 = inlined_call_operand.vmem [shape: f32[32,3], index: 1, kind: input, shape index: {}]
  %s2 = inlined_call_operand.vmem [shape: f32[32,32], index: 2, kind: input, shape index: {}]
  %s3 = inlined_call_operand.vmem [shape: f32[32,32], index: 3, kind: input, shape index: {}]
  %s4 = inlined_call_operand.vmem [shape: f32[2,32,128], index: 4, kind: output, shape index: {}]
  %s5 = sld [smem:[#allocation0]]
  $region49: #{generator_forward.31} parent=0
    _
  %s7 = ssub.s32 1, %s5
  %s8 = scalar_select 0, %s7, %s5
  loop: start=0, step=1, limit=4
  $region2: #{generator_forward.31} parent=0 // loop_pre_header
    _
  $region3: #{generator_forward.31} parent=0 // loop_header
    %s10 = sphi 0, %s14
    %p11 = scmp.ge.s32.totalorder %s10, 4
    %s20 = sphi 0, %s22
    %s23 = sphi 0, %s20
    %s24 = sphi 0, %s23
    %s40 = sphi 0, %s24
    %s44 = sphi 0, %s44
    %s46 = sphi 0, %s44
    %s47 = sphi 0, %s46
    %s61 = sphi 0, %s47
    %s65 = sphi 0, %s65
    %s67 = sphi 0, %s65
    %s68 = sphi 0, %s67
    %s82 = sphi 0, %s68
    %s86 = sphi 0, %s86
    %s88 = sphi 0, %s86
    %s89 = sphi 0, %s88
    %s103 = sphi 0, %s89
    %s109 = sphi 0, %s111
    %s112 = sphi 0, %s109
    %s113 = sphi 0, %s112
    %s129 = sphi 0, %s113
  $region4: #{generator_forward.31} parent=0 // loop_header_branch
    %13 = sbr.rel (%p11) target = $region8
  $region5: #{generator_forward.31} parent=0 // loop_body
    %s15 = ssub.s32 %s10, 1
    %s16 = ssub.s32 %s10, 2
    %s17 = sadd.s32 %s10, 1
    %s18 = ssub.s32 %s10, %s17
    %p19 = scmp.eq.s32.totalorder %s18, 0
    %s21 = sadd.s32 %s20, 1
    %s22 = scalar_select %p19, %s20, %s21
    %p25 = pneg %p19
    %p26 = scmp.eq.s32.totalorder %s10, 1
    %p27 = por %p25, %p26
    %p28 = scmp.ne.s32.totalorder %s20, %s23
    %p29 = scmp.eq.s32.totalorder %s10, 0
    %p30 = por %p28, %p29
    %p31 = scmp.ne.s32.totalorder %s20, %s23
    %p32 = scmp.eq.s32.totalorder %s15, 1
    %p33 = por %p31, %p32
    %p34 = scmp.ne.s32.totalorder %s23, %s24
    %p35 = scmp.eq.s32.totalorder %s15, 0
    %p36 = por %p34, %p35
    %p37 = scmp.ne.s32.totalorder %s23, %s24
    %p38 = scmp.eq.s32.totalorder %s16, 1
    %p39 = por %p37, %p38
    %p41 = scmp.ne.s32.totalorder %s24, %s40
    %p42 = scmp.eq.s32.totalorder %s16, 0
    %p43 = por %p41, %p42
    %s45 = sadd.s32 %s44, 1
    %p48 = scmp.eq.s32.totalorder %s10, 1
    %p49 = scmp.ne.s32.totalorder %s44, %s46
    %p50 = scmp.eq.s32.totalorder %s10, 0
    %p51 = por %p49, %p50
    %p52 = scmp.ne.s32.totalorder %s44, %s46
    %p53 = scmp.eq.s32.totalorder %s15, 1
    %p54 = por %p52, %p53
    %p55 = scmp.ne.s32.totalorder %s46, %s47
    %p56 = scmp.eq.s32.totalorder %s15, 0
    %p57 = por %p55, %p56
    %p58 = scmp.ne.s32.totalorder %s46, %s47
    %p59 = scmp.eq.s32.totalorder %s16, 1
    %p60 = por %p58, %p59
    %p62 = scmp.ne.s32.totalorder %s47, %s61
    %p63 = scmp.eq.s32.totalorder %s16, 0
    %p64 = por %p62, %p63
    %s66 = sadd.s32 %s65, 1
    %p69 = scmp.eq.s32.totalorder %s10, 1
    %p70 = scmp.ne.s32.totalorder %s65, %s67
    %p71 = scmp.eq.s32.totalorder %s10, 0
    %p72 = por %p70, %p71
    %p73 = scmp.ne.s32.totalorder %s65, %s67
    %p74 = scmp.eq.s32.totalorder %s15, 1
    %p75 = por %p73, %p74
    %p76 = scmp.ne.s32.totalorder %s67, %s68
    %p77 = scmp.eq.s32.totalorder %s15, 0
    %p78 = por %p76, %p77
    %p79 = scmp.ne.s32.totalorder %s67, %s68
    %p80 = scmp.eq.s32.totalorder %s16, 1
    %p81 = por %p79, %p80
    %p83 = scmp.ne.s32.totalorder %s68, %s82
    %p84 = scmp.eq.s32.totalorder %s16, 0
    %p85 = por %p83, %p84
    %s87 = sadd.s32 %s86, 1
    %p90 = scmp.eq.s32.totalorder %s10, 1
    %p91 = scmp.ne.s32.totalorder %s86, %s88
    %p92 = scmp.eq.s32.totalorder %s10, 0
    %p93 = por %p91, %p92
    %p94 = scmp.ne.s32.totalorder %s86, %s88
    %p95 = scmp.eq.s32.totalorder %s15, 1
    %p96 = por %p94, %p95
    %p97 = scmp.ne.s32.totalorder %s88, %s89
    %p98 = scmp.eq.s32.totalorder %s15, 0
    %p99 = por %p97, %p98
    %p100 = scmp.ne.s32.totalorder %s88, %s89
    %p101 = scmp.eq.s32.totalorder %s16, 1
    %p102 = por %p100, %p101
    %p104 = scmp.ne.s32.totalorder %s89, %s103
    %p105 = scmp.eq.s32.totalorder %s16, 0
    %p106 = por %p104, %p105
    %s107 = ssub.s32 %s10, %s17
    %p108 = scmp.eq.s32.totalorder %s107, 0
    %s110 = sadd.s32 %s109, 1
    %s111 = scalar_select %p108, %s109, %s110
    %p114 = pneg %p108
    %p115 = scmp.eq.s32.totalorder %s10, 1
    %p116 = por %p114, %p115
    %p117 = scmp.ne.s32.totalorder %s109, %s112
    %p118 = scmp.eq.s32.totalorder %s10, 0
    %p119 = por %p117, %p118
    %p120 = scmp.ne.s32.totalorder %s109, %s112
    %p121 = scmp.eq.s32.totalorder %s15, 1
    %p122 = por %p120, %p121
    %p123 = scmp.ne.s32.totalorder %s112, %s113
    %p124 = scmp.eq.s32.totalorder %s15, 0
    %p125 = por %p123, %p124
    %p126 = scmp.ne.s32.totalorder %s112, %s113
    %p127 = scmp.eq.s32.totalorder %s16, 1
    %p128 = por %p126, %p127
    %p130 = scmp.ne.s32.totalorder %s113, %s129
    %p131 = scmp.eq.s32.totalorder %s16, 0
    %p132 = por %p130, %p131
    %p133 = scmp.le.s32.totalorder 1, %s10
    %p134 = scmp.lt.s32.totalorder %s10, 3
    %p135 = pnand %p133, %p134
    %p136 = pneg %p135
    // Predicated region
    $region9: #{generator_forward.31} parent=5 // pred_check
      _
    $region10: #{generator_forward.31} parent=5 // pred_check_branch
      %138 = sbr.rel (%p135) target = $region12
    $region11: #{generator_forward.31} parent=5 // pred_region
      %s139 = ssub.s32 %s10, 1
      // Predicated region
      $region13: #{generator_forward.31} parent=11 // pred_check
        %p140 = pneg %p57
      $region14: #{generator_forward.31} parent=11 // pred_check_branch
        %142 = sbr.rel (%p140) target = $region16
      $region15: #{generator_forward.31} parent=11 // pred_region
        _
      $region16: #{generator_forward.31} parent=11 // pred_fallthru
        _
      // Predicated region
      $region17: #{generator_forward.31} parent=11 // pred_check
        %p143 = pneg %p78
      $region18: #{generator_forward.31} parent=11 // pred_check_branch
        %145 = sbr.rel (%p143) target = $region20
      $region19: #{generator_forward.31} parent=11 // pred_region
        _
      $region20: #{generator_forward.31} parent=11 // pred_fallthru
        _
      // Predicated region
      $region21: #{generator_forward.31} parent=11 // pred_check
        %p146 = pneg %p99
      $region22: #{generator_forward.31} parent=11 // pred_check_branch
        %148 = sbr.rel (%p146) target = $region24
      $region23: #{generator_forward.31} parent=11 // pred_region
        _
      $region24: #{generator_forward.31} parent=11 // pred_fallthru
        _
    $region12: #{generator_forward.31} parent=5 // pred_fallthru
      _
    %p149 = scmp.lt.s32.totalorder %s10, 2
    // Predicated region
    $region25: #{generator_forward.31} parent=5 // pred_check
      %p150 = pneg %p149
    $region26: #{generator_forward.31} parent=5 // pred_check_branch
      %152 = sbr.rel (%p150) target = $region28
    $region27: #{generator_forward.31} parent=5 // pred_region
      // Predicated region
      $region29: #{generator_forward.31} parent=27 // pred_check
        %p153 = pneg %p30
      $region30: #{generator_forward.31} parent=27 // pred_check_branch
        %155 = sbr.rel (%p153) target = $region32
      $region31: #{generator_forward.31} parent=27 // pred_region
        %p156 = scmp.lt.s32.totalorder %s10, 1
        %s157 = scalar_select %p156, %s10, 1
        %s158 = smul.addr %s157, 4
        %s159 = smul.addr %s158, 4
        %s160 = scalar_lea.vmem %s0, %s159
      $region32: #{generator_forward.31} parent=27 // pred_fallthru
        _
    $region28: #{generator_forward.31} parent=5 // pred_fallthru
      _
    %p161 = scmp.le.s32.totalorder 1, %s10
    %p162 = scmp.lt.s32.totalorder %s10, 3
    %p163 = pnand %p161, %p162
    %p164 = pneg %p163
    // Predicated region
    $region33: #{generator_forward.31} parent=5 // pred_check
      _
    $region34: #{generator_forward.31} parent=5 // pred_check_branch
      %166 = sbr.rel (%p163) target = $region36
    $region35: #{generator_forward.31} parent=5 // pred_region
      %s167 = ssub.s32 %s10, 1
      %p168 = scmp.lt.s32.totalorder %s15, 1
      %s169 = scalar_select %p168, %s15, 1
      %s170 = smul.addr %s169, 4
      %s171 = smul.addr %s170, 4
      %s172 = scalar_lea.vmem %s0, %s171
      %p173 = pneg %p36
      %p174 = pneg %p33
      %p175 = pneg %p57
      %p176 = pneg %p54
      %p177 = pneg %p78
      %p178 = pneg %p75
      %p179 = pneg %p99
      %p180 = pneg %p96
      %p181 = pneg %p125
      %p182 = pneg %p122
      %p183 = scmp.lt.s32.totalorder %s15, 1
      %s184 = scalar_select %p183, %s15, 1
      %s185 = smul.addr %s184, 4
      %s186 = smul.addr %s185, 8
      %s187 = scalar_lea.vmem %s4, %s186
      %p188 = scmp.lt.s32.totalorder %s15, 1
      %s189 = scalar_select %p188, %s15, 1
      %s190 = smul.addr %s189, 4
      %s191 = smul.addr %s190, 4
      %s192 = scalar_lea.vmem %s0, %s191
      %p193 = scmp.lt.s32.totalorder %s15, 1
      %s194 = scalar_select %p193, %s15, 1
      %s195 = smul.addr %s194, 4
      %s196 = smul.addr %s195, 8
      %s197 = scalar_lea.vmem %s4, %s196
      %v198 = vld [vmem:[%s192] sm:$0x77]
      %v199 = vld [vmem:[%s192 + $0x8] sm:$0x77]
      %v200 = vld [vmem:[%s1] sm:$0xff]
      %v201 = vld [vmem:[%s1 + $0x8] sm:$0xff]
      %v202 = vld [vmem:[%s1 + $0x10] sm:$0xff]
      %v203 = vld [vmem:[%s1 + $0x18] sm:$0xff]
      %v206 = vcombine.high %v198, %v198
      %v207 = vcombine.high %v199, %v199
      %vm208 = vcmask 23552
      %v210 = vsel %vm208, %v200, 0
      %v213 = vsel %vm208, %v201, 0
      %v216 = vsel %vm208, %v202, 0
      %v219 = vsel %vm208, %v203, 0
      %vm221 = vcmask 1042432
      %v222 = vsel %vm221, %v198, 0
      %v224 = vsel %vm221, %v206, 0
      %v226 = vsel %vm221, %v199, 0
      %v228 = vsel %vm221, %v207, 0
      %230 = vmatprep.subr.mxu0 %v224
      %231 = vmatpush1.msra.mxu0 %v222
      %232 = vmatprep.subr.mxu0 0.0
      %233 = vmatpush1.msra.mxu0 0.0
      %234 = vmatprep.subr.mxu0 0.0
      %235 = vmatpush1.msra.mxu0 0.0
      %236 = vmatprep.subr.mxu0 0.0
      %237 = vmatpush1.msra.mxu0 0.0
      %238 = vmatprep.subr.mxu0 0.0
      %239 = vmatpush1.msra.mxu0 0.0
      %240 = vmatprep.subr.mxu0 0.0
      %241 = vmatpush1.msra.mxu0 0.0
      %242 = vmatprep.subr.mxu0 0.0
      %243 = vmatpush1.msra.mxu0 0.0
      %244 = vmatprep.subr.mxu0 0.0
      %245 = vmatpush1.msra.mxu0 0.0
      %246 = vmatprep.subr.mxu0 0.0
      %247 = vmatpush1.msra.mxu0 0.0
      %248 = vmatprep.subr.mxu0 0.0
      %249 = vmatpush1.msra.mxu0 0.0
      %250 = vmatprep.subr.mxu0 0.0
      %251 = vmatpush1.msra.mxu0 0.0
      %252 = vmatprep.subr.mxu0 0.0
      %253 = vmatpush1.msra.mxu0 0.0
      %254 = vmatprep.subr.mxu0 0.0
      %255 = vmatpush1.msra.mxu0 0.0
      %256 = vmatprep.subr.mxu0 0.0
      %257 = vmatpush1.msra.mxu0 0.0
      %258 = vmatprep.subr.mxu0 0.0
      %259 = vmatpush1.msra.mxu0 0.0
      %260 = vmatprep.subr.mxu0 0.0
      %261 = vmatpush1.msra.mxu0 0.0
      %262 = vmatprep.subr.mxu0 0.0
      %263 = vmatpush1.msra.mxu0 0.0
      %264 = vmatprep.subr.mxu0 0.0
      %265 = vmatpush1.msra.mxu0 0.0
      %266 = vmatprep.subr.mxu0 0.0
      %267 = vmatpush1.msra.mxu0 0.0
      %268 = vmatprep.subr.mxu0 0.0
      %269 = vmatpush1.msra.mxu0 0.0
      %270 = vmatprep.subr.mxu0 0.0
      %271 = vmatpush1.msra.mxu0 0.0
      %272 = vmatprep.subr.mxu0 0.0
      %273 = vmatpush1.msra.mxu0 0.0
      %274 = vmatprep.subr.mxu0 0.0
      %275 = vmatpush1.msra.mxu0 0.0
      %276 = vmatprep.subr.mxu0 0.0
      %277 = vmatpush1.msra.mxu0 0.0
      %278 = vmatprep.subr.mxu0 0.0
      %279 = vmatpush1.msra.mxu0 0.0
      %280 = vmatprep.subr.mxu0 0.0
      %281 = vmatpush1.msra.mxu0 0.0
      %282 = vmatprep.subr.mxu0 0.0
      %283 = vmatpush1.msra.mxu0 0.0
      %284 = vmatprep.subr.mxu0 0.0
      %285 = vmatpush1.msra.mxu0 0.0
      %286 = vmatprep.subr.mxu0 0.0
      %287 = vmatpush1.msra.mxu0 0.0
      %288 = vmatprep.subr.mxu0 0.0
      %289 = vmatpush1.msra.mxu0 0.0
      %290 = vmatprep.subr.mxu0 0.0
      %291 = vmatpush1.msra.mxu0 0.0
      %292 = vmatprep.subr.mxu0 0.0
      %293 = vmatpush1.msra.mxu0 0.0
      %294 = vmatprep.mubr.f32.mxu0 0.0
      %295 = vmatmul.mubr.f32.gmra.mrb[0].mxu0 %v210
      %v296 = vpop.f32.mrb[0].mxu0
      %v297 = vadd.f32 0.0, %v296
      %v298 = vpop.f32.mrb[0].mxu0
      %v299 = vadd.f32 0.0, %v298
      %300 = vmatprep.mubr.f32.mxu0 0.0
      %301 = vmatmul.mubr.f32.gmra.mrb[0].mxu0 %v213
      %v302 = vpop.f32.mrb[0].mxu0
      %v303 = vadd.f32 0.0, %v302
      %v304 = vpop.f32.mrb[0].mxu0
      %v305 = vadd.f32 0.0, %v304
      %306 = vmatprep.mubr.f32.mxu0 0.0
      %307 = vmatmul.mubr.f32.gmra.mrb[0].mxu0 %v216
      %v308 = vpop.f32.mrb[0].mxu0
      %v309 = vadd.f32 0.0, %v308
      %v310 = vpop.f32.mrb[0].mxu0
      %v311 = vadd.f32 0.0, %v310
      %312 = vmatprep.mubr.f32.mxu0 0.0
      %313 = vmatmul.mubr.f32.gmra.mrb[0].mxu0 %v219
      %v314 = vpop.f32.mrb[0].mxu0
      %v315 = vadd.f32 0.0, %v314
      %v316 = vpop.f32.mrb[0].mxu0
      %v317 = vadd.f32 0.0, %v316
      %318 = vdwg.mxu0
      %319 = vmatprep.subr.mxu0 %v228
      %320 = vmatpush1.msra.mxu0 %v226
      %321 = vmatprep.subr.mxu0 0.0
      %322 = vmatpush1.msra.mxu0 0.0
      %323 = vmatprep.subr.mxu0 0.0
      %324 = vmatpush1.msra.mxu0 0.0
      %325 = vmatprep.subr.mxu0 0.0
      %326 = vmatpush1.msra.mxu0 0.0
      %327 = vmatprep.subr.mxu0 0.0
      %328 = vmatpush1.msra.mxu0 0.0
      %329 = vmatprep.subr.mxu0 0.0
      %330 = vmatpush1.msra.mxu0 0.0
      %331 = vmatprep.subr.mxu0 0.0
      %332 = vmatpush1.msra.mxu0 0.0
      %333 = vmatprep.subr.mxu0 0.0
      %334 = vmatpush1.msra.mxu0 0.0
      %335 = vmatprep.subr.mxu0 0.0
      %336 = vmatpush1.msra.mxu0 0.0
      %337 = vmatprep.subr.mxu0 0.0
      %338 = vmatpush1.msra.mxu0 0.0
      %339 = vmatprep.subr.mxu0 0.0
      %340 = vmatpush1.msra.mxu0 0.0
      %341 = vmatprep.subr.mxu0 0.0
      %342 = vmatpush1.msra.mxu0 0.0
      %343 = vmatprep.subr.mxu0 0.0
      %344 = vmatpush1.msra.mxu0 0.0
      %345 = vmatprep.subr.mxu0 0.0
      %346 = vmatpush1.msra.mxu0 0.0
      %347 = vmatprep.subr.mxu0 0.0
      %348 = vmatpush1.msra.mxu0 0.0
      %349 = vmatprep.subr.mxu0 0.0
      %350 = vmatpush1.msra.mxu0 0.0
      %351 = vmatprep.subr.mxu0 0.0
      %352 = vmatpush1.msra.mxu0 0.0
      %353 = vmatprep.subr.mxu0 0.0
      %354 = vmatpush1.msra.mxu0 0.0
      %355 = vmatprep.subr.mxu0 0.0
      %356 = vmatpush1.msra.mxu0 0.0
      %357 = vmatprep.subr.mxu0 0.0
      %358 = vmatpush1.msra.mxu0 0.0
      %359 = vmatprep.subr.mxu0 0.0
      %360 = vmatpush1.msra.mxu0 0.0
      %361 = vmatprep.subr.mxu0 0.0
      %362 = vmatpush1.msra.mxu0 0.0
      %363 = vmatprep.subr.mxu0 0.0
      %364 = vmatpush1.msra.mxu0 0.0
      %365 = vmatprep.subr.mxu0 0.0
      %366 = vmatpush1.msra.mxu0 0.0
      %367 = vmatprep.subr.mxu0 0.0
      %368 = vmatpush1.msra.mxu0 0.0
      %369 = vmatprep.subr.mxu0 0.0
      %370 = vmatpush1.msra.mxu0 0.0
      %371 = vmatprep.subr.mxu0 0.0
      %372 = vmatpush1.msra.mxu0 0.0
      %373 = vmatprep.subr.mxu0 0.0
      %374 = vmatpush1.msra.mxu0 0.0
      %375 = vmatprep.subr.mxu0 0.0
      %376 = vmatpush1.msra.mxu0 0.0
      %377 = vmatprep.subr.mxu0 0.0
      %378 = vmatpush1.msra.mxu0 0.0
      %379 = vmatprep.subr.mxu0 0.0
      %380 = vmatpush1.msra.mxu0 0.0
      %381 = vmatprep.subr.mxu0 0.0
      %382 = vmatpush1.msra.mxu0 0.0
      %383 = vmatprep.mubr.f32.mxu0 0.0
      %384 = vmatmul.mubr.f32.gmra.mrb[0].mxu0 %v210
      %v385 = vpop.f32.mrb[0].mxu0
      %v386 = vadd.f32 0.0, %v385
      %v387 = vpop.f32.mrb[0].mxu0
      %v388 = vadd.f32 0.0, %v387
      %389 = vmatprep.mubr.f32.mxu0 0.0
      %390 = vmatmul.mubr.f32.gmra.mrb[0].mxu0 %v213
      %v391 = vpop.f32.mrb[0].mxu0
      %v392 = vadd.f32 0.0, %v391
      %v393 = vpop.f32.mrb[0].mxu0
      %v394 = vadd.f32 0.0, %v393
      %395 = vmatprep.mubr.f32.mxu0 0.0
      %396 = vmatmul.mubr.f32.gmra.mrb[0].mxu0 %v216
      %v397 = vpop.f32.mrb[0].mxu0
      %v398 = vadd.f32 0.0, %v397
      %v399 = vpop.f32.mrb[0].mxu0
      %v400 = vadd.f32 0.0, %v399
      %401 = vmatprep.mubr.f32.mxu0 0.0
      %402 = vmatmul.mubr.f32.gmra.mrb[0].mxu0 %v219
      %v403 = vpop.f32.mrb[0].mxu0
      %v404 = vadd.f32 0.0, %v403
      %v405 = vpop.f32.mrb[0].mxu0
      %v406 = vadd.f32 0.0, %v405
      %407 = vdwg.mxu0
      %v408 = vmax.f32 %v297, 0.0
      %v409 = vmax.f32 %v299, 0.0
      %v410 = vmax.f32 %v386, 0.0
      %v411 = vmax.f32 %v388, 0.0
      %v412 = vmax.f32 %v303, 0.0
      %v413 = vmax.f32 %v305, 0.0
      %v414 = vmax.f32 %v392, 0.0
      %v415 = vmax.f32 %v394, 0.0
      %v416 = vmax.f32 %v309, 0.0
      %v417 = vmax.f32 %v311, 0.0
      %v418 = vmax.f32 %v398, 0.0
      %v419 = vmax.f32 %v400, 0.0
      %v420 = vmax.f32 %v315, 0.0
      %v421 = vmax.f32 %v317, 0.0
      %v422 = vmax.f32 %v404, 0.0
      %v423 = vmax.f32 %v406, 0.0
      %v424 = vld [vmem:[%s2] sm:$0xff]
      %v425 = vld [vmem:[%s2 + $0x8] sm:$0xff]
      %v426 = vld [vmem:[%s2 + $0x10] sm:$0xff]
      %v427 = vld [vmem:[%s2 + $0x18] sm:$0xff]
      %vm428 = vcmask 261120
      %v430 = vsel %vm428, %v424, 0
      %v433 = vsel %vm428, %v425, 0
      %v436 = vsel %vm428, %v426, 0
      %v439 = vsel %vm428, %v427, 0
      %441 = vmatprep.subr.mxu0 %v409
      %442 = vmatpush1.msra.mxu0 %v408
      %443 = vmatprep.subr.mxu0 %v413
      %444 = vmatpush1.msra.mxu0 %v412
      %445 = vmatprep.subr.mxu0 %v417
      %446 = vmatpush1.msra.mxu0 %v416
      %447 = vmatprep.subr.mxu0 %v421
      %448 = vmatpush1.msra.mxu0 %v420
      %449 = vmatprep.subr.mxu0 0.0
      %450 = vmatpush1.msra.mxu0 0.0
      %451 = vmatprep.subr.mxu0 0.0
      %452 = vmatpush1.msra.mxu0 0.0
      %453 = vmatprep.subr.mxu0 0.0
      %454 = vmatpush1.msra.mxu0 0.0
      %455 = vmatprep.subr.mxu0 0.0
      %456 = vmatpush1.msra.mxu0 0.0
      %457 = vmatprep.subr.mxu0 0.0
      %458 = vmatpush1.msra.mxu0 0.0
      %459 = vmatprep.subr.mxu0 0.0
      %460 = vmatpush1.msra.mxu0 0.0
      %461 = vmatprep.subr.mxu0 0.0
      %462 = vmatpush1.msra.mxu0 0.0
      %463 = vmatprep.subr.mxu0 0.0
      %464 = vmatpush1.msra.mxu0 0.0
      %465 = vmatprep.subr.mxu0 0.0
      %466 = vmatpush1.msra.mxu0 0.0
      %467 = vmatprep.subr.mxu0 0.0
      %468 = vmatpush1.msra.mxu0 0.0
      %469 = vmatprep.subr.mxu0 0.0
      %470 = vmatpush1.msra.mxu0 0.0
      %471 = vmatprep.subr.mxu0 0.0
      %472 = vmatpush1.msra.mxu0 0.0
      %473 = vmatprep.subr.mxu0 0.0
      %474 = vmatpush1.msra.mxu0 0.0
      %475 = vmatprep.subr.mxu0 0.0
      %476 = vmatpush1.msra.mxu0 0.0
      %477 = vmatprep.subr.mxu0 0.0
      %478 = vmatpush1.msra.mxu0 0.0
      %479 = vmatprep.subr.mxu0 0.0
      %480 = vmatpush1.msra.mxu0 0.0
      %481 = vmatprep.subr.mxu0 0.0
      %482 = vmatpush1.msra.mxu0 0.0
      %483 = vmatprep.subr.mxu0 0.0
      %484 = vmatpush1.msra.mxu0 0.0
      %485 = vmatprep.subr.mxu0 0.0
      %486 = vmatpush1.msra.mxu0 0.0
      %487 = vmatprep.subr.mxu0 0.0
      %488 = vmatpush1.msra.mxu0 0.0
      %489 = vmatprep.subr.mxu0 0.0
      %490 = vmatpush1.msra.mxu0 0.0
      %491 = vmatprep.subr.mxu0 0.0
      %492 = vmatpush1.msra.mxu0 0.0
      %493 = vmatprep.subr.mxu0 0.0
      %494 = vmatpush1.msra.mxu0 0.0
      %495 = vmatprep.subr.mxu0 0.0
      %496 = vmatpush1.msra.mxu0 0.0
      %497 = vmatprep.subr.mxu0 0.0
      %498 = vmatpush1.msra.mxu0 0.0
      %499 = vmatprep.subr.mxu0 0.0
      %500 = vmatpush1.msra.mxu0 0.0
      %501 = vmatprep.subr.mxu0 0.0
      %502 = vmatpush1.msra.mxu0 0.0
      %503 = vmatprep.subr.mxu0 0.0
      %504 = vmatpush1.msra.mxu0 0.0
      %505 = vmatprep.mubr.f32.mxu0 0.0
      %506 = vmatmul.mubr.f32.gmra.mrb[0].mxu0 %v430
      %v507 = vpop.f32.mrb[0].mxu0
      %v508 = vadd.f32 0.0, %v507
      %v509 = vpop.f32.mrb[0].mxu0
      %v510 = vadd.f32 0.0, %v509
      %511 = vmatprep.mubr.f32.mxu0 0.0
      %512 = vmatmul.mubr.f32.gmra.mrb[0].mxu0 %v433
      %v513 = vpop.f32.mrb[0].mxu0
      %v514 = vadd.f32 0.0, %v513
      %v515 = vpop.f32.mrb[0].mxu0
      %v516 = vadd.f32 0.0, %v515
      %517 = vmatprep.mubr.f32.mxu0 0.0
      %518 = vmatmul.mubr.f32.gmra.mrb[0].mxu0 %v436
      %v519 = vpop.f32.mrb[0].mxu0
      %v520 = vadd.f32 0.0, %v519
      %v521 = vpop.f32.mrb[0].mxu0
      %v522 = vadd.f32 0.0, %v521
      %523 = vmatprep.mubr.f32.mxu0 0.0
      %524 = vmatmul.mubr.f32.gmra.mrb[0].mxu0 %v439
      %v525 = vpop.f32.mrb[0].mxu0
      %v526 = vadd.f32 0.0, %v525
      %v527 = vpop.f32.mrb[0].mxu0
      %v528 = vadd.f32 0.0, %v527
      %529 = vdwg.mxu0
      %530 = vmatprep.subr.mxu0 %v411
      %531 = vmatpush1.msra.mxu0 %v410
      %532 = vmatprep.subr.mxu0 %v415
      %533 = vmatpush1.msra.mxu0 %v414
      %534 = vmatprep.subr.mxu0 %v419
      %535 = vmatpush1.msra.mxu0 %v418
      %536 = vmatprep.subr.mxu0 %v423
      %537 = vmatpush1.msra.mxu0 %v422
      %538 = vmatprep.subr.mxu0 0.0
      %539 = vmatpush1.msra.mxu0 0.0
      %540 = vmatprep.subr.mxu0 0.0
      %541 = vmatpush1.msra.mxu0 0.0
      %542 = vmatprep.subr.mxu0 0.0
      %543 = vmatpush1.msra.mxu0 0.0
      %544 = vmatprep.subr.mxu0 0.0
      %545 = vmatpush1.msra.mxu0 0.0
      %546 = vmatprep.subr.mxu0 0.0
      %547 = vmatpush1.msra.mxu0 0.0
      %548 = vmatprep.subr.mxu0 0.0
      %549 = vmatpush1.msra.mxu0 0.0
      %550 = vmatprep.subr.mxu0 0.0
      %551 = vmatpush1.msra.mxu0 0.0
      %552 = vmatprep.subr.mxu0 0.0
      %553 = vmatpush1.msra.mxu0 0.0
      %554 = vmatprep.subr.mxu0 0.0
      %555 = vmatpush1.msra.mxu0 0.0
      %556 = vmatprep.subr.mxu0 0.0
      %557 = vmatpush1.msra.mxu0 0.0
      %558 = vmatprep.subr.mxu0 0.0
      %559 = vmatpush1.msra.mxu0 0.0
      %560 = vmatprep.subr.mxu0 0.0
      %561 = vmatpush1.msra.mxu0 0.0
      %562 = vmatprep.subr.mxu0 0.0
      %563 = vmatpush1.msra.mxu0 0.0
      %564 = vmatprep.subr.mxu0 0.0
      %565 = vmatpush1.msra.mxu0 0.0
      %566 = vmatprep.subr.mxu0 0.0
      %567 = vmatpush1.msra.mxu0 0.0
      %568 = vmatprep.subr.mxu0 0.0
      %569 = vmatpush1.msra.mxu0 0.0
      %570 = vmatprep.subr.mxu0 0.0
      %571 = vmatpush1.msra.mxu0 0.0
      %572 = vmatprep.subr.mxu0 0.0
      %573 = vmatpush1.msra.mxu0 0.0
      %574 = vmatprep.subr.mxu0 0.0
      %575 = vmatpush1.msra.mxu0 0.0
      %576 = vmatprep.subr.mxu0 0.0
      %577 = vmatpush1.msra.mxu0 0.0
      %578 = vmatprep.subr.mxu0 0.0
      %579 = vmatpush1.msra.mxu0 0.0
      %580 = vmatprep.subr.mxu0 0.0
      %581 = vmatpush1.msra.mxu0 0.0
      %582 = vmatprep.subr.mxu0 0.0
      %583 = vmatpush1.msra.mxu0 0.0
      %584 = vmatprep.subr.mxu0 0.0
      %585 = vmatpush1.msra.mxu0 0.0
      %586 = vmatprep.subr.mxu0 0.0
      %587 = vmatpush1.msra.mxu0 0.0
      %588 = vmatprep.subr.mxu0 0.0
      %589 = vmatpush1.msra.mxu0 0.0
      %590 = vmatprep.subr.mxu0 0.0
      %591 = vmatpush1.msra.mxu0 0.0
      %592 = vmatprep.subr.mxu0 0.0
      %593 = vmatpush1.msra.mxu0 0.0
      %594 = vmatprep.mubr.f32.mxu0 0.0
      %595 = vmatmul.mubr.f32.gmra.mrb[0].mxu0 %v430
      %v596 = vpop.f32.mrb[0].mxu0
      %v597 = vadd.f32 0.0, %v596
      %v598 = vpop.f32.mrb[0].mxu0
      %v599 = vadd.f32 0.0, %v598
      %600 = vmatprep.mubr.f32.mxu0 0.0
      %601 = vmatmul.mubr.f32.gmra.mrb[0].mxu0 %v433
      %v602 = vpop.f32.mrb[0].mxu0
      %v603 = vadd.f32 0.0, %v602
      %v604 = vpop.f32.mrb[0].mxu0
      %v605 = vadd.f32 0.0, %v604
      %606 = vmatprep.mubr.f32.mxu0 0.0
      %607 = vmatmul.mubr.f32.gmra.mrb[0].mxu0 %v436
      %v608 = vpop.f32.mrb[0].mxu0
      %v609 = vadd.f32 0.0, %v608
      %v610 = vpop.f32.mrb[0].mxu0
      %v611 = vadd.f32 0.0, %v610
      %612 = vmatprep.mubr.f32.mxu0 0.0
      %613 = vmatmul.mubr.f32.gmra.mrb[0].mxu0 %v439
      %v614 = vpop.f32.mrb[0].mxu0
      %v615 = vadd.f32 0.0, %v614
      %v616 = vpop.f32.mrb[0].mxu0
      %v617 = vadd.f32 0.0, %v616
      %618 = vdwg.mxu0
      %v619 = vmax.f32 %v508, 0.0
      %v620 = vmax.f32 %v510, 0.0
      %v621 = vmax.f32 %v597, 0.0
      %v622 = vmax.f32 %v599, 0.0
      %v623 = vmax.f32 %v514, 0.0
      %v624 = vmax.f32 %v516, 0.0
      %v625 = vmax.f32 %v603, 0.0
      %v626 = vmax.f32 %v605, 0.0
      %v627 = vmax.f32 %v520, 0.0
      %v628 = vmax.f32 %v522, 0.0
      %v629 = vmax.f32 %v609, 0.0
      %v630 = vmax.f32 %v611, 0.0
      %v631 = vmax.f32 %v526, 0.0
      %v632 = vmax.f32 %v528, 0.0
      %v633 = vmax.f32 %v615, 0.0
      %v634 = vmax.f32 %v617, 0.0
      %v635 = vld [vmem:[%s3] sm:$0xff]
      %v636 = vld [vmem:[%s3 + $0x8] sm:$0xff]
      %v637 = vld [vmem:[%s3 + $0x10] sm:$0xff]
      %v638 = vld [vmem:[%s3 + $0x18] sm:$0xff]
      %v640 = vsel %vm428, %v635, 0
      %v643 = vsel %vm428, %v636, 0
      %v646 = vsel %vm428, %v637, 0
      %v649 = vsel %vm428, %v638, 0
      %651 = vmatprep.subr.mxu0 %v620
      %652 = vmatpush1.msra.mxu0 %v619
      %653 = vmatprep.subr.mxu0 %v624
      %654 = vmatpush1.msra.mxu0 %v623
      %655 = vmatprep.subr.mxu0 %v628
      %656 = vmatpush1.msra.mxu0 %v627
      %657 = vmatprep.subr.mxu0 %v632
      %658 = vmatpush1.msra.mxu0 %v631
      %659 = vmatprep.subr.mxu0 0.0
      %660 = vmatpush1.msra.mxu0 0.0
      %661 = vmatprep.subr.mxu0 0.0
      %662 = vmatpush1.msra.mxu0 0.0
      %663 = vmatprep.subr.mxu0 0.0
      %664 = vmatpush1.msra.mxu0 0.0
      %665 = vmatprep.subr.mxu0 0.0
      %666 = vmatpush1.msra.mxu0 0.0
      %667 = vmatprep.subr.mxu0 0.0
      %668 = vmatpush1.msra.mxu0 0.0
      %669 = vmatprep.subr.mxu0 0.0
      %670 = vmatpush1.msra.mxu0 0.0
      %671 = vmatprep.subr.mxu0 0.0
      %672 = vmatpush1.msra.mxu0 0.0
      %673 = vmatprep.subr.mxu0 0.0
      %674 = vmatpush1.msra.mxu0 0.0
      %675 = vmatprep.subr.mxu0 0.0
      %676 = vmatpush1.msra.mxu0 0.0
      %677 = vmatprep.subr.mxu0 0.0
      %678 = vmatpush1.msra.mxu0 0.0
      %679 = vmatprep.subr.mxu0 0.0
      %680 = vmatpush1.msra.mxu0 0.0
      %681 = vmatprep.subr.mxu0 0.0
      %682 = vmatpush1.msra.mxu0 0.0
      %683 = vmatprep.subr.mxu0 0.0
      %684 = vmatpush1.msra.mxu0 0.0
      %685 = vmatprep.subr.mxu0 0.0
      %686 = vmatpush1.msra.mxu0 0.0
      %687 = vmatprep.subr.mxu0 0.0
      %688 = vmatpush1.msra.mxu0 0.0
      %689 = vmatprep.subr.mxu0 0.0
      %690 = vmatpush1.msra.mxu0 0.0
      %691 = vmatprep.subr.mxu0 0.0
      %692 = vmatpush1.msra.mxu0 0.0
      %693 = vmatprep.subr.mxu0 0.0
      %694 = vmatpush1.msra.mxu0 0.0
      %695 = vmatprep.subr.mxu0 0.0
      %696 = vmatpush1.msra.mxu0 0.0
      %697 = vmatprep.subr.mxu0 0.0
      %698 = vmatpush1.msra.mxu0 0.0
      %699 = vmatprep.subr.mxu0 0.0
      %700 = vmatpush1.msra.mxu0 0.0
      %701 = vmatprep.subr.mxu0 0.0
      %702 = vmatpush1.msra.mxu0 0.0
      %703 = vmatprep.subr.mxu0 0.0
      %704 = vmatpush1.msra.mxu0 0.0
      %705 = vmatprep.subr.mxu0 0.0
      %706 = vmatpush1.msra.mxu0 0.0
      %707 = vmatprep.subr.mxu0 0.0
      %708 = vmatpush1.msra.mxu0 0.0
      %709 = vmatprep.subr.mxu0 0.0
      %710 = vmatpush1.msra.mxu0 0.0
      %711 = vmatprep.subr.mxu0 0.0
      %712 = vmatpush1.msra.mxu0 0.0
      %713 = vmatprep.subr.mxu0 0.0
      %714 = vmatpush1.msra.mxu0 0.0
      %715 = vmatprep.mubr.f32.mxu0 0.0
      %716 = vmatmul.mubr.f32.gmra.mrb[0].mxu0 %v640
      %v717 = vpop.f32.mrb[0].mxu0
      %v718 = vadd.f32 0.0, %v717
      %v719 = vpop.f32.mrb[0].mxu0
      %v720 = vadd.f32 0.0, %v719
      %721 = vmatprep.mubr.f32.mxu0 0.0
      %722 = vmatmul.mubr.f32.gmra.mrb[0].mxu0 %v643
      %v723 = vpop.f32.mrb[0].mxu0
      %v724 = vadd.f32 0.0, %v723
      %v725 = vpop.f32.mrb[0].mxu0
      %v726 = vadd.f32 0.0, %v725
      %727 = vmatprep.mubr.f32.mxu0 0.0
      %728 = vmatmul.mubr.f32.gmra.mrb[0].mxu0 %v646
      %v729 = vpop.f32.mrb[0].mxu0
      %v730 = vadd.f32 0.0, %v729
      %v731 = vpop.f32.mrb[0].mxu0
      %v732 = vadd.f32 0.0, %v731
      %733 = vmatprep.mubr.f32.mxu0 0.0
      %734 = vmatmul.mubr.f32.gmra.mrb[0].mxu0 %v649
      %v735 = vpop.f32.mrb[0].mxu0
      %v736 = vadd.f32 0.0, %v735
      %v737 = vpop.f32.mrb[0].mxu0
      %v738 = vadd.f32 0.0, %v737
      %739 = vdwg.mxu0
      %740 = vmatprep.subr.mxu0 %v622
      %741 = vmatpush1.msra.mxu0 %v621
      %742 = vmatprep.subr.mxu0 %v626
      %743 = vmatpush1.msra.mxu0 %v625
      %744 = vmatprep.subr.mxu0 %v630
      %745 = vmatpush1.msra.mxu0 %v629
      %746 = vmatprep.subr.mxu0 %v634
      %747 = vmatpush1.msra.mxu0 %v633
      %748 = vmatprep.subr.mxu0 0.0
      %749 = vmatpush1.msra.mxu0 0.0
      %750 = vmatprep.subr.mxu0 0.0
      %751 = vmatpush1.msra.mxu0 0.0
      %752 = vmatprep.subr.mxu0 0.0
      %753 = vmatpush1.msra.mxu0 0.0
      %754 = vmatprep.subr.mxu0 0.0
      %755 = vmatpush1.msra.mxu0 0.0
      %756 = vmatprep.subr.mxu0 0.0
      %757 = vmatpush1.msra.mxu0 0.0
      %758 = vmatprep.subr.mxu0 0.0
      %759 = vmatpush1.msra.mxu0 0.0
      %760 = vmatprep.subr.mxu0 0.0
      %761 = vmatpush1.msra.mxu0 0.0
      %762 = vmatprep.subr.mxu0 0.0
      %763 = vmatpush1.msra.mxu0 0.0
      %764 = vmatprep.subr.mxu0 0.0
      %765 = vmatpush1.msra.mxu0 0.0
      %766 = vmatprep.subr.mxu0 0.0
      %767 = vmatpush1.msra.mxu0 0.0
      %768 = vmatprep.subr.mxu0 0.0
      %769 = vmatpush1.msra.mxu0 0.0
      %770 = vmatprep.subr.mxu0 0.0
      %771 = vmatpush1.msra.mxu0 0.0
      %772 = vmatprep.subr.mxu0 0.0
      %773 = vmatpush1.msra.mxu0 0.0
      %774 = vmatprep.subr.mxu0 0.0
      %775 = vmatpush1.msra.mxu0 0.0
      %776 = vmatprep.subr.mxu0 0.0
      %777 = vmatpush1.msra.mxu0 0.0
      %778 = vmatprep.subr.mxu0 0.0
      %779 = vmatpush1.msra.mxu0 0.0
      %780 = vmatprep.subr.mxu0 0.0
      %781 = vmatpush1.msra.mxu0 0.0
      %782 = vmatprep.subr.mxu0 0.0
      %783 = vmatpush1.msra.mxu0 0.0
      %784 = vmatprep.subr.mxu0 0.0
      %785 = vmatpush1.msra.mxu0 0.0
      %786 = vmatprep.subr.mxu0 0.0
      %787 = vmatpush1.msra.mxu0 0.0
      %788 = vmatprep.subr.mxu0 0.0
      %789 = vmatpush1.msra.mxu0 0.0
      %790 = vmatprep.subr.mxu0 0.0
      %791 = vmatpush1.msra.mxu0 0.0
      %792 = vmatprep.subr.mxu0 0.0
      %793 = vmatpush1.msra.mxu0 0.0
      %794 = vmatprep.subr.mxu0 0.0
      %795 = vmatpush1.msra.mxu0 0.0
      %796 = vmatprep.subr.mxu0 0.0
      %797 = vmatpush1.msra.mxu0 0.0
      %798 = vmatprep.subr.mxu0 0.0
      %799 = vmatpush1.msra.mxu0 0.0
      %800 = vmatprep.subr.mxu0 0.0
      %801 = vmatpush1.msra.mxu0 0.0
      %802 = vmatprep.subr.mxu0 0.0
      %803 = vmatpush1.msra.mxu0 0.0
      %804 = vmatprep.mubr.f32.mxu0 0.0
      %805 = vmatmul.mubr.f32.gmra.mrb[0].mxu0 %v640
      %v806 = vpop.f32.mrb[0].mxu0
      %v807 = vadd.f32 0.0, %v806
      %v808 = vpop.f32.mrb[0].mxu0
      %v809 = vadd.f32 0.0, %v808
      %810 = vmatprep.mubr.f32.mxu0 0.0
      %811 = vmatmul.mubr.f32.gmra.mrb[0].mxu0 %v643
      %v812 = vpop.f32.mrb[0].mxu0
      %v813 = vadd.f32 0.0, %v812
      %v814 = vpop.f32.mrb[0].mxu0
      %v815 = vadd.f32 0.0, %v814
      %816 = vmatprep.mubr.f32.mxu0 0.0
      %817 = vmatmul.mubr.f32.gmra.mrb[0].mxu0 %v646
      %v818 = vpop.f32.mrb[0].mxu0
      %v819 = vadd.f32 0.0, %v818
      %v820 = vpop.f32.mrb[0].mxu0
      %v821 = vadd.f32 0.0, %v820
      %822 = vmatprep.mubr.f32.mxu0 0.0
      %823 = vmatmul.mubr.f32.gmra.mrb[0].mxu0 %v649
      %v824 = vpop.f32.mrb[0].mxu0
      %v825 = vadd.f32 0.0, %v824
      %v826 = vpop.f32.mrb[0].mxu0
      %v827 = vadd.f32 0.0, %v826
      %828 = vdwg.mxu0
      %v829 = vmax.f32 %v718, 0.0
      %v830 = vmax.f32 %v720, 0.0
      %v831 = vmax.f32 %v807, 0.0
      %v832 = vmax.f32 %v809, 0.0
      %v833 = vmax.f32 %v724, 0.0
      %v834 = vmax.f32 %v726, 0.0
      %v835 = vmax.f32 %v813, 0.0
      %v836 = vmax.f32 %v815, 0.0
      %v837 = vmax.f32 %v730, 0.0
      %v838 = vmax.f32 %v732, 0.0
      %v839 = vmax.f32 %v819, 0.0
      %v840 = vmax.f32 %v821, 0.0
      %v841 = vmax.f32 %v736, 0.0
      %v842 = vmax.f32 %v738, 0.0
      %v843 = vmax.f32 %v825, 0.0
      %v844 = vmax.f32 %v827, 0.0
      %v845 = vmax.f32 %v829, %v830
      %v846 = vmax.f32 %v833, %v834
      %v847 = vmax.f32 %v837, %v838
      %v848 = vmax.f32 %v841, %v842
      %v849 = vmax.f32 %v845, %v831
      %v850 = vmax.f32 %v846, %v835
      %v851 = vmax.f32 %v847, %v839
      %v852 = vmax.f32 %v848, %v843
      %v853 = vmax.f32 %v849, %v832
      %v854 = vmax.f32 %v850, %v836
      %v855 = vmax.f32 %v851, %v840
      %v856 = vmax.f32 %v852, %v844
      %857 = vst [vmem:[%s197] sm:$0xff] %v853
      %858 = vst [vmem:[%s197 + $0x8] sm:$0xff] %v854
      %859 = vst [vmem:[%s197 + $0x10] sm:$0xff] %v855
      %860 = vst [vmem:[%s197 + $0x18] sm:$0xff] %v856
      %p861 = scmp.lt.s32.totalorder %s15, 1
      %s862 = scalar_select %p861, %s15, 1
      %s863 = smul.addr %s862, 4
      %s864 = smul.addr %s863, 8
      %s865 = scalar_lea.vmem %s4, %s864
      // Predicated region
      $region37: #{generator_forward.31} parent=35 // pred_check
        %p866 = pneg %p122
      $region38: #{generator_forward.31} parent=35 // pred_check_branch
        %868 = sbr.rel (%p866) target = $region40
      $region39: #{generator_forward.31} parent=35 // pred_region
        _
      $region40: #{generator_forward.31} parent=35 // pred_fallthru
        _
    $region36: #{generator_forward.31} parent=5 // pred_fallthru
      _
    %p869 = scmp.le.s32.totalorder 2, %s10
    // Predicated region
    $region41: #{generator_forward.31} parent=5 // pred_check
      %p870 = pneg %p869
    $region42: #{generator_forward.31} parent=5 // pred_check_branch
      %872 = sbr.rel (%p870) target = $region44
    $region43: #{generator_forward.31} parent=5 // pred_region
      %s873 = ssub.s32 %s10, 2
      // Predicated region
      $region45: #{generator_forward.31} parent=43 // pred_check
        %p874 = pneg %p128
      $region46: #{generator_forward.31} parent=43 // pred_check_branch
        %876 = sbr.rel (%p874) target = $region48
      $region47: #{generator_forward.31} parent=43 // pred_region
        %p877 = scmp.lt.s32.totalorder %s16, 1
        %s878 = scalar_select %p877, %s16, 1
        %s879 = smul.addr %s878, 4
        %s880 = smul.addr %s879, 8
        %s881 = scalar_lea.vmem %s4, %s880
      $region48: #{generator_forward.31} parent=43 // pred_fallthru
        _
    $region44: #{generator_forward.31} parent=5 // pred_fallthru
      _
  $region6: #{generator_forward.31} parent=0 // loop_footer
    %s14 = sadd.s32 1, %s10
  $region7: #{generator_forward.31} parent=0 // loop_footer_branch
    %9 = sbr.rel target = $region3
  $region8: #{generator_forward.31} parent=0 // loop_exit
    _

// kernel: generator_forward.32
$region0: #{generator_forward.32}
  #allocation0 [shape = 'u32[]', space=smem, size = 0x4, offset = 0x4, fixed_abs, tag = 'smem constant byte address 0x4 - core index']
  #allocation1 [shape = 'u32[144,128]{1,0:T(1,128)}', space=vmem, size = 0x12000, scoped, tag = 'internal scratch']
  %s0 = inlined_call_operand.vmem [shape: f32[2,32,128], index: 0, kind: input, shape index: {}, may-alias: {0,4}]
  %s1 = inlined_call_operand.vmem [shape: f32[2,128,128], index: 1, kind: input, shape index: {}]
  %s2 = inlined_call_operand.vmem [shape: f32[32,32], index: 2, kind: input, shape index: {}]
  %s3 = inlined_call_operand.vmem [shape: f32[32,32], index: 3, kind: input, shape index: {}]
  %s4 = inlined_call_operand.vmem [shape: f32[2,32,128], index: 4, kind: input, shape index: {}, may-alias: {0,4}]
  %s5 = inlined_call_operand.vmem [shape: f32[2,32,128], index: 5, kind: output, shape index: {}]
  %s6 = sld [smem:[#allocation0]]
  $region53: #{generator_forward.32} parent=0
    _
  %s8 = ssub.s32 1, %s6
  %s9 = scalar_select 0, %s8, %s6
  loop: start=0, step=1, limit=4
  $region2: #{generator_forward.32} parent=0 // loop_pre_header
    _
  $region3: #{generator_forward.32} parent=0 // loop_header
    %s11 = sphi 0, %s15
    %p12 = scmp.ge.s32.totalorder %s11, 4
    %s21 = sphi 0, %s23
    %s24 = sphi 0, %s21
    %s25 = sphi 0, %s24
    %s41 = sphi 0, %s25
    %s47 = sphi 0, %s49
    %s50 = sphi 0, %s47
    %s51 = sphi 0, %s50
    %s67 = sphi 0, %s51
    %s71 = sphi 0, %s71
    %s73 = sphi 0, %s71
    %s74 = sphi 0, %s73
    %s88 = sphi 0, %s74
    %s92 = sphi 0, %s92
    %s94 = sphi 0, %s92
    %s95 = sphi 0, %s94
    %s109 = sphi 0, %s95
    %s115 = sphi 0, %s117
    %s118 = sphi 0, %s115
    %s119 = sphi 0, %s118
    %s135 = sphi 0, %s119
    %s141 = sphi 0, %s143
    %s144 = sphi 0, %s141
    %s145 = sphi 0, %s144
    %s161 = sphi 0, %s145
  $region4: #{generator_forward.32} parent=0 // loop_header_branch
    %14 = sbr.rel (%p12) target = $region8
  $region5: #{generator_forward.32} parent=0 // loop_body
    %s16 = ssub.s32 %s11, 1
    %s17 = ssub.s32 %s11, 2
    %s18 = sadd.s32 %s11, 1
    %s19 = ssub.s32 %s11, %s18
    %p20 = scmp.eq.s32.totalorder %s19, 0
    %s22 = sadd.s32 %s21, 1
    %s23 = scalar_select %p20, %s21, %s22
    %p26 = pneg %p20
    %p27 = scmp.eq.s32.totalorder %s11, 1
    %p28 = por %p26, %p27
    %p29 = scmp.ne.s32.totalorder %s21, %s24
    %p30 = scmp.eq.s32.totalorder %s11, 0
    %p31 = por %p29, %p30
    %p32 = scmp.ne.s32.totalorder %s21, %s24
    %p33 = scmp.eq.s32.totalorder %s16, 1
    %p34 = por %p32, %p33
    %p35 = scmp.ne.s32.totalorder %s24, %s25
    %p36 = scmp.eq.s32.totalorder %s16, 0
    %p37 = por %p35, %p36
    %p38 = scmp.ne.s32.totalorder %s24, %s25
    %p39 = scmp.eq.s32.totalorder %s17, 1
    %p40 = por %p38, %p39
    %p42 = scmp.ne.s32.totalorder %s25, %s41
    %p43 = scmp.eq.s32.totalorder %s17, 0
    %p44 = por %p42, %p43
    %s45 = ssub.s32 %s11, %s18
    %p46 = scmp.eq.s32.totalorder %s45, 0
    %s48 = sadd.s32 %s47, 1
    %s49 = scalar_select %p46, %s47, %s48
    %p52 = pneg %p46
    %p53 = scmp.eq.s32.totalorder %s11, 1
    %p54 = por %p52, %p53
    %p55 = scmp.ne.s32.totalorder %s47, %s50
    %p56 = scmp.eq.s32.totalorder %s11, 0
    %p57 = por %p55, %p56
    %p58 = scmp.ne.s32.totalorder %s47, %s50
    %p59 = scmp.eq.s32.totalorder %s16, 1
    %p60 = por %p58, %p59
    %p61 = scmp.ne.s32.totalorder %s50, %s51
    %p62 = scmp.eq.s32.totalorder %s16, 0
    %p63 = por %p61, %p62
    %p64 = scmp.ne.s32.totalorder %s50, %s51
    %p65 = scmp.eq.s32.totalorder %s17, 1
    %p66 = por %p64, %p65
    %p68 = scmp.ne.s32.totalorder %s51, %s67
    %p69 = scmp.eq.s32.totalorder %s17, 0
    %p70 = por %p68, %p69
    %s72 = sadd.s32 %s71, 1
    %p75 = scmp.eq.s32.totalorder %s11, 1
    %p76 = scmp.ne.s32.totalorder %s71, %s73
    %p77 = scmp.eq.s32.totalorder %s11, 0
    %p78 = por %p76, %p77
    %p79 = scmp.ne.s32.totalorder %s71, %s73
    %p80 = scmp.eq.s32.totalorder %s16, 1
    %p81 = por %p79, %p80
    %p82 = scmp.ne.s32.totalorder %s73, %s74
    %p83 = scmp.eq.s32.totalorder %s16, 0
    %p84 = por %p82, %p83
    %p85 = scmp.ne.s32.totalorder %s73, %s74
    %p86 = scmp.eq.s32.totalorder %s17, 1
    %p87 = por %p85, %p86
    %p89 = scmp.ne.s32.totalorder %s74, %s88
    %p90 = scmp.eq.s32.totalorder %s17, 0
    %p91 = por %p89, %p90
    %s93 = sadd.s32 %s92, 1
    %p96 = scmp.eq.s32.totalorder %s11, 1
    %p97 = scmp.ne.s32.totalorder %s92, %s94
    %p98 = scmp.eq.s32.totalorder %s11, 0
    %p99 = por %p97, %p98
    %p100 = scmp.ne.s32.totalorder %s92, %s94
    %p101 = scmp.eq.s32.totalorder %s16, 1
    %p102 = por %p100, %p101
    %p103 = scmp.ne.s32.totalorder %s94, %s95
    %p104 = scmp.eq.s32.totalorder %s16, 0
    %p105 = por %p103, %p104
    %p106 = scmp.ne.s32.totalorder %s94, %s95
    %p107 = scmp.eq.s32.totalorder %s17, 1
    %p108 = por %p106, %p107
    %p110 = scmp.ne.s32.totalorder %s95, %s109
    %p111 = scmp.eq.s32.totalorder %s17, 0
    %p112 = por %p110, %p111
    %s113 = ssub.s32 %s11, %s18
    %p114 = scmp.eq.s32.totalorder %s113, 0
    %s116 = sadd.s32 %s115, 1
    %s117 = scalar_select %p114, %s115, %s116
    %p120 = pneg %p114
    %p121 = scmp.eq.s32.totalorder %s11, 1
    %p122 = por %p120, %p121
    %p123 = scmp.ne.s32.totalorder %s115, %s118
    %p124 = scmp.eq.s32.totalorder %s11, 0
    %p125 = por %p123, %p124
    %p126 = scmp.ne.s32.totalorder %s115, %s118
    %p127 = scmp.eq.s32.totalorder %s16, 1
    %p128 = por %p126, %p127
    %p129 = scmp.ne.s32.totalorder %s118, %s119
    %p130 = scmp.eq.s32.totalorder %s16, 0
    %p131 = por %p129, %p130
    %p132 = scmp.ne.s32.totalorder %s118, %s119
    %p133 = scmp.eq.s32.totalorder %s17, 1
    %p134 = por %p132, %p133
    %p136 = scmp.ne.s32.totalorder %s119, %s135
    %p137 = scmp.eq.s32.totalorder %s17, 0
    %p138 = por %p136, %p137
    %s139 = ssub.s32 %s11, %s18
    %p140 = scmp.eq.s32.totalorder %s139, 0
    %s142 = sadd.s32 %s141, 1
    %s143 = scalar_select %p140, %s141, %s142
    %p146 = pneg %p140
    %p147 = scmp.eq.s32.totalorder %s11, 1
    %p148 = por %p146, %p147
    %p149 = scmp.ne.s32.totalorder %s141, %s144
    %p150 = scmp.eq.s32.totalorder %s11, 0
    %p151 = por %p149, %p150
    %p152 = scmp.ne.s32.totalorder %s141, %s144
    %p153 = scmp.eq.s32.totalorder %s16, 1
    %p154 = por %p152, %p153
    %p155 = scmp.ne.s32.totalorder %s144, %s145
    %p156 = scmp.eq.s32.totalorder %s16, 0
    %p157 = por %p155, %p156
    %p158 = scmp.ne.s32.totalorder %s144, %s145
    %p159 = scmp.eq.s32.totalorder %s17, 1
    %p160 = por %p158, %p159
    %p162 = scmp.ne.s32.totalorder %s145, %s161
    %p163 = scmp.eq.s32.totalorder %s17, 0
    %p164 = por %p162, %p163
    %p165 = scmp.le.s32.totalorder 1, %s11
    %p166 = scmp.lt.s32.totalorder %s11, 3
    %p167 = pnand %p165, %p166
    %p168 = pneg %p167
    // Predicated region
    $region9: #{generator_forward.32} parent=5 // pred_check
      _
    $region10: #{generator_forward.32} parent=5 // pred_check_branch
      %170 = sbr.rel (%p167) target = $region12
    $region11: #{generator_forward.32} parent=5 // pred_region
      %s171 = ssub.s32 %s11, 1
      // Predicated region
      $region13: #{generator_forward.32} parent=11 // pred_check
        %p172 = pneg %p84
      $region14: #{generator_forward.32} parent=11 // pred_check_branch
        %174 = sbr.rel (%p172) target = $region16
      $region15: #{generator_forward.32} parent=11 // pred_region
        _
      $region16: #{generator_forward.32} parent=11 // pred_fallthru
        _
      // Predicated region
      $region17: #{generator_forward.32} parent=11 // pred_check
        %p175 = pneg %p105
      $region18: #{generator_forward.32} parent=11 // pred_check_branch
        %177 = sbr.rel (%p175) target = $region20
      $region19: #{generator_forward.32} parent=11 // pred_region
        _
      $region20: #{generator_forward.32} parent=11 // pred_fallthru
        _
    $region12: #{generator_forward.32} parent=5 // pred_fallthru
      _
    %p178 = scmp.lt.s32.totalorder %s11, 2
    // Predicated region
    $region21: #{generator_forward.32} parent=5 // pred_check
      %p179 = pneg %p178
    $region22: #{generator_forward.32} parent=5 // pred_check_branch
      %181 = sbr.rel (%p179) target = $region24
    $region23: #{generator_forward.32} parent=5 // pred_region
      // Predicated region
      $region25: #{generator_forward.32} parent=23 // pred_check
        %p182 = pneg %p31
      $region26: #{generator_forward.32} parent=23 // pred_check_branch
        %184 = sbr.rel (%p182) target = $region28
      $region27: #{generator_forward.32} parent=23 // pred_region
        %p185 = scmp.lt.s32.totalorder %s11, 1
        %s186 = scalar_select %p185, %s11, 1
        %s187 = smul.addr %s186, 4
        %s188 = smul.addr %s187, 8
        %s189 = scalar_lea.vmem %s0, %s188
      $region28: #{generator_forward.32} parent=23 // pred_fallthru
        _
      // Predicated region
      $region29: #{generator_forward.32} parent=23 // pred_check
        %p190 = pneg %p57
      $region30: #{generator_forward.32} parent=23 // pred_check_branch
        %192 = sbr.rel (%p190) target = $region32
      $region31: #{generator_forward.32} parent=23 // pred_region
        %p193 = scmp.lt.s32.totalorder %s11, 1
        %s194 = scalar_select %p193, %s11, 1
        %s195 = smul.addr %s194, 16
        %s196 = smul.addr %s195, 8
        %s197 = scalar_lea.vmem %s1, %s196
      $region32: #{generator_forward.32} parent=23 // pred_fallthru
        _
      // Predicated region
      $region33: #{generator_forward.32} parent=23 // pred_check
        %p198 = pneg %p125
      $region34: #{generator_forward.32} parent=23 // pred_check_branch
        %200 = sbr.rel (%p198) target = $region36
      $region35: #{generator_forward.32} parent=23 // pred_region
        %p201 = scmp.lt.s32.totalorder %s11, 1
        %s202 = scalar_select %p201, %s11, 1
        %s203 = smul.addr %s202, 4
        %s204 = smul.addr %s203, 8
        %s205 = scalar_lea.vmem %s4, %s204
      $region36: #{generator_forward.32} parent=23 // pred_fallthru
        _
    $region24: #{generator_forward.32} parent=5 // pred_fallthru
      _
    %p206 = scmp.le.s32.totalorder 1, %s11
    %p207 = scmp.lt.s32.totalorder %s11, 3
    %p208 = pnand %p206, %p207
    %p209 = pneg %p208
    // Predicated region
    $region37: #{generator_forward.32} parent=5 // pred_check
      _
    $region38: #{generator_forward.32} parent=5 // pred_check_branch
      %211 = sbr.rel (%p208) target = $region40
    $region39: #{generator_forward.32} parent=5 // pred_region
      %s212 = ssub.s32 %s11, 1
      %p213 = scmp.lt.s32.totalorder %s16, 1
      %s214 = scalar_select %p213, %s16, 1
      %s215 = smul.addr %s214, 4
      %s216 = smul.addr %s215, 8
      %s217 = scalar_lea.vmem %s0, %s216
      %p218 = pneg %p37
      %p219 = pneg %p34
      %p220 = scmp.lt.s32.totalorder %s16, 1
      %s221 = scalar_select %p220, %s16, 1
      %s222 = smul.addr %s221, 16
      %s223 = smul.addr %s222, 8
      %s224 = scalar_lea.vmem %s1, %s223
      %p225 = pneg %p63
      %p226 = pneg %p60
      %p227 = pneg %p84
      %p228 = pneg %p81
      %p229 = pneg %p105
      %p230 = pneg %p102
      %p231 = scmp.lt.s32.totalorder %s16, 1
      %s232 = scalar_select %p231, %s16, 1
      %s233 = smul.addr %s232, 4
      %s234 = smul.addr %s233, 8
      %s235 = scalar_lea.vmem %s4, %s234
      %p236 = pneg %p131
      %p237 = pneg %p128
      %p238 = pneg %p157
      %p239 = pneg %p154
      %p240 = scmp.lt.s32.totalorder %s16, 1
      %s241 = scalar_select %p240, %s16, 1
      %s242 = smul.addr %s241, 4
      %s243 = smul.addr %s242, 8
      %s244 = scalar_lea.vmem %s5, %s243
      %p245 = scmp.lt.s32.totalorder %s16, 1
      %s246 = scalar_select %p245, %s16, 1
      %s247 = smul.addr %s246, 4
      %s248 = smul.addr %s247, 8
      %s249 = scalar_lea.vmem %s0, %s248
      %p250 = scmp.lt.s32.totalorder %s16, 1
      %s251 = scalar_select %p250, %s16, 1
      %s252 = smul.addr %s251, 16
      %s253 = smul.addr %s252, 8
      %s254 = scalar_lea.vmem %s1, %s253
      %p255 = scmp.lt.s32.totalorder %s16, 1
      %s256 = scalar_select %p255, %s16, 1
      %s257 = smul.addr %s256, 4
      %s258 = smul.addr %s257, 8
      %s259 = scalar_lea.vmem %s4, %s258
      %p260 = scmp.lt.s32.totalorder %s16, 1
      %s261 = scalar_select %p260, %s16, 1
      %s262 = smul.addr %s261, 4
      %s263 = smul.addr %s262, 8
      %s264 = scalar_lea.vmem %s5, %s263
      %v265 = vld [vmem:[%s249] sm:$0xff]
      %v266 = vld [vmem:[%s249 + $0x8] sm:$0xff]
      %v267 = vld [vmem:[%s249 + $0x10] sm:$0xff]
      %v268 = vld [vmem:[%s249 + $0x18] sm:$0xff]
      %v269 = vmax.f32 %v265, 0.0
      %v270 = vmax.f32 %v266, 0.0
      %v271 = vmax.f32 %v267, 0.0
      %v272 = vmax.f32 %v268, 0.0
      %v273 = vld [vmem:[%s254] sm:$0xff]
      %v274 = vld [vmem:[%s254 + $0x8] sm:$0xff]
      %v275 = vld [vmem:[%s254 + $0x10] sm:$0xff]
      %v276 = vld [vmem:[%s254 + $0x18] sm:$0xff]
      %v277 = vld [vmem:[%s254 + $0x20] sm:$0xff]
      %v278 = vld [vmem:[%s254 + $0x28] sm:$0xff]
      %v279 = vld [vmem:[%s254 + $0x30] sm:$0xff]
      %v280 = vld [vmem:[%s254 + $0x38] sm:$0xff]
      %v281 = vld [vmem:[%s254 + $0x40] sm:$0xff]
      %v282 = vld [vmem:[%s254 + $0x48] sm:$0xff]
      %v283 = vld [vmem:[%s254 + $0x50] sm:$0xff]
      %v284 = vld [vmem:[%s254 + $0x58] sm:$0xff]
      %v285 = vld [vmem:[%s254 + $0x60] sm:$0xff]
      %v286 = vld [vmem:[%s254 + $0x68] sm:$0xff]
      %v287 = vld [vmem:[%s254 + $0x70] sm:$0xff]
      %v288 = vld [vmem:[%s254 + $0x78] sm:$0xff]
      %289 = vmatprep.subr.mxu0 0.0
      %290 = vmatpush1.msra.mxu0 %v273
      %291 = vmatprep.subr.mxu0 0.0
      %292 = vmatpush1.msra.mxu0 %v274
      %293 = vmatprep.subr.mxu0 0.0
      %294 = vmatpush1.msra.mxu0 %v275
      %295 = vmatprep.subr.mxu0 0.0
      %296 = vmatpush1.msra.mxu0 %v276
      %297 = vmatprep.subr.mxu0 0.0
      %298 = vmatpush1.msra.mxu0 %v277
      %299 = vmatprep.subr.mxu0 0.0
      %300 = vmatpush1.msra.mxu0 %v278
      %301 = vmatprep.subr.mxu0 0.0
      %302 = vmatpush1.msra.mxu0 %v279
      %303 = vmatprep.subr.mxu0 0.0
      %304 = vmatpush1.msra.mxu0 %v280
      %305 = vmatprep.subr.mxu0 0.0
      %306 = vmatpush1.msra.mxu0 %v281
      %307 = vmatprep.subr.mxu0 0.0
      %308 = vmatpush1.msra.mxu0 %v282
      %309 = vmatprep.subr.mxu0 0.0
      %310 = vmatpush1.msra.mxu0 %v283
      %311 = vmatprep.subr.mxu0 0.0
      %312 = vmatpush1.msra.mxu0 %v284
      %313 = vmatprep.subr.mxu0 0.0
      %314 = vmatpush1.msra.mxu0 %v285
      %315 = vmatprep.subr.mxu0 0.0
      %316 = vmatpush1.msra.mxu0 %v286
      %317 = vmatprep.subr.mxu0 0.0
      %318 = vmatpush1.msra.mxu0 %v287
      %319 = vmatprep.subr.mxu0 0.0
      %320 = vmatpush1.msra.mxu0 %v288
      %321 = vmatprep.subr.mxu0 0.0
      %322 = vmatpush1.msra.mxu0 0.0
      %323 = vmatprep.subr.mxu0 0.0
      %324 = vmatpush1.msra.mxu0 0.0
      %325 = vmatprep.subr.mxu0 0.0
      %326 = vmatpush1.msra.mxu0 0.0
      %327 = vmatprep.subr.mxu0 0.0
      %328 = vmatpush1.msra.mxu0 0.0
      %329 = vmatprep.subr.mxu0 0.0
      %330 = vmatpush1.msra.mxu0 0.0
      %331 = vmatprep.subr.mxu0 0.0
      %332 = vmatpush1.msra.mxu0 0.0
      %333 = vmatprep.subr.mxu0 0.0
      %334 = vmatpush1.msra.mxu0 0.0
      %335 = vmatprep.subr.mxu0 0.0
      %336 = vmatpush1.msra.mxu0 0.0
      %337 = vmatprep.subr.mxu0 0.0
      %338 = vmatpush1.msra.mxu0 0.0
      %339 = vmatprep.subr.mxu0 0.0
      %340 = vmatpush1.msra.mxu0 0.0
      %341 = vmatprep.subr.mxu0 0.0
      %342 = vmatpush1.msra.mxu0 0.0
      %343 = vmatprep.subr.mxu0 0.0
      %344 = vmatpush1.msra.mxu0 0.0
      %345 = vmatprep.subr.mxu0 0.0
      %346 = vmatpush1.msra.mxu0 0.0
      %347 = vmatprep.subr.mxu0 0.0
      %348 = vmatpush1.msra.mxu0 0.0
      %349 = vmatprep.subr.mxu0 0.0
      %350 = vmatpush1.msra.mxu0 0.0
      %351 = vmatprep.subr.mxu0 0.0
      %352 = vmatpush1.msra.mxu0 0.0
      %353 = vmatprep.mubr.f32.mxu0 0.0
      %354 = vmatmul.mubr.f32.gmra.mrb[0].mxu0 %v269
      %v355 = vpop.f32.mrb[0].mxu0
      %v356 = vadd.f32 0.0, %v355
      %v357 = vpop.f32.mrb[0].mxu0
      %358 = vmatprep.mubr.f32.mxu0 0.0
      %359 = vmatmul.mubr.f32.gmra.mrb[0].mxu0 %v270
      %v360 = vpop.f32.mrb[0].mxu0
      %v361 = vadd.f32 0.0, %v360
      %v362 = vpop.f32.mrb[0].mxu0
      %363 = vmatprep.mubr.f32.mxu0 0.0
      %364 = vmatmul.mubr.f32.gmra.mrb[0].mxu0 %v271
      %v365 = vpop.f32.mrb[0].mxu0
      %v366 = vadd.f32 0.0, %v365
      %v367 = vpop.f32.mrb[0].mxu0
      %368 = vmatprep.mubr.f32.mxu0 0.0
      %369 = vmatmul.mubr.f32.gmra.mrb[0].mxu0 %v272
      %v370 = vpop.f32.mrb[0].mxu0
      %v371 = vadd.f32 0.0, %v370
      %v372 = vpop.f32.mrb[0].mxu0
      %373 = vdwg.mxu0
      %v374 = vld [vmem:[%s2] sm:$0xff]
      %v375 = vld [vmem:[%s2 + $0x8] sm:$0xff]
      %v376 = vld [vmem:[%s2 + $0x10] sm:$0xff]
      %v377 = vld [vmem:[%s2 + $0x18] sm:$0xff]
      %v378 = vld [vmem:[%s3] sm:$0xff]
      %v379 = vld [vmem:[%s3 + $0x8] sm:$0xff]
      %v380 = vld [vmem:[%s3 + $0x10] sm:$0xff]
      %v381 = vld [vmem:[%s3 + $0x18] sm:$0xff]
      %vm382 = vcmask 261120
      %v384 = vsel %vm382, %v378, 0
      %v387 = vsel %vm382, %v379, 0
      %v390 = vsel %vm382, %v380, 0
      %v393 = vsel %vm382, %v381, 0
      %395 = vmatprep.subr.mxu0 0.0
      %396 = vmatpush1.msra.mxu0 %v356
      %397 = vmatprep.subr.mxu0 0.0
      %398 = vmatpush1.msra.mxu0 %v361
      %399 = vmatprep.subr.mxu0 0.0
      %400 = vmatpush1.msra.mxu0 %v366
      %401 = vmatprep.subr.mxu0 0.0
      %402 = vmatpush1.msra.mxu0 %v371
      %403 = vmatprep.subr.mxu0 0.0
      %404 = vmatpush1.msra.mxu0 0.0
      %405 = vmatprep.subr.mxu0 0.0
      %406 = vmatpush1.msra.mxu0 0.0
      %407 = vmatprep.subr.mxu0 0.0
      %408 = vmatpush1.msra.mxu0 0.0
      %409 = vmatprep.subr.mxu0 0.0
      %410 = vmatpush1.msra.mxu0 0.0
      %411 = vmatprep.subr.mxu0 0.0
      %412 = vmatpush1.msra.mxu0 0.0
      %413 = vmatprep.subr.mxu0 0.0
      %414 = vmatpush1.msra.mxu0 0.0
      %415 = vmatprep.subr.mxu0 0.0
      %416 = vmatpush1.msra.mxu0 0.0
      %417 = vmatprep.subr.mxu0 0.0
      %418 = vmatpush1.msra.mxu0 0.0
      %419 = vmatprep.subr.mxu0 0.0
      %420 = vmatpush1.msra.mxu0 0.0
      %421 = vmatprep.subr.mxu0 0.0
      %422 = vmatpush1.msra.mxu0 0.0
      %423 = vmatprep.subr.mxu0 0.0
      %424 = vmatpush1.msra.mxu0 0.0
      %425 = vmatprep.subr.mxu0 0.0
      %426 = vmatpush1.msra.mxu0 0.0
      %427 = vmatprep.subr.mxu0 0.0
      %428 = vmatpush1.msra.mxu0 0.0
      %429 = vmatprep.subr.mxu0 0.0
      %430 = vmatpush1.msra.mxu0 0.0
      %431 = vmatprep.subr.mxu0 0.0
      %432 = vmatpush1.msra.mxu0 0.0
      %433 = vmatprep.subr.mxu0 0.0
      %434 = vmatpush1.msra.mxu0 0.0
      %435 = vmatprep.subr.mxu0 0.0
      %436 = vmatpush1.msra.mxu0 0.0
      %437 = vmatprep.subr.mxu0 0.0
      %438 = vmatpush1.msra.mxu0 0.0
      %439 = vmatprep.subr.mxu0 0.0
      %440 = vmatpush1.msra.mxu0 0.0
      %441 = vmatprep.subr.mxu0 0.0
      %442 = vmatpush1.msra.mxu0 0.0
      %443 = vmatprep.subr.mxu0 0.0
      %444 = vmatpush1.msra.mxu0 0.0
      %445 = vmatprep.subr.mxu0 0.0
      %446 = vmatpush1.msra.mxu0 0.0
      %447 = vmatprep.subr.mxu0 0.0
      %448 = vmatpush1.msra.mxu0 0.0
      %449 = vmatprep.subr.mxu0 0.0
      %450 = vmatpush1.msra.mxu0 0.0
      %451 = vmatprep.subr.mxu0 0.0
      %452 = vmatpush1.msra.mxu0 0.0
      %453 = vmatprep.subr.mxu0 0.0
      %454 = vmatpush1.msra.mxu0 0.0
      %455 = vmatprep.subr.mxu0 0.0
      %456 = vmatpush1.msra.mxu0 0.0
      %457 = vmatprep.subr.mxu0 0.0
      %458 = vmatpush1.msra.mxu0 0.0
      %459 = vmatprep.mubr.f32.mxu0 0.0
      %460 = vmatmul.mubr.f32.gmra.mrb[0].mxu0 %v384
      %v461 = vpop.f32.mrb[0].mxu0
      %v462 = vadd.f32 0.0, %v461
      %v463 = vpop.f32.mrb[0].mxu0
      %464 = vmatprep.mubr.f32.mxu0 0.0
      %465 = vmatmul.mubr.f32.gmra.mrb[0].mxu0 %v387
      %v466 = vpop.f32.mrb[0].mxu0
      %v467 = vadd.f32 0.0, %v466
      %v468 = vpop.f32.mrb[0].mxu0
      %469 = vmatprep.mubr.f32.mxu0 0.0
      %470 = vmatmul.mubr.f32.gmra.mrb[0].mxu0 %v390
      %v471 = vpop.f32.mrb[0].mxu0
      %v472 = vadd.f32 0.0, %v471
      %v473 = vpop.f32.mrb[0].mxu0
      %474 = vmatprep.mubr.f32.mxu0 0.0
      %475 = vmatmul.mubr.f32.gmra.mrb[0].mxu0 %v393
      %v476 = vpop.f32.mrb[0].mxu0
      %v477 = vadd.f32 0.0, %v476
      %v478 = vpop.f32.mrb[0].mxu0
      %479 = vdwg.mxu0
      %v481 = vsel %vm382, %v374, 0
      %v484 = vsel %vm382, %v375, 0
      %v487 = vsel %vm382, %v376, 0
      %v490 = vsel %vm382, %v377, 0
      %492 = vmatprep.subr.mxu0 0.0
      %493 = vmatpush1.msra.mxu0 %v269
      %494 = vmatprep.subr.mxu0 0.0
      %495 = vmatpush1.msra.mxu0 %v270
      %496 = vmatprep.subr.mxu0 0.0
      %497 = vmatpush1.msra.mxu0 %v271
      %498 = vmatprep.subr.mxu0 0.0
      %499 = vmatpush1.msra.mxu0 %v272
      %500 = vmatprep.subr.mxu0 0.0
      %501 = vmatpush1.msra.mxu0 0.0
      %502 = vmatprep.subr.mxu0 0.0
      %503 = vmatpush1.msra.mxu0 0.0
      %504 = vmatprep.subr.mxu0 0.0
      %505 = vmatpush1.msra.mxu0 0.0
      %506 = vmatprep.subr.mxu0 0.0
      %507 = vmatpush1.msra.mxu0 0.0
      %508 = vmatprep.subr.mxu0 0.0
      %509 = vmatpush1.msra.mxu0 0.0
      %510 = vmatprep.subr.mxu0 0.0
      %511 = vmatpush1.msra.mxu0 0.0
      %512 = vmatprep.subr.mxu0 0.0
      %513 = vmatpush1.msra.mxu0 0.0
      %514 = vmatprep.subr.mxu0 0.0
      %515 = vmatpush1.msra.mxu0 0.0
      %516 = vmatprep.subr.mxu0 0.0
      %517 = vmatpush1.msra.mxu0 0.0
      %518 = vmatprep.subr.mxu0 0.0
      %519 = vmatpush1.msra.mxu0 0.0
      %520 = vmatprep.subr.mxu0 0.0
      %521 = vmatpush1.msra.mxu0 0.0
      %522 = vmatprep.subr.mxu0 0.0
      %523 = vmatpush1.msra.mxu0 0.0
      %524 = vmatprep.subr.mxu0 0.0
      %525 = vmatpush1.msra.mxu0 0.0
      %526 = vmatprep.subr.mxu0 0.0
      %527 = vmatpush1.msra.mxu0 0.0
      %528 = vmatprep.subr.mxu0 0.0
      %529 = vmatpush1.msra.mxu0 0.0
      %530 = vmatprep.subr.mxu0 0.0
      %531 = vmatpush1.msra.mxu0 0.0
      %532 = vmatprep.subr.mxu0 0.0
      %533 = vmatpush1.msra.mxu0 0.0
      %534 = vmatprep.subr.mxu0 0.0
      %535 = vmatpush1.msra.mxu0 0.0
      %536 = vmatprep.subr.mxu0 0.0
      %537 = vmatpush1.msra.mxu0 0.0
      %538 = vmatprep.subr.mxu0 0.0
      %539 = vmatpush1.msra.mxu0 0.0
      %540 = vmatprep.subr.mxu0 0.0
      %541 = vmatpush1.msra.mxu0 0.0
      %542 = vmatprep.subr.mxu0 0.0
      %543 = vmatpush1.msra.mxu0 0.0
      %544 = vmatprep.subr.mxu0 0.0
      %545 = vmatpush1.msra.mxu0 0.0
      %546 = vmatprep.subr.mxu0 0.0
      %547 = vmatpush1.msra.mxu0 0.0
      %548 = vmatprep.subr.mxu0 0.0
      %549 = vmatpush1.msra.mxu0 0.0
      %550 = vmatprep.subr.mxu0 0.0
      %551 = vmatpush1.msra.mxu0 0.0
      %552 = vmatprep.subr.mxu0 0.0
      %553 = vmatpush1.msra.mxu0 0.0
      %554 = vmatprep.subr.mxu0 0.0
      %555 = vmatpush1.msra.mxu0 0.0
      %556 = vmatprep.mubr.f32.mxu0 0.0
      %557 = vmatmul.mubr.f32.gmra.mrb[0].mxu0 %v481
      %v558 = vpop.f32.mrb[0].mxu0
      %v559 = vadd.f32 %v462, %v558
      %v560 = vpop.f32.mrb[0].mxu0
      %561 = vmatprep.mubr.f32.mxu0 0.0
      %562 = vmatmul.mubr.f32.gmra.mrb[0].mxu0 %v484
      %v563 = vpop.f32.mrb[0].mxu0
      %v564 = vadd.f32 %v467, %v563
      %v565 = vpop.f32.mrb[0].mxu0
      %566 = vmatprep.mubr.f32.mxu0 0.0
      %567 = vmatmul.mubr.f32.gmra.mrb[0].mxu0 %v487
      %v568 = vpop.f32.mrb[0].mxu0
      %v569 = vadd.f32 %v472, %v568
      %v570 = vpop.f32.mrb[0].mxu0
      %571 = vmatprep.mubr.f32.mxu0 0.0
      %572 = vmatmul.mubr.f32.gmra.mrb[0].mxu0 %v490
      %v573 = vpop.f32.mrb[0].mxu0
      %v574 = vadd.f32 %v477, %v573
      %v575 = vpop.f32.mrb[0].mxu0
      %576 = vdwg.mxu0
      %v577 = vmul.f32 %v559, 0.2
      %v578 = vmul.f32 %v564, 0.2
      %v579 = vmul.f32 %v569, 0.2
      %v580 = vmul.f32 %v574, 0.2
      %v581 = vld [vmem:[%s259] sm:$0xff]
      %v582 = vld [vmem:[%s259 + $0x8] sm:$0xff]
      %v583 = vld [vmem:[%s259 + $0x10] sm:$0xff]
      %v584 = vld [vmem:[%s259 + $0x18] sm:$0xff]
      %v585 = vadd.f32 %v577, %v581
      %v586 = vadd.f32 %v578, %v582
      %v587 = vadd.f32 %v579, %v583
      %v588 = vadd.f32 %v580, %v584
      %589 = vst [vmem:[%s264] sm:$0xff] %v585
      %590 = vst [vmem:[%s264 + $0x8] sm:$0xff] %v586
      %591 = vst [vmem:[%s264 + $0x10] sm:$0xff] %v587
      %592 = vst [vmem:[%s264 + $0x18] sm:$0xff] %v588
      %p593 = scmp.lt.s32.totalorder %s16, 1
      %s594 = scalar_select %p593, %s16, 1
      %s595 = smul.addr %s594, 4
      %s596 = smul.addr %s595, 8
      %s597 = scalar_lea.vmem %s5, %s596
      // Predicated region
      $region41: #{generator_forward.32} parent=39 // pred_check
        %p598 = pneg %p154
      $region42: #{generator_forward.32} parent=39 // pred_check_branch
        %600 = sbr.rel (%p598) target = $region44
      $region43: #{generator_forward.32} parent=39 // pred_region
        _
      $region44: #{generator_forward.32} parent=39 // pred_fallthru
        _
    $region40: #{generator_forward.32} parent=5 // pred_fallthru
      _
    %p601 = scmp.le.s32.totalorder 2, %s11
    // Predicated region
    $region45: #{generator_forward.32} parent=5 // pred_check
      %p602 = pneg %p601
    $region46: #{generator_forward.32} parent=5 // pred_check_branch
      %604 = sbr.rel (%p602) target = $region48
    $region47: #{generator_forward.32} parent=5 // pred_region
      %s605 = ssub.s32 %s11, 2
      // Predicated region
      $region49: #{generator_forward.32} parent=47 // pred_check
        %p606 = pneg %p160
      $region50: #{generator_forward.32} parent=47 // pred_check_branch
        %608 = sbr.rel (%p606) target = $region52
      $region51: #{generator_forward.32} parent=47 // pred_region
        %p609 = scmp.lt.s32.totalorder %s17, 1
        %s610 = scalar_select %p609, %s17, 1
        %s611 = smul.addr %s610, 4
        %s612 = smul.addr %s611, 8
        %s613 = scalar_lea.vmem %s5, %s612
      $region52: #{generator_forward.32} parent=47 // pred_fallthru
        _
    $region48: #{generator_forward.32} parent=5 // pred_fallthru
      _
  $region6: #{generator_forward.32} parent=0 // loop_footer
    %s15 = sadd.s32 1, %s11
  $region7: #{generator_forward.32} parent=0 // loop_footer_branch
    %10 = sbr.rel target = $region3
  $region8: #{generator_forward.32} parent=0 // loop_exit
    _

// kernel: generator_forward.45
$region0: #{generator_forward.45}
  #allocation0 [shape = 'u32[]', space=smem, size = 0x4, offset = 0x4, fixed_abs, tag = 'smem constant byte address 0x4 - core index']
  #allocation1 [shape = 'u32[144,128]{1,0:T(1,128)}', space=vmem, size = 0x12000, scoped, tag = 'internal scratch']
  %s0 = inlined_call_operand.vmem [shape: f32[2,32,128], index: 0, kind: input, shape index: {}]
  %s1 = inlined_call_operand.vmem [shape: f32[2,128,128], index: 1, kind: input, shape index: {}]
  %s2 = inlined_call_operand.vmem [shape: f32[2,32,128], index: 2, kind: output, shape index: {}]
  %s3 = sld [smem:[#allocation0]]
  $region41: #{generator_forward.45} parent=0
    _
  %s5 = ssub.s32 1, %s3
  %s6 = scalar_select 0, %s5, %s3
  loop: start=0, step=1, limit=4
  $region2: #{generator_forward.45} parent=0 // loop_pre_header
    _
  $region3: #{generator_forward.45} parent=0 // loop_header
    %s8 = sphi 0, %s12
    %p9 = scmp.ge.s32.totalorder %s8, 4
    %s18 = sphi 0, %s20
    %s21 = sphi 0, %s18
    %s22 = sphi 0, %s21
    %s38 = sphi 0, %s22
    %s44 = sphi 0, %s46
    %s47 = sphi 0, %s44
    %s48 = sphi 0, %s47
    %s64 = sphi 0, %s48
    %s70 = sphi 0, %s72
    %s73 = sphi 0, %s70
    %s74 = sphi 0, %s73
    %s90 = sphi 0, %s74
  $region4: #{generator_forward.45} parent=0 // loop_header_branch
    %11 = sbr.rel (%p9) target = $region8
  $region5: #{generator_forward.45} parent=0 // loop_body
    %s13 = ssub.s32 %s8, 1
    %s14 = ssub.s32 %s8, 2
    %s15 = sadd.s32 %s8, 1
    %s16 = ssub.s32 %s8, %s15
    %p17 = scmp.eq.s32.totalorder %s16, 0
    %s19 = sadd.s32 %s18, 1
    %s20 = scalar_select %p17, %s18, %s19
    %p23 = pneg %p17
    %p24 = scmp.eq.s32.totalorder %s8, 1
    %p25 = por %p23, %p24
    %p26 = scmp.ne.s32.totalorder %s18, %s21
    %p27 = scmp.eq.s32.totalorder %s8, 0
    %p28 = por %p26, %p27
    %p29 = scmp.ne.s32.totalorder %s18, %s21
    %p30 = scmp.eq.s32.totalorder %s13, 1
    %p31 = por %p29, %p30
    %p32 = scmp.ne.s32.totalorder %s21, %s22
    %p33 = scmp.eq.s32.totalorder %s13, 0
    %p34 = por %p32, %p33
    %p35 = scmp.ne.s32.totalorder %s21, %s22
    %p36 = scmp.eq.s32.totalorder %s14, 1
    %p37 = por %p35, %p36
    %p39 = scmp.ne.s32.totalorder %s22, %s38
    %p40 = scmp.eq.s32.totalorder %s14, 0
    %p41 = por %p39, %p40
    %s42 = ssub.s32 %s8, %s15
    %p43 = scmp.eq.s32.totalorder %s42, 0
    %s45 = sadd.s32 %s44, 1
    %s46 = scalar_select %p43, %s44, %s45
    %p49 = pneg %p43
    %p50 = scmp.eq.s32.totalorder %s8, 1
    %p51 = por %p49, %p50
    %p52 = scmp.ne.s32.totalorder %s44, %s47
    %p53 = scmp.eq.s32.totalorder %s8, 0
    %p54 = por %p52, %p53
    %p55 = scmp.ne.s32.totalorder %s44, %s47
    %p56 = scmp.eq.s32.totalorder %s13, 1
    %p57 = por %p55, %p56
    %p58 = scmp.ne.s32.totalorder %s47, %s48
    %p59 = scmp.eq.s32.totalorder %s13, 0
    %p60 = por %p58, %p59
    %p61 = scmp.ne.s32.totalorder %s47, %s48
    %p62 = scmp.eq.s32.totalorder %s14, 1
    %p63 = por %p61, %p62
    %p65 = scmp.ne.s32.totalorder %s48, %s64
    %p66 = scmp.eq.s32.totalorder %s14, 0
    %p67 = por %p65, %p66
    %s68 = ssub.s32 %s8, %s15
    %p69 = scmp.eq.s32.totalorder %s68, 0
    %s71 = sadd.s32 %s70, 1
    %s72 = scalar_select %p69, %s70, %s71
    %p75 = pneg %p69
    %p76 = scmp.eq.s32.totalorder %s8, 1
    %p77 = por %p75, %p76
    %p78 = scmp.ne.s32.totalorder %s70, %s73
    %p79 = scmp.eq.s32.totalorder %s8, 0
    %p80 = por %p78, %p79
    %p81 = scmp.ne.s32.totalorder %s70, %s73
    %p82 = scmp.eq.s32.totalorder %s13, 1
    %p83 = por %p81, %p82
    %p84 = scmp.ne.s32.totalorder %s73, %s74
    %p85 = scmp.eq.s32.totalorder %s13, 0
    %p86 = por %p84, %p85
    %p87 = scmp.ne.s32.totalorder %s73, %s74
    %p88 = scmp.eq.s32.totalorder %s14, 1
    %p89 = por %p87, %p88
    %p91 = scmp.ne.s32.totalorder %s74, %s90
    %p92 = scmp.eq.s32.totalorder %s14, 0
    %p93 = por %p91, %p92
    %p94 = scmp.le.s32.totalorder 1, %s8
    %p95 = scmp.lt.s32.totalorder %s8, 3
    %p96 = pnand %p94, %p95
    %p97 = pneg %p96
    // Predicated region
    $region9: #{generator_forward.45} parent=5 // pred_check
      _
    $region10: #{generator_forward.45} parent=5 // pred_check_branch
      %99 = sbr.rel (%p96) target = $region12
    $region11: #{generator_forward.45} parent=5 // pred_region
      %s100 = ssub.s32 %s8, 1
    $region12: #{generator_forward.45} parent=5 // pred_fallthru
      _
    %p101 = scmp.lt.s32.totalorder %s8, 2
    // Predicated region
    $region13: #{generator_forward.45} parent=5 // pred_check
      %p102 = pneg %p101
    $region14: #{generator_forward.45} parent=5 // pred_check_branch
      %104 = sbr.rel (%p102) target = $region16
    $region15: #{generator_forward.45} parent=5 // pred_region
      // Predicated region
      $region17: #{generator_forward.45} parent=15 // pred_check
        %p105 = pneg %p28
      $region18: #{generator_forward.45} parent=15 // pred_check_branch
        %107 = sbr.rel (%p105) target = $region20
      $region19: #{generator_forward.45} parent=15 // pred_region
        %p108 = scmp.lt.s32.totalorder %s8, 1
        %s109 = scalar_select %p108, %s8, 1
        %s110 = smul.addr %s109, 4
        %s111 = smul.addr %s110, 8
        %s112 = scalar_lea.vmem %s0, %s111
      $region20: #{generator_forward.45} parent=15 // pred_fallthru
        _
      // Predicated region
      $region21: #{generator_forward.45} parent=15 // pred_check
        %p113 = pneg %p54
      $region22: #{generator_forward.45} parent=15 // pred_check_branch
        %115 = sbr.rel (%p113) target = $region24
      $region23: #{generator_forward.45} parent=15 // pred_region
        %p116 = scmp.lt.s32.totalorder %s8, 1
        %s117 = scalar_select %p116, %s8, 1
        %s118 = smul.addr %s117, 16
        %s119 = smul.addr %s118, 8
        %s120 = scalar_lea.vmem %s1, %s119
      $region24: #{generator_forward.45} parent=15 // pred_fallthru
        _
    $region16: #{generator_forward.45} parent=5 // pred_fallthru
      _
    %p121 = scmp.le.s32.totalorder 1, %s8
    %p122 = scmp.lt.s32.totalorder %s8, 3
    %p123 = pnand %p121, %p122
    %p124 = pneg %p123
    // Predicated region
    $region25: #{generator_forward.45} parent=5 // pred_check
      _
    $region26: #{generator_forward.45} parent=5 // pred_check_branch
      %126 = sbr.rel (%p123) target = $region28
    $region27: #{generator_forward.45} parent=5 // pred_region
      %s127 = ssub.s32 %s8, 1
      %p128 = scmp.lt.s32.totalorder %s13, 1
      %s129 = scalar_select %p128, %s13, 1
      %s130 = smul.addr %s129, 4
      %s131 = smul.addr %s130, 8
      %s132 = scalar_lea.vmem %s0, %s131
      %p133 = pneg %p34
      %p134 = pneg %p31
      %p135 = scmp.lt.s32.totalorder %s13, 1
      %s136 = scalar_select %p135, %s13, 1
      %s137 = smul.addr %s136, 16
      %s138 = smul.addr %s137, 8
      %s139 = scalar_lea.vmem %s1, %s138
      %p140 = pneg %p60
      %p141 = pneg %p57
      %p142 = pneg %p86
      %p143 = pneg %p83
      %p144 = scmp.lt.s32.totalorder %s13, 1
      %s145 = scalar_select %p144, %s13, 1
      %s146 = smul.addr %s145, 4
      %s147 = smul.addr %s146, 8
      %s148 = scalar_lea.vmem %s2, %s147
      %p149 = scmp.lt.s32.totalorder %s13, 1
      %s150 = scalar_select %p149, %s13, 1
      %s151 = smul.addr %s150, 4
      %s152 = smul.addr %s151, 8
      %s153 = scalar_lea.vmem %s0, %s152
      %p154 = scmp.lt.s32.totalorder %s13, 1
      %s155 = scalar_select %p154, %s13, 1
      %s156 = smul.addr %s155, 16
      %s157 = smul.addr %s156, 8
      %s158 = scalar_lea.vmem %s1, %s157
      %p159 = scmp.lt.s32.totalorder %s13, 1
      %s160 = scalar_select %p159, %s13, 1
      %s161 = smul.addr %s160, 4
      %s162 = smul.addr %s161, 8
      %s163 = scalar_lea.vmem %s2, %s162
      %v164 = vld [vmem:[%s153] sm:$0xff]
      %v165 = vld [vmem:[%s153 + $0x8] sm:$0xff]
      %v166 = vld [vmem:[%s153 + $0x10] sm:$0xff]
      %v167 = vld [vmem:[%s153 + $0x18] sm:$0xff]
      %v168 = vld [vmem:[%s158] sm:$0xff]
      %v169 = vld [vmem:[%s158 + $0x8] sm:$0xff]
      %v170 = vld [vmem:[%s158 + $0x10] sm:$0xff]
      %v171 = vld [vmem:[%s158 + $0x18] sm:$0xff]
      %v172 = vld [vmem:[%s158 + $0x20] sm:$0xff]
      %v173 = vld [vmem:[%s158 + $0x28] sm:$0xff]
      %v174 = vld [vmem:[%s158 + $0x30] sm:$0xff]
      %v175 = vld [vmem:[%s158 + $0x38] sm:$0xff]
      %v176 = vld [vmem:[%s158 + $0x40] sm:$0xff]
      %v177 = vld [vmem:[%s158 + $0x48] sm:$0xff]
      %v178 = vld [vmem:[%s158 + $0x50] sm:$0xff]
      %v179 = vld [vmem:[%s158 + $0x58] sm:$0xff]
      %v180 = vld [vmem:[%s158 + $0x60] sm:$0xff]
      %v181 = vld [vmem:[%s158 + $0x68] sm:$0xff]
      %v182 = vld [vmem:[%s158 + $0x70] sm:$0xff]
      %v183 = vld [vmem:[%s158 + $0x78] sm:$0xff]
      %184 = vmatprep.subr.mxu0 0.0
      %185 = vmatpush1.msra.mxu0 %v168
      %186 = vmatprep.subr.mxu0 0.0
      %187 = vmatpush1.msra.mxu0 %v169
      %188 = vmatprep.subr.mxu0 0.0
      %189 = vmatpush1.msra.mxu0 %v170
      %190 = vmatprep.subr.mxu0 0.0
      %191 = vmatpush1.msra.mxu0 %v171
      %192 = vmatprep.subr.mxu0 0.0
      %193 = vmatpush1.msra.mxu0 %v172
      %194 = vmatprep.subr.mxu0 0.0
      %195 = vmatpush1.msra.mxu0 %v173
      %196 = vmatprep.subr.mxu0 0.0
      %197 = vmatpush1.msra.mxu0 %v174
      %198 = vmatprep.subr.mxu0 0.0
      %199 = vmatpush1.msra.mxu0 %v175
      %200 = vmatprep.subr.mxu0 0.0
      %201 = vmatpush1.msra.mxu0 %v176
      %202 = vmatprep.subr.mxu0 0.0
      %203 = vmatpush1.msra.mxu0 %v177
      %204 = vmatprep.subr.mxu0 0.0
      %205 = vmatpush1.msra.mxu0 %v178
      %206 = vmatprep.subr.mxu0 0.0
      %207 = vmatpush1.msra.mxu0 %v179
      %208 = vmatprep.subr.mxu0 0.0
      %209 = vmatpush1.msra.mxu0 %v180
      %210 = vmatprep.subr.mxu0 0.0
      %211 = vmatpush1.msra.mxu0 %v181
      %212 = vmatprep.subr.mxu0 0.0
      %213 = vmatpush1.msra.mxu0 %v182
      %214 = vmatprep.subr.mxu0 0.0
      %215 = vmatpush1.msra.mxu0 %v183
      %216 = vmatprep.subr.mxu0 0.0
      %217 = vmatpush1.msra.mxu0 0.0
      %218 = vmatprep.subr.mxu0 0.0
      %219 = vmatpush1.msra.mxu0 0.0
      %220 = vmatprep.subr.mxu0 0.0
      %221 = vmatpush1.msra.mxu0 0.0
      %222 = vmatprep.subr.mxu0 0.0
      %223 = vmatpush1.msra.mxu0 0.0
      %224 = vmatprep.subr.mxu0 0.0
      %225 = vmatpush1.msra.mxu0 0.0
      %226 = vmatprep.subr.mxu0 0.0
      %227 = vmatpush1.msra.mxu0 0.0
      %228 = vmatprep.subr.mxu0 0.0
      %229 = vmatpush1.msra.mxu0 0.0
      %230 = vmatprep.subr.mxu0 0.0
      %231 = vmatpush1.msra.mxu0 0.0
      %232 = vmatprep.subr.mxu0 0.0
      %233 = vmatpush1.msra.mxu0 0.0
      %234 = vmatprep.subr.mxu0 0.0
      %235 = vmatpush1.msra.mxu0 0.0
      %236 = vmatprep.subr.mxu0 0.0
      %237 = vmatpush1.msra.mxu0 0.0
      %238 = vmatprep.subr.mxu0 0.0
      %239 = vmatpush1.msra.mxu0 0.0
      %240 = vmatprep.subr.mxu0 0.0
      %241 = vmatpush1.msra.mxu0 0.0
      %242 = vmatprep.subr.mxu0 0.0
      %243 = vmatpush1.msra.mxu0 0.0
      %244 = vmatprep.subr.mxu0 0.0
      %245 = vmatpush1.msra.mxu0 0.0
      %246 = vmatprep.subr.mxu0 0.0
      %247 = vmatpush1.msra.mxu0 0.0
      %248 = vmatprep.mubr.f32.mxu0 0.0
      %249 = vmatmul.mubr.f32.gmra.mrb[0].mxu0 %v164
      %v250 = vpop.f32.mrb[0].mxu0
      %v251 = vadd.f32 0.0, %v250
      %v252 = vpop.f32.mrb[0].mxu0
      %253 = vmatprep.mubr.f32.mxu0 0.0
      %254 = vmatmul.mubr.f32.gmra.mrb[0].mxu0 %v165
      %v255 = vpop.f32.mrb[0].mxu0
      %v256 = vadd.f32 0.0, %v255
      %v257 = vpop.f32.mrb[0].mxu0
      %258 = vmatprep.mubr.f32.mxu0 0.0
      %259 = vmatmul.mubr.f32.gmra.mrb[0].mxu0 %v166
      %v260 = vpop.f32.mrb[0].mxu0
      %v261 = vadd.f32 0.0, %v260
      %v262 = vpop.f32.mrb[0].mxu0
      %263 = vmatprep.mubr.f32.mxu0 0.0
      %264 = vmatmul.mubr.f32.gmra.mrb[0].mxu0 %v167
      %v265 = vpop.f32.mrb[0].mxu0
      %v266 = vadd.f32 0.0, %v265
      %v267 = vpop.f32.mrb[0].mxu0
      %268 = vdwg.mxu0
      %v269 = vmul.f32 %v251, 0.25
      %v270 = vmul.f32 %v256, 0.25
      %v271 = vmul.f32 %v261, 0.25
      %v272 = vmul.f32 %v266, 0.25
      %273 = vst [vmem:[%s163] sm:$0xff] %v269
      %274 = vst [vmem:[%s163 + $0x8] sm:$0xff] %v270
      %275 = vst [vmem:[%s163 + $0x10] sm:$0xff] %v271
      %276 = vst [vmem:[%s163 + $0x18] sm:$0xff] %v272
      %p277 = scmp.lt.s32.totalorder %s13, 1
      %s278 = scalar_select %p277, %s13, 1
      %s279 = smul.addr %s278, 4
      %s280 = smul.addr %s279, 8
      %s281 = scalar_lea.vmem %s2, %s280
      // Predicated region
      $region29: #{generator_forward.45} parent=27 // pred_check
        %p282 = pneg %p83
      $region30: #{generator_forward.45} parent=27 // pred_check_branch
        %284 = sbr.rel (%p282) target = $region32
      $region31: #{generator_forward.45} parent=27 // pred_region
        _
      $region32: #{generator_forward.45} parent=27 // pred_fallthru
        _
    $region28: #{generator_forward.45} parent=5 // pred_fallthru
      _
    %p285 = scmp.le.s32.totalorder 2, %s8
    // Predicated region
    $region33: #{generator_forward.45} parent=5 // pred_check
      %p286 = pneg %p285
    $region34: #{generator_forward.45} parent=5 // pred_check_branch
      %288 = sbr.rel (%p286) target = $region36
    $region35: #{generator_forward.45} parent=5 // pred_region
      %s289 = ssub.s32 %s8, 2
      // Predicated region
      $region37: #{generator_forward.45} parent=35 // pred_check
        %p290 = pneg %p89
      $region38: #{generator_forward.45} parent=35 // pred_check_branch
        %292 = sbr.rel (%p290) target = $region40
      $region39: #{generator_forward.45} parent=35 // pred_region
        %p293 = scmp.lt.s32.totalorder %s14, 1
        %s294 = scalar_select %p293, %s14, 1
        %s295 = smul.addr %s294, 4
        %s296 = smul.addr %s295, 8
        %s297 = scalar_lea.vmem %s2, %s296
      $region40: #{generator_forward.45} parent=35 // pred_fallthru
        _
    $region36: #{generator_forward.45} parent=5 // pred_fallthru
      _
  $region6: #{generator_forward.45} parent=0 // loop_footer
    %s12 = sadd.s32 1, %s8
  $region7: #{generator_forward.45} parent=0 // loop_footer_branch
    %7 = sbr.rel target = $region3
  $region8: #{generator_forward.45} parent=0 // loop_exit
    _

// kernel: generator_forward.58
$region0: #{generator_forward.58}
  #allocation0 [shape = 'u32[]', space=smem, size = 0x4, offset = 0x4, fixed_abs, tag = 'smem constant byte address 0x4 - core index']
  #allocation1 [shape = 'u32[144,128]{1,0:T(1,128)}', space=vmem, size = 0x12000, scoped, tag = 'internal scratch']
  %s0 = inlined_call_operand.vmem [shape: f32[2,32,128], index: 0, kind: input, shape index: {}, may-alias: {0,6}]
  %s1 = inlined_call_operand.vmem [shape: f32[2,128,128], index: 1, kind: input, shape index: {}]
  %s2 = inlined_call_operand.vmem [shape: f32[32,32], index: 2, kind: input, shape index: {}]
  %s3 = inlined_call_operand.vmem [shape: f32[32,32], index: 3, kind: input, shape index: {}]
  %s4 = inlined_call_operand.vmem [shape: f32[3,32], index: 4, kind: input, shape index: {}]
  %s5 = inlined_call_operand.vmem [shape: f32[3,32], index: 5, kind: input, shape index: {}]
  %s6 = inlined_call_operand.vmem [shape: f32[2,32,128], index: 6, kind: input, shape index: {}, may-alias: {0,6}]
  %s7 = inlined_call_operand.vmem [shape: f32[2,3,128], index: 7, kind: input, shape index: {}]
  %s8 = inlined_call_operand.hbm [shape: f32[2,32,128], index: 8, kind: output, shape index: {0}]
  %s9 = inlined_call_operand.vmem [shape: f32[2,3,128], index: 9, kind: output, shape index: {1}]
  %10 = xla_tuple %s8, %s9
  %s11 = sld [smem:[#allocation0]]
  $region73: #{generator_forward.58} parent=0
    _
  %s13 = ssub.s32 1, %s11
  %s14 = scalar_select 0, %s13, %s11
  $region1: #{generator_forward.58} parent=0
    #allocation2 [shape = 'u8[32768]{0}', space=vmem, size = 0x8000, scoped, tag = 'output window, operand 0']
    #allocation3 [shape = 's32[2]{0}', space=sflag, size = 0x8, scoped, tag = 'scoped memory for generator_forward.58']
    %15 = vsyncpa [#allocation3], 0
    %s16 = scalar_lea.sflag [#allocation3], 1
    %17 = vsyncpa %s16, 0
    loop: start=0, step=1, limit=4
    $region2: #{generator_forward.58} parent=1 // loop_pre_header
      _
    $region3: #{generator_forward.58} parent=1 // loop_header
      %s19 = sphi 0, %s23
      %p20 = scmp.ge.s32.totalorder %s19, 4
      %s29 = sphi 0, %s31
      %s32 = sphi 0, %s29
      %s33 = sphi 0, %s32
      %s49 = sphi 0, %s33
      %s55 = sphi 0, %s57
      %s58 = sphi 0, %s55
      %s59 = sphi 0, %s58
      %s75 = sphi 0, %s59
      %s79 = sphi 0, %s79
      %s81 = sphi 0, %s79
      %s82 = sphi 0, %s81
      %s96 = sphi 0, %s82
      %s100 = sphi 0, %s100
      %s102 = sphi 0, %s100
      %s103 = sphi 0, %s102
      %s117 = sphi 0, %s103
      %s121 = sphi 0, %s121
      %s123 = sphi 0, %s121
      %s124 = sphi 0, %s123
      %s138 = sphi 0, %s124
      %s142 = sphi 0, %s142
      %s144 = sphi 0, %s142
      %s145 = sphi 0, %s144
      %s159 = sphi 0, %s145
      %s165 = sphi 0, %s167
      %s168 = sphi 0, %s165
      %s169 = sphi 0, %s168
      %s185 = sphi 0, %s169
      %s191 = sphi 0, %s193
      %s194 = sphi 0, %s191
      %s195 = sphi 0, %s194
      %s211 = sphi 0, %s195
      %s217 = sphi 0, %s219
      %s220 = sphi 0, %s217
      %s221 = sphi 0, %s220
      %s237 = sphi 0, %s221
      %s243 = sphi 0, %s245
      %s246 = sphi 0, %s243
      %s247 = sphi 0, %s246
      %s263 = sphi 0, %s247
    $region4: #{generator_forward.58} parent=1 // loop_header_branch
      %22 = sbr.rel (%p20) target = $region8
    $region5: #{generator_forward.58} parent=1 // loop_body
      %s24 = ssub.s32 %s19, 1
      %s25 = ssub.s32 %s19, 2
      %s26 = sadd.s32 %s19, 1
      %s27 = ssub.s32 %s19, %s26
      %p28 = scmp.eq.s32.totalorder %s27, 0
      %s30 = sadd.s32 %s29, 1
      %s31 = scalar_select %p28, %s29, %s30
      %p34 = pneg %p28
      %p35 = scmp.eq.s32.totalorder %s19, 1
      %p36 = por %p34, %p35
      %p37 = scmp.ne.s32.totalorder %s29, %s32
      %p38 = scmp.eq.s32.totalorder %s19, 0
      %p39 = por %p37, %p38
      %p40 = scmp.ne.s32.totalorder %s29, %s32
      %p41 = scmp.eq.s32.totalorder %s24, 1
      %p42 = por %p40, %p41
      %p43 = scmp.ne.s32.totalorder %s32, %s33
      %p44 = scmp.eq.s32.totalorder %s24, 0
      %p45 = por %p43, %p44
      %p46 = scmp.ne.s32.totalorder %s32, %s33
      %p47 = scmp.eq.s32.totalorder %s25, 1
      %p48 = por %p46, %p47
      %p50 = scmp.ne.s32.totalorder %s33, %s49
      %p51 = scmp.eq.s32.totalorder %s25, 0
      %p52 = por %p50, %p51
      %s53 = ssub.s32 %s19, %s26
      %p54 = scmp.eq.s32.totalorder %s53, 0
      %s56 = sadd.s32 %s55, 1
      %s57 = scalar_select %p54, %s55, %s56
      %p60 = pneg %p54
      %p61 = scmp.eq.s32.totalorder %s19, 1
      %p62 = por %p60, %p61
      %p63 = scmp.ne.s32.totalorder %s55, %s58
      %p64 = scmp.eq.s32.totalorder %s19, 0
      %p65 = por %p63, %p64
      %p66 = scmp.ne.s32.totalorder %s55, %s58
      %p67 = scmp.eq.s32.totalorder %s24, 1
      %p68 = por %p66, %p67
      %p69 = scmp.ne.s32.totalorder %s58, %s59
      %p70 = scmp.eq.s32.totalorder %s24, 0
      %p71 = por %p69, %p70
      %p72 = scmp.ne.s32.totalorder %s58, %s59
      %p73 = scmp.eq.s32.totalorder %s25, 1
      %p74 = por %p72, %p73
      %p76 = scmp.ne.s32.totalorder %s59, %s75
      %p77 = scmp.eq.s32.totalorder %s25, 0
      %p78 = por %p76, %p77
      %s80 = sadd.s32 %s79, 1
      %p83 = scmp.eq.s32.totalorder %s19, 1
      %p84 = scmp.ne.s32.totalorder %s79, %s81
      %p85 = scmp.eq.s32.totalorder %s19, 0
      %p86 = por %p84, %p85
      %p87 = scmp.ne.s32.totalorder %s79, %s81
      %p88 = scmp.eq.s32.totalorder %s24, 1
      %p89 = por %p87, %p88
      %p90 = scmp.ne.s32.totalorder %s81, %s82
      %p91 = scmp.eq.s32.totalorder %s24, 0
      %p92 = por %p90, %p91
      %p93 = scmp.ne.s32.totalorder %s81, %s82
      %p94 = scmp.eq.s32.totalorder %s25, 1
      %p95 = por %p93, %p94
      %p97 = scmp.ne.s32.totalorder %s82, %s96
      %p98 = scmp.eq.s32.totalorder %s25, 0
      %p99 = por %p97, %p98
      %s101 = sadd.s32 %s100, 1
      %p104 = scmp.eq.s32.totalorder %s19, 1
      %p105 = scmp.ne.s32.totalorder %s100, %s102
      %p106 = scmp.eq.s32.totalorder %s19, 0
      %p107 = por %p105, %p106
      %p108 = scmp.ne.s32.totalorder %s100, %s102
      %p109 = scmp.eq.s32.totalorder %s24, 1
      %p110 = por %p108, %p109
      %p111 = scmp.ne.s32.totalorder %s102, %s103
      %p112 = scmp.eq.s32.totalorder %s24, 0
      %p113 = por %p111, %p112
      %p114 = scmp.ne.s32.totalorder %s102, %s103
      %p115 = scmp.eq.s32.totalorder %s25, 1
      %p116 = por %p114, %p115
      %p118 = scmp.ne.s32.totalorder %s103, %s117
      %p119 = scmp.eq.s32.totalorder %s25, 0
      %p120 = por %p118, %p119
      %s122 = sadd.s32 %s121, 1
      %p125 = scmp.eq.s32.totalorder %s19, 1
      %p126 = scmp.ne.s32.totalorder %s121, %s123
      %p127 = scmp.eq.s32.totalorder %s19, 0
      %p128 = por %p126, %p127
      %p129 = scmp.ne.s32.totalorder %s121, %s123
      %p130 = scmp.eq.s32.totalorder %s24, 1
      %p131 = por %p129, %p130
      %p132 = scmp.ne.s32.totalorder %s123, %s124
      %p133 = scmp.eq.s32.totalorder %s24, 0
      %p134 = por %p132, %p133
      %p135 = scmp.ne.s32.totalorder %s123, %s124
      %p136 = scmp.eq.s32.totalorder %s25, 1
      %p137 = por %p135, %p136
      %p139 = scmp.ne.s32.totalorder %s124, %s138
      %p140 = scmp.eq.s32.totalorder %s25, 0
      %p141 = por %p139, %p140
      %s143 = sadd.s32 %s142, 1
      %p146 = scmp.eq.s32.totalorder %s19, 1
      %p147 = scmp.ne.s32.totalorder %s142, %s144
      %p148 = scmp.eq.s32.totalorder %s19, 0
      %p149 = por %p147, %p148
      %p150 = scmp.ne.s32.totalorder %s142, %s144
      %p151 = scmp.eq.s32.totalorder %s24, 1
      %p152 = por %p150, %p151
      %p153 = scmp.ne.s32.totalorder %s144, %s145
      %p154 = scmp.eq.s32.totalorder %s24, 0
      %p155 = por %p153, %p154
      %p156 = scmp.ne.s32.totalorder %s144, %s145
      %p157 = scmp.eq.s32.totalorder %s25, 1
      %p158 = por %p156, %p157
      %p160 = scmp.ne.s32.totalorder %s145, %s159
      %p161 = scmp.eq.s32.totalorder %s25, 0
      %p162 = por %p160, %p161
      %s163 = ssub.s32 %s19, %s26
      %p164 = scmp.eq.s32.totalorder %s163, 0
      %s166 = sadd.s32 %s165, 1
      %s167 = scalar_select %p164, %s165, %s166
      %p170 = pneg %p164
      %p171 = scmp.eq.s32.totalorder %s19, 1
      %p172 = por %p170, %p171
      %p173 = scmp.ne.s32.totalorder %s165, %s168
      %p174 = scmp.eq.s32.totalorder %s19, 0
      %p175 = por %p173, %p174
      %p176 = scmp.ne.s32.totalorder %s165, %s168
      %p177 = scmp.eq.s32.totalorder %s24, 1
      %p178 = por %p176, %p177
      %p179 = scmp.ne.s32.totalorder %s168, %s169
      %p180 = scmp.eq.s32.totalorder %s24, 0
      %p181 = por %p179, %p180
      %p182 = scmp.ne.s32.totalorder %s168, %s169
      %p183 = scmp.eq.s32.totalorder %s25, 1
      %p184 = por %p182, %p183
      %p186 = scmp.ne.s32.totalorder %s169, %s185
      %p187 = scmp.eq.s32.totalorder %s25, 0
      %p188 = por %p186, %p187
      %s189 = ssub.s32 %s19, %s26
      %p190 = scmp.eq.s32.totalorder %s189, 0
      %s192 = sadd.s32 %s191, 1
      %s193 = scalar_select %p190, %s191, %s192
      %p196 = pneg %p190
      %p197 = scmp.eq.s32.totalorder %s19, 1
      %p198 = por %p196, %p197
      %p199 = scmp.ne.s32.totalorder %s191, %s194
      %p200 = scmp.eq.s32.totalorder %s19, 0
      %p201 = por %p199, %p200
      %p202 = scmp.ne.s32.totalorder %s191, %s194
      %p203 = scmp.eq.s32.totalorder %s24, 1
      %p204 = por %p202, %p203
      %p205 = scmp.ne.s32.totalorder %s194, %s195
      %p206 = scmp.eq.s32.totalorder %s24, 0
      %p207 = por %p205, %p206
      %p208 = scmp.ne.s32.totalorder %s194, %s195
      %p209 = scmp.eq.s32.totalorder %s25, 1
      %p210 = por %p208, %p209
      %p212 = scmp.ne.s32.totalorder %s195, %s211
      %p213 = scmp.eq.s32.totalorder %s25, 0
      %p214 = por %p212, %p213
      %s215 = ssub.s32 %s19, %s26
      %p216 = scmp.eq.s32.totalorder %s215, 0
      %s218 = sadd.s32 %s217, 1
      %s219 = scalar_select %p216, %s217, %s218
      %p222 = pneg %p216
      %p223 = scmp.eq.s32.totalorder %s19, 1
      %p224 = por %p222, %p223
      %p225 = scmp.ne.s32.totalorder %s217, %s220
      %p226 = scmp.eq.s32.totalorder %s19, 0
      %p227 = por %p225, %p226
      %p228 = scmp.ne.s32.totalorder %s217, %s220
      %p229 = scmp.eq.s32.totalorder %s24, 1
      %p230 = por %p228, %p229
      %p231 = scmp.ne.s32.totalorder %s220, %s221
      %p232 = scmp.eq.s32.totalorder %s24, 0
      %p233 = por %p231, %p232
      %p234 = scmp.ne.s32.totalorder %s220, %s221
      %p235 = scmp.eq.s32.totalorder %s25, 1
      %p236 = por %p234, %p235
      %p238 = scmp.ne.s32.totalorder %s221, %s237
      %p239 = scmp.eq.s32.totalorder %s25, 0
      %p240 = por %p238, %p239
      %s241 = ssub.s32 %s19, %s26
      %p242 = scmp.eq.s32.totalorder %s241, 0
      %s244 = sadd.s32 %s243, 1
      %s245 = scalar_select %p242, %s243, %s244
      %p248 = pneg %p242
      %p249 = scmp.eq.s32.totalorder %s19, 1
      %p250 = por %p248, %p249
      %p251 = scmp.ne.s32.totalorder %s243, %s246
      %p252 = scmp.eq.s32.totalorder %s19, 0
      %p253 = por %p251, %p252
      %p254 = scmp.ne.s32.totalorder %s243, %s246
      %p255 = scmp.eq.s32.totalorder %s24, 1
      %p256 = por %p254, %p255
      %p257 = scmp.ne.s32.totalorder %s246, %s247
      %p258 = scmp.eq.s32.totalorder %s24, 0
      %p259 = por %p257, %p258
      %p260 = scmp.ne.s32.totalorder %s246, %s247
      %p261 = scmp.eq.s32.totalorder %s25, 1
      %p262 = por %p260, %p261
      %p264 = scmp.ne.s32.totalorder %s247, %s263
      %p265 = scmp.eq.s32.totalorder %s25, 0
      %p266 = por %p264, %p265
      %p267 = scmp.le.s32.totalorder 1, %s19
      %p268 = scmp.lt.s32.totalorder %s19, 3
      %p269 = pnand %p267, %p268
      %p270 = pneg %p269
      // Predicated region
      $region9: #{generator_forward.58} parent=5 // pred_check
        _
      $region10: #{generator_forward.58} parent=5 // pred_check_branch
        %272 = sbr.rel (%p269) target = $region12
      $region11: #{generator_forward.58} parent=5 // pred_region
        %s273 = ssub.s32 %s19, 1
        // Predicated region
        $region13: #{generator_forward.58} parent=11 // pred_check
          %p274 = pneg %p92
        $region14: #{generator_forward.58} parent=11 // pred_check_branch
          %276 = sbr.rel (%p274) target = $region16
        $region15: #{generator_forward.58} parent=11 // pred_region
          _
        $region16: #{generator_forward.58} parent=11 // pred_fallthru
          _
        // Predicated region
        $region17: #{generator_forward.58} parent=11 // pred_check
          %p277 = pneg %p113
        $region18: #{generator_forward.58} parent=11 // pred_check_branch
          %279 = sbr.rel (%p277) target = $region20
        $region19: #{generator_forward.58} parent=11 // pred_region
          _
        $region20: #{generator_forward.58} parent=11 // pred_fallthru
          _
        // Predicated region
        $region21: #{generator_forward.58} parent=11 // pred_check
          %p280 = pneg %p134
        $region22: #{generator_forward.58} parent=11 // pred_check_branch
          %282 = sbr.rel (%p280) target = $region24
        $region23: #{generator_forward.58} parent=11 // pred_region
          _
        $region24: #{generator_forward.58} parent=11 // pred_fallthru
          _
        // Predicated region
        $region25: #{generator_forward.58} parent=11 // pred_check
          %p283 = pneg %p155
        $region26: #{generator_forward.58} parent=11 // pred_check_branch
          %285 = sbr.rel (%p283) target = $region28
        $region27: #{generator_forward.58} parent=11 // pred_region
          _
        $region28: #{generator_forward.58} parent=11 // pred_fallthru
          _
      $region12: #{generator_forward.58} parent=5 // pred_fallthru
        _
      %p286 = scmp.lt.s32.totalorder %s19, 2
      // Predicated region
      $region29: #{generator_forward.58} parent=5 // pred_check
        %p287 = pneg %p286
      $region30: #{generator_forward.58} parent=5 // pred_check_branch
        %289 = sbr.rel (%p287) target = $region32
      $region31: #{generator_forward.58} parent=5 // pred_region
        // Predicated region
        $region33: #{generator_forward.58} parent=31 // pred_check
          %p290 = pneg %p39
        $region34: #{generator_forward.58} parent=31 // pred_check_branch
          %292 = sbr.rel (%p290) target = $region36
        $region35: #{generator_forward.58} parent=31 // pred_region
          %p293 = scmp.lt.s32.totalorder %s19, 1
          %s294 = scalar_select %p293, %s19, 1
          %s295 = smul.addr %s294, 4
          %s296 = smul.addr %s295, 8
          %s297 = scalar_lea.vmem %s0, %s296
        $region36: #{generator_forward.58} parent=31 // pred_fallthru
          _
        // Predicated region
        $region37: #{generator_forward.58} parent=31 // pred_check
          %p298 = pneg %p65
        $region38: #{generator_forward.58} parent=31 // pred_check_branch
          %300 = sbr.rel (%p298) target = $region40
        $region39: #{generator_forward.58} parent=31 // pred_region
          %p301 = scmp.lt.s32.totalorder %s19, 1
          %s302 = scalar_select %p301, %s19, 1
          %s303 = smul.addr %s302, 16
          %s304 = smul.addr %s303, 8
          %s305 = scalar_lea.vmem %s1, %s304
        $region40: #{generator_forward.58} parent=31 // pred_fallthru
          _
        // Predicated region
        $region41: #{generator_forward.58} parent=31 // pred_check
          %p306 = pneg %p175
        $region42: #{generator_forward.58} parent=31 // pred_check_branch
          %308 = sbr.rel (%p306) target = $region44
        $region43: #{generator_forward.58} parent=31 // pred_region
          %p309 = scmp.lt.s32.totalorder %s19, 1
          %s310 = scalar_select %p309, %s19, 1
          %s311 = smul.addr %s310, 4
          %s312 = smul.addr %s311, 8
          %s313 = scalar_lea.vmem %s6, %s312
        $region44: #{generator_forward.58} parent=31 // pred_fallthru
          _
        // Predicated region
        $region45: #{generator_forward.58} parent=31 // pred_check
          %p314 = pneg %p201
        $region46: #{generator_forward.58} parent=31 // pred_check_branch
          %316 = sbr.rel (%p314) target = $region48
        $region47: #{generator_forward.58} parent=31 // pred_region
          %p317 = scmp.lt.s32.totalorder %s19, 1
          %s318 = scalar_select %p317, %s19, 1
          %s319 = smul.addr %s318, 4
          %s320 = scalar_lea.vmem %s7, %s319
        $region48: #{generator_forward.58} parent=31 // pred_fallthru
          _
      $region32: #{generator_forward.58} parent=5 // pred_fallthru
        _
      %p321 = scmp.le.s32.totalorder 1, %s19
      %p322 = scmp.lt.s32.totalorder %s19, 3
      %p323 = pnand %p321, %p322
      %p324 = pneg %p323
      // Predicated region
      $region49: #{generator_forward.58} parent=5 // pred_check
        _
      $region50: #{generator_forward.58} parent=5 // pred_check_branch
        %326 = sbr.rel (%p323) target = $region52
      $region51: #{generator_forward.58} parent=5 // pred_region
        %s327 = ssub.s32 %s19, 1
        %p328 = scmp.lt.s32.totalorder %s24, 1
        %s329 = scalar_select %p328, %s24, 1
        %s330 = smul.addr %s329, 4
        %s331 = smul.addr %s330, 8
        %s332 = scalar_lea.vmem %s0, %s331
        %p333 = pneg %p45
        %p334 = pneg %p42
        %p335 = scmp.lt.s32.totalorder %s24, 1
        %s336 = scalar_select %p335, %s24, 1
        %s337 = smul.addr %s336, 16
        %s338 = smul.addr %s337, 8
        %s339 = scalar_lea.vmem %s1, %s338
        %p340 = pneg %p71
        %p341 = pneg %p68
        %p342 = pneg %p92
        %p343 = pneg %p89
        %p344 = pneg %p113
        %p345 = pneg %p110
        %p346 = pneg %p134
        %p347 = pneg %p131
        %p348 = pneg %p155
        %p349 = pneg %p152
        %p350 = scmp.lt.s32.totalorder %s24, 1
        %s351 = scalar_select %p350, %s24, 1
        %s352 = smul.addr %s351, 4
        %s353 = smul.addr %s352, 8
        %s354 = scalar_lea.vmem %s6, %s353
        %p355 = pneg %p181
        %p356 = pneg %p178
        %p357 = scmp.lt.s32.totalorder %s24, 1
        %s358 = scalar_select %p357, %s24, 1
        %s359 = smul.addr %s358, 4
        %s360 = scalar_lea.vmem %s7, %s359
        %p361 = pneg %p207
        %p362 = pneg %p204
        %p363 = pneg %p233
        %p364 = pneg %p230
        %s365 = sand.u32 %s220, 1
        %s366 = scalar_lea.sflag [#allocation3], %s365
        %s367 = sand.u32 %s220, 1
        %s368 = smul.addr %s367, 32
        %s369 = scalar_lea.vmem [#allocation2], %s368
        %p370 = pneg %p259
        %p371 = pneg %p256
        %p372 = scmp.lt.s32.totalorder %s24, 1
        %s373 = scalar_select %p372, %s24, 1
        %s374 = smul.addr %s373, 4
        %s375 = scalar_lea.vmem %s9, %s374
        %p376 = scmp.lt.s32.totalorder %s24, 1
        %s377 = scalar_select %p376, %s24, 1
        %s378 = smul.addr %s377, 4
        %s379 = smul.addr %s378, 8
        %s380 = scalar_lea.vmem %s0, %s379
        %p381 = scmp.lt.s32.totalorder %s24, 1
        %s382 = scalar_select %p381, %s24, 1
        %s383 = smul.addr %s382, 16
        %s384 = smul.addr %s383, 8
        %s385 = scalar_lea.vmem %s1, %s384
        %p386 = scmp.lt.s32.totalorder %s24, 1
        %s387 = scalar_select %p386, %s24, 1
        %s388 = smul.addr %s387, 4
        %s389 = smul.addr %s388, 8
        %s390 = scalar_lea.vmem %s6, %s389
        %p391 = scmp.lt.s32.totalorder %s24, 1
        %s392 = scalar_select %p391, %s24, 1
        %s393 = smul.addr %s392, 4
        %s394 = scalar_lea.vmem %s7, %s393
        %p395 = scmp.lt.s32.totalorder %s24, 1
        %s396 = scalar_select %p395, %s24, 1
        %s397 = smul.addr %s396, 4
        %s398 = scalar_lea.vmem %s9, %s397
        %v399 = vld [vmem:[%s380] sm:$0xff]
        %v400 = vld [vmem:[%s380 + $0x8] sm:$0xff]
        %v401 = vld [vmem:[%s380 + $0x10] sm:$0xff]
        %v402 = vld [vmem:[%s380 + $0x18] sm:$0xff]
        %v403 = vmax.f32 %v399, 0.0
        %v404 = vmax.f32 %v400, 0.0
        %v405 = vmax.f32 %v401, 0.0
        %v406 = vmax.f32 %v402, 0.0
        %v407 = vld [vmem:[%s385] sm:$0xff]
        %v408 = vld [vmem:[%s385 + $0x8] sm:$0xff]
        %v409 = vld [vmem:[%s385 + $0x10] sm:$0xff]
        %v410 = vld [vmem:[%s385 + $0x18] sm:$0xff]
        %v411 = vld [vmem:[%s385 + $0x20] sm:$0xff]
        %v412 = vld [vmem:[%s385 + $0x28] sm:$0xff]
        %v413 = vld [vmem:[%s385 + $0x30] sm:$0xff]
        %v414 = vld [vmem:[%s385 + $0x38] sm:$0xff]
        %v415 = vld [vmem:[%s385 + $0x40] sm:$0xff]
        %v416 = vld [vmem:[%s385 + $0x48] sm:$0xff]
        %v417 = vld [vmem:[%s385 + $0x50] sm:$0xff]
        %v418 = vld [vmem:[%s385 + $0x58] sm:$0xff]
        %v419 = vld [vmem:[%s385 + $0x60] sm:$0xff]
        %v420 = vld [vmem:[%s385 + $0x68] sm:$0xff]
        %v421 = vld [vmem:[%s385 + $0x70] sm:$0xff]
        %v422 = vld [vmem:[%s385 + $0x78] sm:$0xff]
        %423 = vmatprep.subr.mxu0 0.0
        %424 = vmatpush1.msra.mxu0 %v407
        %425 = vmatprep.subr.mxu0 0.0
        %426 = vmatpush1.msra.mxu0 %v408
        %427 = vmatprep.subr.mxu0 0.0
        %428 = vmatpush1.msra.mxu0 %v409
        %429 = vmatprep.subr.mxu0 0.0
        %430 = vmatpush1.msra.mxu0 %v410
        %431 = vmatprep.subr.mxu0 0.0
        %432 = vmatpush1.msra.mxu0 %v411
        %433 = vmatprep.subr.mxu0 0.0
        %434 = vmatpush1.msra.mxu0 %v412
        %435 = vmatprep.subr.mxu0 0.0
        %436 = vmatpush1.msra.mxu0 %v413
        %437 = vmatprep.subr.mxu0 0.0
        %438 = vmatpush1.msra.mxu0 %v414
        %439 = vmatprep.subr.mxu0 0.0
        %440 = vmatpush1.msra.mxu0 %v415
        %441 = vmatprep.subr.mxu0 0.0
        %442 = vmatpush1.msra.mxu0 %v416
        %443 = vmatprep.subr.mxu0 0.0
        %444 = vmatpush1.msra.mxu0 %v417
        %445 = vmatprep.subr.mxu0 0.0
        %446 = vmatpush1.msra.mxu0 %v418
        %447 = vmatprep.subr.mxu0 0.0
        %448 = vmatpush1.msra.mxu0 %v419
        %449 = vmatprep.subr.mxu0 0.0
        %450 = vmatpush1.msra.mxu0 %v420
        %451 = vmatprep.subr.mxu0 0.0
        %452 = vmatpush1.msra.mxu0 %v421
        %453 = vmatprep.subr.mxu0 0.0
        %454 = vmatpush1.msra.mxu0 %v422
        %455 = vmatprep.subr.mxu0 0.0
        %456 = vmatpush1.msra.mxu0 0.0
        %457 = vmatprep.subr.mxu0 0.0
        %458 = vmatpush1.msra.mxu0 0.0
        %459 = vmatprep.subr.mxu0 0.0
        %460 = vmatpush1.msra.mxu0 0.0
        %461 = vmatprep.subr.mxu0 0.0
        %462 = vmatpush1.msra.mxu0 0.0
        %463 = vmatprep.subr.mxu0 0.0
        %464 = vmatpush1.msra.mxu0 0.0
        %465 = vmatprep.subr.mxu0 0.0
        %466 = vmatpush1.msra.mxu0 0.0
        %467 = vmatprep.subr.mxu0 0.0
        %468 = vmatpush1.msra.mxu0 0.0
        %469 = vmatprep.subr.mxu0 0.0
        %470 = vmatpush1.msra.mxu0 0.0
        %471 = vmatprep.subr.mxu0 0.0
        %472 = vmatpush1.msra.mxu0 0.0
        %473 = vmatprep.subr.mxu0 0.0
        %474 = vmatpush1.msra.mxu0 0.0
        %475 = vmatprep.subr.mxu0 0.0
        %476 = vmatpush1.msra.mxu0 0.0
        %477 = vmatprep.subr.mxu0 0.0
        %478 = vmatpush1.msra.mxu0 0.0
        %479 = vmatprep.subr.mxu0 0.0
        %480 = vmatpush1.msra.mxu0 0.0
        %481 = vmatprep.subr.mxu0 0.0
        %482 = vmatpush1.msra.mxu0 0.0
        %483 = vmatprep.subr.mxu0 0.0
        %484 = vmatpush1.msra.mxu0 0.0
        %485 = vmatprep.subr.mxu0 0.0
        %486 = vmatpush1.msra.mxu0 0.0
        %487 = vmatprep.mubr.f32.mxu0 0.0
        %488 = vmatmul.mubr.f32.gmra.mrb[0].mxu0 %v403
        %v489 = vpop.f32.mrb[0].mxu0
        %v490 = vadd.f32 0.0, %v489
        %v491 = vpop.f32.mrb[0].mxu0
        %492 = vmatprep.mubr.f32.mxu0 0.0
        %493 = vmatmul.mubr.f32.gmra.mrb[0].mxu0 %v404
        %v494 = vpop.f32.mrb[0].mxu0
        %v495 = vadd.f32 0.0, %v494
        %v496 = vpop.f32.mrb[0].mxu0
        %497 = vmatprep.mubr.f32.mxu0 0.0
        %498 = vmatmul.mubr.f32.gmra.mrb[0].mxu0 %v405
        %v499 = vpop.f32.mrb[0].mxu0
        %v500 = vadd.f32 0.0, %v499
        %v501 = vpop.f32.mrb[0].mxu0
        %502 = vmatprep.mubr.f32.mxu0 0.0
        %503 = vmatmul.mubr.f32.gmra.mrb[0].mxu0 %v406
        %v504 = vpop.f32.mrb[0].mxu0
        %v505 = vadd.f32 0.0, %v504
        %v506 = vpop.f32.mrb[0].mxu0
        %507 = vdwg.mxu0
        %v508 = vld [vmem:[%s2] sm:$0xff]
        %v509 = vld [vmem:[%s2 + $0x8] sm:$0xff]
        %v510 = vld [vmem:[%s2 + $0x10] sm:$0xff]
        %v511 = vld [vmem:[%s2 + $0x18] sm:$0xff]
        %v512 = vld [vmem:[%s3] sm:$0xff]
        %v513 = vld [vmem:[%s3 + $0x8] sm:$0xff]
        %v514 = vld [vmem:[%s3 + $0x10] sm:$0xff]
        %v515 = vld [vmem:[%s3 + $0x18] sm:$0xff]
        %vm516 = vcmask 261120
        %v518 = vsel %vm516, %v512, 0
        %v521 = vsel %vm516, %v513, 0
        %v524 = vsel %vm516, %v514, 0
        %v527 = vsel %vm516, %v515, 0
        %529 = vmatprep.subr.mxu0 0.0
        %530 = vmatpush1.msra.mxu0 %v490
        %531 = vmatprep.subr.mxu0 0.0
        %532 = vmatpush1.msra.mxu0 %v495
        %533 = vmatprep.subr.mxu0 0.0
        %534 = vmatpush1.msra.mxu0 %v500
        %535 = vmatprep.subr.mxu0 0.0
        %536 = vmatpush1.msra.mxu0 %v505
        %537 = vmatprep.subr.mxu0 0.0
        %538 = vmatpush1.msra.mxu0 0.0
        %539 = vmatprep.subr.mxu0 0.0
        %540 = vmatpush1.msra.mxu0 0.0
        %541 = vmatprep.subr.mxu0 0.0
        %542 = vmatpush1.msra.mxu0 0.0
        %543 = vmatprep.subr.mxu0 0.0
        %544 = vmatpush1.msra.mxu0 0.0
        %545 = vmatprep.subr.mxu0 0.0
        %546 = vmatpush1.msra.mxu0 0.0
        %547 = vmatprep.subr.mxu0 0.0
        %548 = vmatpush1.msra.mxu0 0.0
        %549 = vmatprep.subr.mxu0 0.0
        %550 = vmatpush1.msra.mxu0 0.0
        %551 = vmatprep.subr.mxu0 0.0
        %552 = vmatpush1.msra.mxu0 0.0
        %553 = vmatprep.subr.mxu0 0.0
        %554 = vmatpush1.msra.mxu0 0.0
        %555 = vmatprep.subr.mxu0 0.0
        %556 = vmatpush1.msra.mxu0 0.0
        %557 = vmatprep.subr.mxu0 0.0
        %558 = vmatpush1.msra.mxu0 0.0
        %559 = vmatprep.subr.mxu0 0.0
        %560 = vmatpush1.msra.mxu0 0.0
        %561 = vmatprep.subr.mxu0 0.0
        %562 = vmatpush1.msra.mxu0 0.0
        %563 = vmatprep.subr.mxu0 0.0
        %564 = vmatpush1.msra.mxu0 0.0
        %565 = vmatprep.subr.mxu0 0.0
        %566 = vmatpush1.msra.mxu0 0.0
        %567 = vmatprep.subr.mxu0 0.0
        %568 = vmatpush1.msra.mxu0 0.0
        %569 = vmatprep.subr.mxu0 0.0
        %570 = vmatpush1.msra.mxu0 0.0
        %571 = vmatprep.subr.mxu0 0.0
        %572 = vmatpush1.msra.mxu0 0.0
        %573 = vmatprep.subr.mxu0 0.0
        %574 = vmatpush1.msra.mxu0 0.0
        %575 = vmatprep.subr.mxu0 0.0
        %576 = vmatpush1.msra.mxu0 0.0
        %577 = vmatprep.subr.mxu0 0.0
        %578 = vmatpush1.msra.mxu0 0.0
        %579 = vmatprep.subr.mxu0 0.0
        %580 = vmatpush1.msra.mxu0 0.0
        %581 = vmatprep.subr.mxu0 0.0
        %582 = vmatpush1.msra.mxu0 0.0
        %583 = vmatprep.subr.mxu0 0.0
        %584 = vmatpush1.msra.mxu0 0.0
        %585 = vmatprep.subr.mxu0 0.0
        %586 = vmatpush1.msra.mxu0 0.0
        %587 = vmatprep.subr.mxu0 0.0
        %588 = vmatpush1.msra.mxu0 0.0
        %589 = vmatprep.subr.mxu0 0.0
        %590 = vmatpush1.msra.mxu0 0.0
        %591 = vmatprep.subr.mxu0 0.0
        %592 = vmatpush1.msra.mxu0 0.0
        %593 = vmatprep.mubr.f32.mxu0 0.0
        %594 = vmatmul.mubr.f32.gmra.mrb[0].mxu0 %v518
        %v595 = vpop.f32.mrb[0].mxu0
        %v596 = vadd.f32 0.0, %v595
        %v597 = vpop.f32.mrb[0].mxu0
        %598 = vmatprep.mubr.f32.mxu0 0.0
        %599 = vmatmul.mubr.f32.gmra.mrb[0].mxu0 %v521
        %v600 = vpop.f32.mrb[0].mxu0
        %v601 = vadd.f32 0.0, %v600
        %v602 = vpop.f32.mrb[0].mxu0
        %603 = vmatprep.mubr.f32.mxu0 0.0
        %604 = vmatmul.mubr.f32.gmra.mrb[0].mxu0 %v524
        %v605 = vpop.f32.mrb[0].mxu0
        %v606 = vadd.f32 0.0, %v605
        %v607 = vpop.f32.mrb[0].mxu0
        %608 = vmatprep.mubr.f32.mxu0 0.0
        %609 = vmatmul.mubr.f32.gmra.mrb[0].mxu0 %v527
        %v610 = vpop.f32.mrb[0].mxu0
        %v611 = vadd.f32 0.0, %v610
        %v612 = vpop.f32.mrb[0].mxu0
        %613 = vdwg.mxu0
        %v615 = vsel %vm516, %v508, 0
        %v618 = vsel %vm516, %v509, 0
        %v621 = vsel %vm516, %v510, 0
        %v624 = vsel %vm516, %v511, 0
        %626 = vmatprep.subr.mxu0 0.0
        %627 = vmatpush1.msra.mxu0 %v403
        %628 = vmatprep.subr.mxu0 0.0
        %629 = vmatpush1.msra.mxu0 %v404
        %630 = vmatprep.subr.mxu0 0.0
        %631 = vmatpush1.msra.mxu0 %v405
        %632 = vmatprep.subr.mxu0 0.0
        %633 = vmatpush1.msra.mxu0 %v406
        %634 = vmatprep.subr.mxu0 0.0
        %635 = vmatpush1.msra.mxu0 0.0
        %636 = vmatprep.subr.mxu0 0.0
        %637 = vmatpush1.msra.mxu0 0.0
        %638 = vmatprep.subr.mxu0 0.0
        %639 = vmatpush1.msra.mxu0 0.0
        %640 = vmatprep.subr.mxu0 0.0
        %641 = vmatpush1.msra.mxu0 0.0
        %642 = vmatprep.subr.mxu0 0.0
        %643 = vmatpush1.msra.mxu0 0.0
        %644 = vmatprep.subr.mxu0 0.0
        %645 = vmatpush1.msra.mxu0 0.0
        %646 = vmatprep.subr.mxu0 0.0
        %647 = vmatpush1.msra.mxu0 0.0
        %648 = vmatprep.subr.mxu0 0.0
        %649 = vmatpush1.msra.mxu0 0.0
        %650 = vmatprep.subr.mxu0 0.0
        %651 = vmatpush1.msra.mxu0 0.0
        %652 = vmatprep.subr.mxu0 0.0
        %653 = vmatpush1.msra.mxu0 0.0
        %654 = vmatprep.subr.mxu0 0.0
        %655 = vmatpush1.msra.mxu0 0.0
        %656 = vmatprep.subr.mxu0 0.0
        %657 = vmatpush1.msra.mxu0 0.0
        %658 = vmatprep.subr.mxu0 0.0
        %659 = vmatpush1.msra.mxu0 0.0
        %660 = vmatprep.subr.mxu0 0.0
        %661 = vmatpush1.msra.mxu0 0.0
        %662 = vmatprep.subr.mxu0 0.0
        %663 = vmatpush1.msra.mxu0 0.0
        %664 = vmatprep.subr.mxu0 0.0
        %665 = vmatpush1.msra.mxu0 0.0
        %666 = vmatprep.subr.mxu0 0.0
        %667 = vmatpush1.msra.mxu0 0.0
        %668 = vmatprep.subr.mxu0 0.0
        %669 = vmatpush1.msra.mxu0 0.0
        %670 = vmatprep.subr.mxu0 0.0
        %671 = vmatpush1.msra.mxu0 0.0
        %672 = vmatprep.subr.mxu0 0.0
        %673 = vmatpush1.msra.mxu0 0.0
        %674 = vmatprep.subr.mxu0 0.0
        %675 = vmatpush1.msra.mxu0 0.0
        %676 = vmatprep.subr.mxu0 0.0
        %677 = vmatpush1.msra.mxu0 0.0
        %678 = vmatprep.subr.mxu0 0.0
        %679 = vmatpush1.msra.mxu0 0.0
        %680 = vmatprep.subr.mxu0 0.0
        %681 = vmatpush1.msra.mxu0 0.0
        %682 = vmatprep.subr.mxu0 0.0
        %683 = vmatpush1.msra.mxu0 0.0
        %684 = vmatprep.subr.mxu0 0.0
        %685 = vmatpush1.msra.mxu0 0.0
        %686 = vmatprep.subr.mxu0 0.0
        %687 = vmatpush1.msra.mxu0 0.0
        %688 = vmatprep.subr.mxu0 0.0
        %689 = vmatpush1.msra.mxu0 0.0
        %690 = vmatprep.mubr.f32.mxu0 0.0
        %691 = vmatmul.mubr.f32.gmra.mrb[0].mxu0 %v615
        %v692 = vpop.f32.mrb[0].mxu0
        %v693 = vadd.f32 %v596, %v692
        %v694 = vpop.f32.mrb[0].mxu0
        %695 = vmatprep.mubr.f32.mxu0 0.0
        %696 = vmatmul.mubr.f32.gmra.mrb[0].mxu0 %v618
        %v697 = vpop.f32.mrb[0].mxu0
        %v698 = vadd.f32 %v601, %v697
        %v699 = vpop.f32.mrb[0].mxu0
        %700 = vmatprep.mubr.f32.mxu0 0.0
        %701 = vmatmul.mubr.f32.gmra.mrb[0].mxu0 %v621
        %v702 = vpop.f32.mrb[0].mxu0
        %v703 = vadd.f32 %v606, %v702
        %v704 = vpop.f32.mrb[0].mxu0
        %705 = vmatprep.mubr.f32.mxu0 0.0
        %706 = vmatmul.mubr.f32.gmra.mrb[0].mxu0 %v624
        %v707 = vpop.f32.mrb[0].mxu0
        %v708 = vadd.f32 %v611, %v707
        %v709 = vpop.f32.mrb[0].mxu0
        %710 = vdwg.mxu0
        %v711 = vmul.f32 %v693, 0.2
        %v712 = vmul.f32 %v698, 0.2
        %v713 = vmul.f32 %v703, 0.2
        %v714 = vmul.f32 %v708, 0.2
        %v715 = vld [vmem:[%s390] sm:$0xff]
        %v716 = vld [vmem:[%s390 + $0x8] sm:$0xff]
        %v717 = vld [vmem:[%s390 + $0x10] sm:$0xff]
        %v718 = vld [vmem:[%s390 + $0x18] sm:$0xff]
        %v719 = vadd.f32 %v711, %v715
        %v720 = vadd.f32 %v712, %v716
        %v721 = vadd.f32 %v713, %v717
        %v722 = vadd.f32 %v714, %v718
        %723 = vst [vmem:[%s369] sm:$0xff] %v719
        %724 = vst [vmem:[%s369 + $0x8] sm:$0xff] %v720
        %725 = vst [vmem:[%s369 + $0x10] sm:$0xff] %v721
        %726 = vst [vmem:[%s369 + $0x18] sm:$0xff] %v722
        %v727 = vld [vmem:[%s4] sm:$0x7]
        %v728 = vld [vmem:[%s5] sm:$0x7]
        %v730 = vsel %vm516, %v728, 0
        %732 = vmatprep.subr.mxu0 0.0
        %733 = vmatpush1.msra.mxu0 %v490
        %734 = vmatprep.subr.mxu0 0.0
        %735 = vmatpush1.msra.mxu0 %v495
        %736 = vmatprep.subr.mxu0 0.0
        %737 = vmatpush1.msra.mxu0 %v500
        %738 = vmatprep.subr.mxu0 0.0
        %739 = vmatpush1.msra.mxu0 %v505
        %740 = vmatprep.subr.mxu0 0.0
        %741 = vmatpush1.msra.mxu0 0.0
        %742 = vmatprep.subr.mxu0 0.0
        %743 = vmatpush1.msra.mxu0 0.0
        %744 = vmatprep.subr.mxu0 0.0
        %745 = vmatpush1.msra.mxu0 0.0
        %746 = vmatprep.subr.mxu0 0.0
        %747 = vmatpush1.msra.mxu0 0.0
        %748 = vmatprep.subr.mxu0 0.0
        %749 = vmatpush1.msra.mxu0 0.0
        %750 = vmatprep.subr.mxu0 0.0
        %751 = vmatpush1.msra.mxu0 0.0
        %752 = vmatprep.subr.mxu0 0.0
        %753 = vmatpush1.msra.mxu0 0.0
        %754 = vmatprep.subr.mxu0 0.0
        %755 = vmatpush1.msra.mxu0 0.0
        %756 = vmatprep.subr.mxu0 0.0
        %757 = vmatpush1.msra.mxu0 0.0
        %758 = vmatprep.subr.mxu0 0.0
        %759 = vmatpush1.msra.mxu0 0.0
        %760 = vmatprep.subr.mxu0 0.0
        %761 = vmatpush1.msra.mxu0 0.0
        %762 = vmatprep.subr.mxu0 0.0
        %763 = vmatpush1.msra.mxu0 0.0
        %764 = vmatprep.subr.mxu0 0.0
        %765 = vmatpush1.msra.mxu0 0.0
        %766 = vmatprep.subr.mxu0 0.0
        %767 = vmatpush1.msra.mxu0 0.0
        %768 = vmatprep.subr.mxu0 0.0
        %769 = vmatpush1.msra.mxu0 0.0
        %770 = vmatprep.subr.mxu0 0.0
        %771 = vmatpush1.msra.mxu0 0.0
        %772 = vmatprep.subr.mxu0 0.0
        %773 = vmatpush1.msra.mxu0 0.0
        %774 = vmatprep.subr.mxu0 0.0
        %775 = vmatpush1.msra.mxu0 0.0
        %776 = vmatprep.subr.mxu0 0.0
        %777 = vmatpush1.msra.mxu0 0.0
        %778 = vmatprep.subr.mxu0 0.0
        %779 = vmatpush1.msra.mxu0 0.0
        %780 = vmatprep.subr.mxu0 0.0
        %781 = vmatpush1.msra.mxu0 0.0
        %782 = vmatprep.subr.mxu0 0.0
        %783 = vmatpush1.msra.mxu0 0.0
        %784 = vmatprep.subr.mxu0 0.0
        %785 = vmatpush1.msra.mxu0 0.0
        %786 = vmatprep.subr.mxu0 0.0
        %787 = vmatpush1.msra.mxu0 0.0
        %788 = vmatprep.subr.mxu0 0.0
        %789 = vmatpush1.msra.mxu0 0.0
        %790 = vmatprep.subr.mxu0 0.0
        %791 = vmatpush1.msra.mxu0 0.0
        %792 = vmatprep.subr.mxu0 0.0
        %793 = vmatpush1.msra.mxu0 0.0
        %794 = vmatprep.subr.mxu0 0.0
        %795 = vmatpush1.msra.mxu0 0.0
        %796 = vmatprep.mubr.f32.mxu0 0.0
        %797 = vmatmul.mubr.f32.gmra.mrb[0].mxu0 %v730
        %v798 = vpop.f32.mrb[0].mxu0
        %v799 = vadd.f32 0.0, %v798
        %v800 = vpop.f32.mrb[0].mxu0
        %801 = vdwg.mxu0
        %v803 = vsel %vm516, %v727, 0
        %805 = vmatprep.subr.mxu0 0.0
        %806 = vmatpush1.msra.mxu0 %v403
        %807 = vmatprep.subr.mxu0 0.0
        %808 = vmatpush1.msra.mxu0 %v404
        %809 = vmatprep.subr.mxu0 0.0
        %810 = vmatpush1.msra.mxu0 %v405
        %811 = vmatprep.subr.mxu0 0.0
        %812 = vmatpush1.msra.mxu0 %v406
        %813 = vmatprep.subr.mxu0 0.0
        %814 = vmatpush1.msra.mxu0 0.0
        %815 = vmatprep.subr.mxu0 0.0
        %816 = vmatpush1.msra.mxu0 0.0
        %817 = vmatprep.subr.mxu0 0.0
        %818 = vmatpush1.msra.mxu0 0.0
        %819 = vmatprep.subr.mxu0 0.0
        %820 = vmatpush1.msra.mxu0 0.0
        %821 = vmatprep.subr.mxu0 0.0
        %822 = vmatpush1.msra.mxu0 0.0
        %823 = vmatprep.subr.mxu0 0.0
        %824 = vmatpush1.msra.mxu0 0.0
        %825 = vmatprep.subr.mxu0 0.0
        %826 = vmatpush1.msra.mxu0 0.0
        %827 = vmatprep.subr.mxu0 0.0
        %828 = vmatpush1.msra.mxu0 0.0
        %829 = vmatprep.subr.mxu0 0.0
        %830 = vmatpush1.msra.mxu0 0.0
        %831 = vmatprep.subr.mxu0 0.0
        %832 = vmatpush1.msra.mxu0 0.0
        %833 = vmatprep.subr.mxu0 0.0
        %834 = vmatpush1.msra.mxu0 0.0
        %835 = vmatprep.subr.mxu0 0.0
        %836 = vmatpush1.msra.mxu0 0.0
        %837 = vmatprep.subr.mxu0 0.0
        %838 = vmatpush1.msra.mxu0 0.0
        %839 = vmatprep.subr.mxu0 0.0
        %840 = vmatpush1.msra.mxu0 0.0
        %841 = vmatprep.subr.mxu0 0.0
        %842 = vmatpush1.msra.mxu0 0.0
        %843 = vmatprep.subr.mxu0 0.0
        %844 = vmatpush1.msra.mxu0 0.0
        %845 = vmatprep.subr.mxu0 0.0
        %846 = vmatpush1.msra.mxu0 0.0
        %847 = vmatprep.subr.mxu0 0.0
        %848 = vmatpush1.msra.mxu0 0.0
        %849 = vmatprep.subr.mxu0 0.0
        %850 = vmatpush1.msra.mxu0 0.0
        %851 = vmatprep.subr.mxu0 0.0
        %852 = vmatpush1.msra.mxu0 0.0
        %853 = vmatprep.subr.mxu0 0.0
        %854 = vmatpush1.msra.mxu0 0.0
        %855 = vmatprep.subr.mxu0 0.0
        %856 = vmatpush1.msra.mxu0 0.0
        %857 = vmatprep.subr.mxu0 0.0
        %858 = vmatpush1.msra.mxu0 0.0
        %859 = vmatprep.subr.mxu0 0.0
        %860 = vmatpush1.msra.mxu0 0.0
        %861 = vmatprep.subr.mxu0 0.0
        %862 = vmatpush1.msra.mxu0 0.0
        %863 = vmatprep.subr.mxu0 0.0
        %864 = vmatpush1.msra.mxu0 0.0
        %865 = vmatprep.subr.mxu0 0.0
        %866 = vmatpush1.msra.mxu0 0.0
        %867 = vmatprep.subr.mxu0 0.0
        %868 = vmatpush1.msra.mxu0 0.0
        %869 = vmatprep.mubr.f32.mxu0 0.0
        %870 = vmatmul.mubr.f32.gmra.mrb[0].mxu0 %v803
        %v871 = vpop.f32.mrb[0].mxu0
        %v872 = vadd.f32 %v799, %v871
        %v873 = vpop.f32.mrb[0].mxu0
        %874 = vdwg.mxu0
        %v875 = vmul.f32 %v872, 0.2
        %v876 = vld [vmem:[%s394] sm:$0x7]
        %v877 = vadd.f32 %v875, %v876
        %878 = vst [vmem:[%s398] sm:$0x7] %v877
        %s879 = sand.u32 %s220, 1
        %s880 = scalar_lea.sflag [#allocation3], %s879
        %s881 = sand.u32 %s220, 1
        %s882 = smul.addr %s881, 32
        %s883 = scalar_lea.vmem [#allocation2], %s882
        %p884 = scmp.lt.s32.totalorder %s24, 1
        %s885 = scalar_select %p884, %s24, 1
        %s886 = smul.addr %s885, 4
        %s887 = scalar_lea.vmem %s9, %s886
        // Predicated region
        $region53: #{generator_forward.58} parent=51 // pred_check
          %p888 = pneg %p230
        $region54: #{generator_forward.58} parent=51 // pred_check_branch
          %890 = sbr.rel (%p888) target = $region56
        $region55: #{generator_forward.58} parent=51 // pred_region
          %s892 = ssub.s32 512, 512
          %893 = vsyncadd %s880, %s892
          %s894 = smul.addr %s24, 4
          %s895 = smul.addr %s894, 128
          %s896 = scalar_lea.hbm %s8, %s895
          %s897 = sshll.u32 %s883, 4
          %s898 = int_to_ptr.vmem [resolvable:$true] %s897
          %903 = dma.vmem_to_hbm [thread:$0]  %s898, 512, %s896, %s880, 128, 128, 8
        $region56: #{generator_forward.58} parent=51 // pred_fallthru
          _
        // Predicated region
        $region57: #{generator_forward.58} parent=51 // pred_check
          %p904 = pneg %p256
        $region58: #{generator_forward.58} parent=51 // pred_check_branch
          %906 = sbr.rel (%p904) target = $region60
        $region59: #{generator_forward.58} parent=51 // pred_region
          _
        $region60: #{generator_forward.58} parent=51 // pred_fallthru
          _
      $region52: #{generator_forward.58} parent=5 // pred_fallthru
        _
      %p907 = scmp.le.s32.totalorder 2, %s19
      // Predicated region
      $region61: #{generator_forward.58} parent=5 // pred_check
        %p908 = pneg %p907
      $region62: #{generator_forward.58} parent=5 // pred_check_branch
        %910 = sbr.rel (%p908) target = $region64
      $region63: #{generator_forward.58} parent=5 // pred_region
        %s911 = ssub.s32 %s19, 2
        // Predicated region
        $region65: #{generator_forward.58} parent=63 // pred_check
          %p912 = pneg %p236
        $region66: #{generator_forward.58} parent=63 // pred_check_branch
          %914 = sbr.rel (%p912) target = $region68
        $region67: #{generator_forward.58} parent=63 // pred_region
          %s915 = sand.u32 %s221, 1
          %s916 = scalar_lea.sflag [#allocation3], %s915
          %s917 = sand.u32 %s221, 1
          %s918 = smul.addr %s917, 32
          %s919 = scalar_lea.vmem [#allocation2], %s918
          %920 = dma.done %s916, 512
        $region68: #{generator_forward.58} parent=63 // pred_fallthru
          _
        // Predicated region
        $region69: #{generator_forward.58} parent=63 // pred_check
          %p921 = pneg %p262
        $region70: #{generator_forward.58} parent=63 // pred_check_branch
          %923 = sbr.rel (%p921) target = $region72
        $region71: #{generator_forward.58} parent=63 // pred_region
          %p924 = scmp.lt.s32.totalorder %s25, 1
          %s925 = scalar_select %p924, %s25, 1
          %s926 = smul.addr %s925, 4
          %s927 = scalar_lea.vmem %s9, %s926
        $region72: #{generator_forward.58} parent=63 // pred_fallthru
          _
      $region64: #{generator_forward.58} parent=5 // pred_fallthru
        _
    $region6: #{generator_forward.58} parent=1 // loop_footer
      %s23 = sadd.s32 1, %s19
    $region7: #{generator_forward.58} parent=1 // loop_footer_branch
      %18 = sbr.rel target = $region3
    $region8: #{generator_forward.58} parent=1 // loop_exit
      _
    %928 = vsyncpa [#allocation3], 1
    %s929 = scalar_lea.sflag [#allocation3], 1
    %930 = vsyncpa %s929, 1

// kernel: generator_forward.43
$region0: #{generator_forward.43}
  #allocation0 [shape = 'u32[]', space=smem, size = 0x4, offset = 0x4, fixed_abs, tag = 'smem constant byte address 0x4 - core index']
  #allocation1 [shape = 'u32[144,128]{1,0:T(1,128)}', space=vmem, size = 0x12000, scoped, tag = 'internal scratch']
  %s0 = inlined_call_operand.vmem [shape: f32[2,32,128], index: 0, kind: input, shape index: {}, may-alias: {0,6}]
  %s1 = inlined_call_operand.vmem [shape: f32[2,128,128], index: 1, kind: input, shape index: {}]
  %s2 = inlined_call_operand.vmem [shape: f32[32,32], index: 2, kind: input, shape index: {}]
  %s3 = inlined_call_operand.vmem [shape: f32[32,32], index: 3, kind: input, shape index: {}]
  %s4 = inlined_call_operand.vmem [shape: f32[3,32], index: 4, kind: input, shape index: {}]
  %s5 = inlined_call_operand.vmem [shape: f32[3,32], index: 5, kind: input, shape index: {}]
  %s6 = inlined_call_operand.vmem [shape: f32[2,32,128], index: 6, kind: input, shape index: {}, may-alias: {0,6}]
  %s7 = inlined_call_operand.vmem [shape: f32[2,3,128], index: 7, kind: input, shape index: {}]
  %s8 = inlined_call_operand.vmem [shape: f32[2,32,128], index: 8, kind: output, shape index: {0}]
  %s9 = inlined_call_operand.vmem [shape: f32[2,3,128], index: 9, kind: output, shape index: {1}]
  %10 = xla_tuple %s8, %s9
  %s11 = sld [smem:[#allocation0]]
  $region73: #{generator_forward.43} parent=0
    _
  %s13 = ssub.s32 1, %s11
  %s14 = scalar_select 0, %s13, %s11
  loop: start=0, step=1, limit=4
  $region2: #{generator_forward.43} parent=0 // loop_pre_header
    _
  $region3: #{generator_forward.43} parent=0 // loop_header
    %s16 = sphi 0, %s20
    %p17 = scmp.ge.s32.totalorder %s16, 4
    %s26 = sphi 0, %s28
    %s29 = sphi 0, %s26
    %s30 = sphi 0, %s29
    %s46 = sphi 0, %s30
    %s52 = sphi 0, %s54
    %s55 = sphi 0, %s52
    %s56 = sphi 0, %s55
    %s72 = sphi 0, %s56
    %s76 = sphi 0, %s76
    %s78 = sphi 0, %s76
    %s79 = sphi 0, %s78
    %s93 = sphi 0, %s79
    %s97 = sphi 0, %s97
    %s99 = sphi 0, %s97
    %s100 = sphi 0, %s99
    %s114 = sphi 0, %s100
    %s118 = sphi 0, %s118
    %s120 = sphi 0, %s118
    %s121 = sphi 0, %s120
    %s135 = sphi 0, %s121
    %s139 = sphi 0, %s139
    %s141 = sphi 0, %s139
    %s142 = sphi 0, %s141
    %s156 = sphi 0, %s142
    %s162 = sphi 0, %s164
    %s165 = sphi 0, %s162
    %s166 = sphi 0, %s165
    %s182 = sphi 0, %s166
    %s188 = sphi 0, %s190
    %s191 = sphi 0, %s188
    %s192 = sphi 0, %s191
    %s208 = sphi 0, %s192
    %s214 = sphi 0, %s216
    %s217 = sphi 0, %s214
    %s218 = sphi 0, %s217
    %s234 = sphi 0, %s218
    %s240 = sphi 0, %s242
    %s243 = sphi 0, %s240
    %s244 = sphi 0, %s243
    %s260 = sphi 0, %s244
  $region4: #{generator_forward.43} parent=0 // loop_header_branch
    %19 = sbr.rel (%p17) target = $region8
  $region5: #{generator_forward.43} parent=0 // loop_body
    %s21 = ssub.s32 %s16, 1
    %s22 = ssub.s32 %s16, 2
    %s23 = sadd.s32 %s16, 1
    %s24 = ssub.s32 %s16, %s23
    %p25 = scmp.eq.s32.totalorder %s24, 0
    %s27 = sadd.s32 %s26, 1
    %s28 = scalar_select %p25, %s26, %s27
    %p31 = pneg %p25
    %p32 = scmp.eq.s32.totalorder %s16, 1
    %p33 = por %p31, %p32
    %p34 = scmp.ne.s32.totalorder %s26, %s29
    %p35 = scmp.eq.s32.totalorder %s16, 0
    %p36 = por %p34, %p35
    %p37 = scmp.ne.s32.totalorder %s26, %s29
    %p38 = scmp.eq.s32.totalorder %s21, 1
    %p39 = por %p37, %p38
    %p40 = scmp.ne.s32.totalorder %s29, %s30
    %p41 = scmp.eq.s32.totalorder %s21, 0
    %p42 = por %p40, %p41
    %p43 = scmp.ne.s32.totalorder %s29, %s30
    %p44 = scmp.eq.s32.totalorder %s22, 1
    %p45 = por %p43, %p44
    %p47 = scmp.ne.s32.totalorder %s30, %s46
    %p48 = scmp.eq.s32.totalorder %s22, 0
    %p49 = por %p47, %p48
    %s50 = ssub.s32 %s16, %s23
    %p51 = scmp.eq.s32.totalorder %s50, 0
    %s53 = sadd.s32 %s52, 1
    %s54 = scalar_select %p51, %s52, %s53
    %p57 = pneg %p51
    %p58 = scmp.eq.s32.totalorder %s16, 1
    %p59 = por %p57, %p58
    %p60 = scmp.ne.s32.totalorder %s52, %s55
    %p61 = scmp.eq.s32.totalorder %s16, 0
    %p62 = por %p60, %p61
    %p63 = scmp.ne.s32.totalorder %s52, %s55
    %p64 = scmp.eq.s32.totalorder %s21, 1
    %p65 = por %p63, %p64
    %p66 = scmp.ne.s32.totalorder %s55, %s56
    %p67 = scmp.eq.s32.totalorder %s21, 0
    %p68 = por %p66, %p67
    %p69 = scmp.ne.s32.totalorder %s55, %s56
    %p70 = scmp.eq.s32.totalorder %s22, 1
    %p71 = por %p69, %p70
    %p73 = scmp.ne.s32.totalorder %s56, %s72
    %p74 = scmp.eq.s32.totalorder %s22, 0
    %p75 = por %p73, %p74
    %s77 = sadd.s32 %s76, 1
    %p80 = scmp.eq.s32.totalorder %s16, 1
    %p81 = scmp.ne.s32.totalorder %s76, %s78
    %p82 = scmp.eq.s32.totalorder %s16, 0
    %p83 = por %p81, %p82
    %p84 = scmp.ne.s32.totalorder %s76, %s78
    %p85 = scmp.eq.s32.totalorder %s21, 1
    %p86 = por %p84, %p85
    %p87 = scmp.ne.s32.totalorder %s78, %s79
    %p88 = scmp.eq.s32.totalorder %s21, 0
    %p89 = por %p87, %p88
    %p90 = scmp.ne.s32.totalorder %s78, %s79
    %p91 = scmp.eq.s32.totalorder %s22, 1
    %p92 = por %p90, %p91
    %p94 = scmp.ne.s32.totalorder %s79, %s93
    %p95 = scmp.eq.s32.totalorder %s22, 0
    %p96 = por %p94, %p95
    %s98 = sadd.s32 %s97, 1
    %p101 = scmp.eq.s32.totalorder %s16, 1
    %p102 = scmp.ne.s32.totalorder %s97, %s99
    %p103 = scmp.eq.s32.totalorder %s16, 0
    %p104 = por %p102, %p103
    %p105 = scmp.ne.s32.totalorder %s97, %s99
    %p106 = scmp.eq.s32.totalorder %s21, 1
    %p107 = por %p105, %p106
    %p108 = scmp.ne.s32.totalorder %s99, %s100
    %p109 = scmp.eq.s32.totalorder %s21, 0
    %p110 = por %p108, %p109
    %p111 = scmp.ne.s32.totalorder %s99, %s100
    %p112 = scmp.eq.s32.totalorder %s22, 1
    %p113 = por %p111, %p112
    %p115 = scmp.ne.s32.totalorder %s100, %s114
    %p116 = scmp.eq.s32.totalorder %s22, 0
    %p117 = por %p115, %p116
    %s119 = sadd.s32 %s118, 1
    %p122 = scmp.eq.s32.totalorder %s16, 1
    %p123 = scmp.ne.s32.totalorder %s118, %s120
    %p124 = scmp.eq.s32.totalorder %s16, 0
    %p125 = por %p123, %p124
    %p126 = scmp.ne.s32.totalorder %s118, %s120
    %p127 = scmp.eq.s32.totalorder %s21, 1
    %p128 = por %p126, %p127
    %p129 = scmp.ne.s32.totalorder %s120, %s121
    %p130 = scmp.eq.s32.totalorder %s21, 0
    %p131 = por %p129, %p130
    %p132 = scmp.ne.s32.totalorder %s120, %s121
    %p133 = scmp.eq.s32.totalorder %s22, 1
    %p134 = por %p132, %p133
    %p136 = scmp.ne.s32.totalorder %s121, %s135
    %p137 = scmp.eq.s32.totalorder %s22, 0
    %p138 = por %p136, %p137
    %s140 = sadd.s32 %s139, 1
    %p143 = scmp.eq.s32.totalorder %s16, 1
    %p144 = scmp.ne.s32.totalorder %s139, %s141
    %p145 = scmp.eq.s32.totalorder %s16, 0
    %p146 = por %p144, %p145
    %p147 = scmp.ne.s32.totalorder %s139, %s141
    %p148 = scmp.eq.s32.totalorder %s21, 1
    %p149 = por %p147, %p148
    %p150 = scmp.ne.s32.totalorder %s141, %s142
    %p151 = scmp.eq.s32.totalorder %s21, 0
    %p152 = por %p150, %p151
    %p153 = scmp.ne.s32.totalorder %s141, %s142
    %p154 = scmp.eq.s32.totalorder %s22, 1
    %p155 = por %p153, %p154
    %p157 = scmp.ne.s32.totalorder %s142, %s156
    %p158 = scmp.eq.s32.totalorder %s22, 0
    %p159 = por %p157, %p158
    %s160 = ssub.s32 %s16, %s23
    %p161 = scmp.eq.s32.totalorder %s160, 0
    %s163 = sadd.s32 %s162, 1
    %s164 = scalar_select %p161, %s162, %s163
    %p167 = pneg %p161
    %p168 = scmp.eq.s32.totalorder %s16, 1
    %p169 = por %p167, %p168
    %p170 = scmp.ne.s32.totalorder %s162, %s165
    %p171 = scmp.eq.s32.totalorder %s16, 0
    %p172 = por %p170, %p171
    %p173 = scmp.ne.s32.totalorder %s162, %s165
    %p174 = scmp.eq.s32.totalorder %s21, 1
    %p175 = por %p173, %p174
    %p176 = scmp.ne.s32.totalorder %s165, %s166
    %p177 = scmp.eq.s32.totalorder %s21, 0
    %p178 = por %p176, %p177
    %p179 = scmp.ne.s32.totalorder %s165, %s166
    %p180 = scmp.eq.s32.totalorder %s22, 1
    %p181 = por %p179, %p180
    %p183 = scmp.ne.s32.totalorder %s166, %s182
    %p184 = scmp.eq.s32.totalorder %s22, 0
    %p185 = por %p183, %p184
    %s186 = ssub.s32 %s16, %s23
    %p187 = scmp.eq.s32.totalorder %s186, 0
    %s189 = sadd.s32 %s188, 1
    %s190 = scalar_select %p187, %s188, %s189
    %p193 = pneg %p187
    %p194 = scmp.eq.s32.totalorder %s16, 1
    %p195 = por %p193, %p194
    %p196 = scmp.ne.s32.totalorder %s188, %s191
    %p197 = scmp.eq.s32.totalorder %s16, 0
    %p198 = por %p196, %p197
    %p199 = scmp.ne.s32.totalorder %s188, %s191
    %p200 = scmp.eq.s32.totalorder %s21, 1
    %p201 = por %p199, %p200
    %p202 = scmp.ne.s32.totalorder %s191, %s192
    %p203 = scmp.eq.s32.totalorder %s21, 0
    %p204 = por %p202, %p203
    %p205 = scmp.ne.s32.totalorder %s191, %s192
    %p206 = scmp.eq.s32.totalorder %s22, 1
    %p207 = por %p205, %p206
    %p209 = scmp.ne.s32.totalorder %s192, %s208
    %p210 = scmp.eq.s32.totalorder %s22, 0
    %p211 = por %p209, %p210
    %s212 = ssub.s32 %s16, %s23
    %p213 = scmp.eq.s32.totalorder %s212, 0
    %s215 = sadd.s32 %s214, 1
    %s216 = scalar_select %p213, %s214, %s215
    %p219 = pneg %p213
    %p220 = scmp.eq.s32.totalorder %s16, 1
    %p221 = por %p219, %p220
    %p222 = scmp.ne.s32.totalorder %s214, %s217
    %p223 = scmp.eq.s32.totalorder %s16, 0
    %p224 = por %p222, %p223
    %p225 = scmp.ne.s32.totalorder %s214, %s217
    %p226 = scmp.eq.s32.totalorder %s21, 1
    %p227 = por %p225, %p226
    %p228 = scmp.ne.s32.totalorder %s217, %s218
    %p229 = scmp.eq.s32.totalorder %s21, 0
    %p230 = por %p228, %p229
    %p231 = scmp.ne.s32.totalorder %s217, %s218
    %p232 = scmp.eq.s32.totalorder %s22, 1
    %p233 = por %p231, %p232
    %p235 = scmp.ne.s32.totalorder %s218, %s234
    %p236 = scmp.eq.s32.totalorder %s22, 0
    %p237 = por %p235, %p236
    %s238 = ssub.s32 %s16, %s23
    %p239 = scmp.eq.s32.totalorder %s238, 0
    %s241 = sadd.s32 %s240, 1
    %s242 = scalar_select %p239, %s240, %s241
    %p245 = pneg %p239
    %p246 = scmp.eq.s32.totalorder %s16, 1
    %p247 = por %p245, %p246
    %p248 = scmp.ne.s32.totalorder %s240, %s243
    %p249 = scmp.eq.s32.totalorder %s16, 0
    %p250 = por %p248, %p249
    %p251 = scmp.ne.s32.totalorder %s240, %s243
    %p252 = scmp.eq.s32.totalorder %s21, 1
    %p253 = por %p251, %p252
    %p254 = scmp.ne.s32.totalorder %s243, %s244
    %p255 = scmp.eq.s32.totalorder %s21, 0
    %p256 = por %p254, %p255
    %p257 = scmp.ne.s32.totalorder %s243, %s244
    %p258 = scmp.eq.s32.totalorder %s22, 1
    %p259 = por %p257, %p258
    %p261 = scmp.ne.s32.totalorder %s244, %s260
    %p262 = scmp.eq.s32.totalorder %s22, 0
    %p263 = por %p261, %p262
    %p264 = scmp.le.s32.totalorder 1, %s16
    %p265 = scmp.lt.s32.totalorder %s16, 3
    %p266 = pnand %p264, %p265
    %p267 = pneg %p266
    // Predicated region
    $region9: #{generator_forward.43} parent=5 // pred_check
      _
    $region10: #{generator_forward.43} parent=5 // pred_check_branch
      %269 = sbr.rel (%p266) target = $region12
    $region11: #{generator_forward.43} parent=5 // pred_region
      %s270 = ssub.s32 %s16, 1
      // Predicated region
      $region13: #{generator_forward.43} parent=11 // pred_check
        %p271 = pneg %p89
      $region14: #{generator_forward.43} parent=11 // pred_check_branch
        %273 = sbr.rel (%p271) target = $region16
      $region15: #{generator_forward.43} parent=11 // pred_region
        _
      $region16: #{generator_forward.43} parent=11 // pred_fallthru
        _
      // Predicated region
      $region17: #{generator_forward.43} parent=11 // pred_check
        %p274 = pneg %p110
      $region18: #{generator_forward.43} parent=11 // pred_check_branch
        %276 = sbr.rel (%p274) target = $region20
      $region19: #{generator_forward.43} parent=11 // pred_region
        _
      $region20: #{generator_forward.43} parent=11 // pred_fallthru
        _
      // Predicated region
      $region21: #{generator_forward.43} parent=11 // pred_check
        %p277 = pneg %p131
      $region22: #{generator_forward.43} parent=11 // pred_check_branch
        %279 = sbr.rel (%p277) target = $region24
      $region23: #{generator_forward.43} parent=11 // pred_region
        _
      $region24: #{generator_forward.43} parent=11 // pred_fallthru
        _
      // Predicated region
      $region25: #{generator_forward.43} parent=11 // pred_check
        %p280 = pneg %p152
      $region26: #{generator_forward.43} parent=11 // pred_check_branch
        %282 = sbr.rel (%p280) target = $region28
      $region27: #{generator_forward.43} parent=11 // pred_region
        _
      $region28: #{generator_forward.43} parent=11 // pred_fallthru
        _
    $region12: #{generator_forward.43} parent=5 // pred_fallthru
      _
    %p283 = scmp.lt.s32.totalorder %s16, 2
    // Predicated region
    $region29: #{generator_forward.43} parent=5 // pred_check
      %p284 = pneg %p283
    $region30: #{generator_forward.43} parent=5 // pred_check_branch
      %286 = sbr.rel (%p284) target = $region32
    $region31: #{generator_forward.43} parent=5 // pred_region
      // Predicated region
      $region33: #{generator_forward.43} parent=31 // pred_check
        %p287 = pneg %p36
      $region34: #{generator_forward.43} parent=31 // pred_check_branch
        %289 = sbr.rel (%p287) target = $region36
      $region35: #{generator_forward.43} parent=31 // pred_region
        %p290 = scmp.lt.s32.totalorder %s16, 1
        %s291 = scalar_select %p290, %s16, 1
        %s292 = smul.addr %s291, 4
        %s293 = smul.addr %s292, 8
        %s294 = scalar_lea.vmem %s0, %s293
      $region36: #{generator_forward.43} parent=31 // pred_fallthru
        _
      // Predicated region
      $region37: #{generator_forward.43} parent=31 // pred_check
        %p295 = pneg %p62
      $region38: #{generator_forward.43} parent=31 // pred_check_branch
        %297 = sbr.rel (%p295) target = $region40
      $region39: #{generator_forward.43} parent=31 // pred_region
        %p298 = scmp.lt.s32.totalorder %s16, 1
        %s299 = scalar_select %p298, %s16, 1
        %s300 = smul.addr %s299, 16
        %s301 = smul.addr %s300, 8
        %s302 = scalar_lea.vmem %s1, %s301
      $region40: #{generator_forward.43} parent=31 // pred_fallthru
        _
      // Predicated region
      $region41: #{generator_forward.43} parent=31 // pred_check
        %p303 = pneg %p172
      $region42: #{generator_forward.43} parent=31 // pred_check_branch
        %305 = sbr.rel (%p303) target = $region44
      $region43: #{generator_forward.43} parent=31 // pred_region
        %p306 = scmp.lt.s32.totalorder %s16, 1
        %s307 = scalar_select %p306, %s16, 1
        %s308 = smul.addr %s307, 4
        %s309 = smul.addr %s308, 8
        %s310 = scalar_lea.vmem %s6, %s309
      $region44: #{generator_forward.43} parent=31 // pred_fallthru
        _
      // Predicated region
      $region45: #{generator_forward.43} parent=31 // pred_check
        %p311 = pneg %p198
      $region46: #{generator_forward.43} parent=31 // pred_check_branch
        %313 = sbr.rel (%p311) target = $region48
      $region47: #{generator_forward.43} parent=31 // pred_region
        %p314 = scmp.lt.s32.totalorder %s16, 1
        %s315 = scalar_select %p314, %s16, 1
        %s316 = smul.addr %s315, 4
        %s317 = scalar_lea.vmem %s7, %s316
      $region48: #{generator_forward.43} parent=31 // pred_fallthru
        _
    $region32: #{generator_forward.43} parent=5 // pred_fallthru
      _
    %p318 = scmp.le.s32.totalorder 1, %s16
    %p319 = scmp.lt.s32.totalorder %s16, 3
    %p320 = pnand %p318, %p319
    %p321 = pneg %p320
    // Predicated region
    $region49: #{generator_forward.43} parent=5 // pred_check
      _
    $region50: #{generator_forward.43} parent=5 // pred_check_branch
      %323 = sbr.rel (%p320) target = $region52
    $region51: #{generator_forward.43} parent=5 // pred_region
      %s324 = ssub.s32 %s16, 1
      %p325 = scmp.lt.s32.totalorder %s21, 1
      %s326 = scalar_select %p325, %s21, 1
      %s327 = smul.addr %s326, 4
      %s328 = smul.addr %s327, 8
      %s329 = scalar_lea.vmem %s0, %s328
      %p330 = pneg %p42
      %p331 = pneg %p39
      %p332 = scmp.lt.s32.totalorder %s21, 1
      %s333 = scalar_select %p332, %s21, 1
      %s334 = smul.addr %s333, 16
      %s335 = smul.addr %s334, 8
      %s336 = scalar_lea.vmem %s1, %s335
      %p337 = pneg %p68
      %p338 = pneg %p65
      %p339 = pneg %p89
      %p340 = pneg %p86
      %p341 = pneg %p110
      %p342 = pneg %p107
      %p343 = pneg %p131
      %p344 = pneg %p128
      %p345 = pneg %p152
      %p346 = pneg %p149
      %p347 = scmp.lt.s32.totalorder %s21, 1
      %s348 = scalar_select %p347, %s21, 1
      %s349 = smul.addr %s348, 4
      %s350 = smul.addr %s349, 8
      %s351 = scalar_lea.vmem %s6, %s350
      %p352 = pneg %p178
      %p353 = pneg %p175
      %p354 = scmp.lt.s32.totalorder %s21, 1
      %s355 = scalar_select %p354, %s21, 1
      %s356 = smul.addr %s355, 4
      %s357 = scalar_lea.vmem %s7, %s356
      %p358 = pneg %p204
      %p359 = pneg %p201
      %p360 = pneg %p230
      %p361 = pneg %p227
      %p362 = scmp.lt.s32.totalorder %s21, 1
      %s363 = scalar_select %p362, %s21, 1
      %s364 = smul.addr %s363, 4
      %s365 = smul.addr %s364, 8
      %s366 = scalar_lea.vmem %s8, %s365
      %p367 = pneg %p256
      %p368 = pneg %p253
      %p369 = scmp.lt.s32.totalorder %s21, 1
      %s370 = scalar_select %p369, %s21, 1
      %s371 = smul.addr %s370, 4
      %s372 = scalar_lea.vmem %s9, %s371
      %p373 = scmp.lt.s32.totalorder %s21, 1
      %s374 = scalar_select %p373, %s21, 1
      %s375 = smul.addr %s374, 4
      %s376 = smul.addr %s375, 8
      %s377 = scalar_lea.vmem %s0, %s376
      %p378 = scmp.lt.s32.totalorder %s21, 1
      %s379 = scalar_select %p378, %s21, 1
      %s380 = smul.addr %s379, 16
      %s381 = smul.addr %s380, 8
      %s382 = scalar_lea.vmem %s1, %s381
      %p383 = scmp.lt.s32.totalorder %s21, 1
      %s384 = scalar_select %p383, %s21, 1
      %s385 = smul.addr %s384, 4
      %s386 = smul.addr %s385, 8
      %s387 = scalar_lea.vmem %s6, %s386
      %p388 = scmp.lt.s32.totalorder %s21, 1
      %s389 = scalar_select %p388, %s21, 1
      %s390 = smul.addr %s389, 4
      %s391 = scalar_lea.vmem %s7, %s390
      %p392 = scmp.lt.s32.totalorder %s21, 1
      %s393 = scalar_select %p392, %s21, 1
      %s394 = smul.addr %s393, 4
      %s395 = smul.addr %s394, 8
      %s396 = scalar_lea.vmem %s8, %s395
      %p397 = scmp.lt.s32.totalorder %s21, 1
      %s398 = scalar_select %p397, %s21, 1
      %s399 = smul.addr %s398, 4
      %s400 = scalar_lea.vmem %s9, %s399
      %v401 = vld [vmem:[%s377] sm:$0xff]
      %v402 = vld [vmem:[%s377 + $0x8] sm:$0xff]
      %v403 = vld [vmem:[%s377 + $0x10] sm:$0xff]
      %v404 = vld [vmem:[%s377 + $0x18] sm:$0xff]
      %v405 = vmax.f32 %v401, 0.0
      %v406 = vmax.f32 %v402, 0.0
      %v407 = vmax.f32 %v403, 0.0
      %v408 = vmax.f32 %v404, 0.0
      %v409 = vld [vmem:[%s382] sm:$0xff]
      %v410 = vld [vmem:[%s382 + $0x8] sm:$0xff]
      %v411 = vld [vmem:[%s382 + $0x10] sm:$0xff]
      %v412 = vld [vmem:[%s382 + $0x18] sm:$0xff]
      %v413 = vld [vmem:[%s382 + $0x20] sm:$0xff]
      %v414 = vld [vmem:[%s382 + $0x28] sm:$0xff]
      %v415 = vld [vmem:[%s382 + $0x30] sm:$0xff]
      %v416 = vld [vmem:[%s382 + $0x38] sm:$0xff]
      %v417 = vld [vmem:[%s382 + $0x40] sm:$0xff]
      %v418 = vld [vmem:[%s382 + $0x48] sm:$0xff]
      %v419 = vld [vmem:[%s382 + $0x50] sm:$0xff]
      %v420 = vld [vmem:[%s382 + $0x58] sm:$0xff]
      %v421 = vld [vmem:[%s382 + $0x60] sm:$0xff]
      %v422 = vld [vmem:[%s382 + $0x68] sm:$0xff]
      %v423 = vld [vmem:[%s382 + $0x70] sm:$0xff]
      %v424 = vld [vmem:[%s382 + $0x78] sm:$0xff]
      %425 = vmatprep.subr.mxu0 0.0
      %426 = vmatpush1.msra.mxu0 %v409
      %427 = vmatprep.subr.mxu0 0.0
      %428 = vmatpush1.msra.mxu0 %v410
      %429 = vmatprep.subr.mxu0 0.0
      %430 = vmatpush1.msra.mxu0 %v411
      %431 = vmatprep.subr.mxu0 0.0
      %432 = vmatpush1.msra.mxu0 %v412
      %433 = vmatprep.subr.mxu0 0.0
      %434 = vmatpush1.msra.mxu0 %v413
      %435 = vmatprep.subr.mxu0 0.0
      %436 = vmatpush1.msra.mxu0 %v414
      %437 = vmatprep.subr.mxu0 0.0
      %438 = vmatpush1.msra.mxu0 %v415
      %439 = vmatprep.subr.mxu0 0.0
      %440 = vmatpush1.msra.mxu0 %v416
      %441 = vmatprep.subr.mxu0 0.0
      %442 = vmatpush1.msra.mxu0 %v417
      %443 = vmatprep.subr.mxu0 0.0
      %444 = vmatpush1.msra.mxu0 %v418
      %445 = vmatprep.subr.mxu0 0.0
      %446 = vmatpush1.msra.mxu0 %v419
      %447 = vmatprep.subr.mxu0 0.0
      %448 = vmatpush1.msra.mxu0 %v420
      %449 = vmatprep.subr.mxu0 0.0
      %450 = vmatpush1.msra.mxu0 %v421
      %451 = vmatprep.subr.mxu0 0.0
      %452 = vmatpush1.msra.mxu0 %v422
      %453 = vmatprep.subr.mxu0 0.0
      %454 = vmatpush1.msra.mxu0 %v423
      %455 = vmatprep.subr.mxu0 0.0
      %456 = vmatpush1.msra.mxu0 %v424
      %457 = vmatprep.subr.mxu0 0.0
      %458 = vmatpush1.msra.mxu0 0.0
      %459 = vmatprep.subr.mxu0 0.0
      %460 = vmatpush1.msra.mxu0 0.0
      %461 = vmatprep.subr.mxu0 0.0
      %462 = vmatpush1.msra.mxu0 0.0
      %463 = vmatprep.subr.mxu0 0.0
      %464 = vmatpush1.msra.mxu0 0.0
      %465 = vmatprep.subr.mxu0 0.0
      %466 = vmatpush1.msra.mxu0 0.0
      %467 = vmatprep.subr.mxu0 0.0
      %468 = vmatpush1.msra.mxu0 0.0
      %469 = vmatprep.subr.mxu0 0.0
      %470 = vmatpush1.msra.mxu0 0.0
      %471 = vmatprep.subr.mxu0 0.0
      %472 = vmatpush1.msra.mxu0 0.0
      %473 = vmatprep.subr.mxu0 0.0
      %474 = vmatpush1.msra.mxu0 0.0
      %475 = vmatprep.subr.mxu0 0.0
      %476 = vmatpush1.msra.mxu0 0.0
      %477 = vmatprep.subr.mxu0 0.0
      %478 = vmatpush1.msra.mxu0 0.0
      %479 = vmatprep.subr.mxu0 0.0
      %480 = vmatpush1.msra.mxu0 0.0
      %481 = vmatprep.subr.mxu0 0.0
      %482 = vmatpush1.msra.mxu0 0.0
      %483 = vmatprep.subr.mxu0 0.0
      %484 = vmatpush1.msra.mxu0 0.0
      %485 = vmatprep.subr.mxu0 0.0
      %486 = vmatpush1.msra.mxu0 0.0
      %487 = vmatprep.subr.mxu0 0.0
      %488 = vmatpush1.msra.mxu0 0.0
      %489 = vmatprep.mubr.f32.mxu0 0.0
      %490 = vmatmul.mubr.f32.gmra.mrb[0].mxu0 %v405
      %v491 = vpop.f32.mrb[0].mxu0
      %v492 = vadd.f32 0.0, %v491
      %v493 = vpop.f32.mrb[0].mxu0
      %494 = vmatprep.mubr.f32.mxu0 0.0
      %495 = vmatmul.mubr.f32.gmra.mrb[0].mxu0 %v406
      %v496 = vpop.f32.mrb[0].mxu0
      %v497 = vadd.f32 0.0, %v496
      %v498 = vpop.f32.mrb[0].mxu0
      %499 = vmatprep.mubr.f32.mxu0 0.0
      %500 = vmatmul.mubr.f32.gmra.mrb[0].mxu0 %v407
      %v501 = vpop.f32.mrb[0].mxu0
      %v502 = vadd.f32 0.0, %v501
      %v503 = vpop.f32.mrb[0].mxu0
      %504 = vmatprep.mubr.f32.mxu0 0.0
      %505 = vmatmul.mubr.f32.gmra.mrb[0].mxu0 %v408
      %v506 = vpop.f32.mrb[0].mxu0
      %v507 = vadd.f32 0.0, %v506
      %v508 = vpop.f32.mrb[0].mxu0
      %509 = vdwg.mxu0
      %v510 = vld [vmem:[%s2] sm:$0xff]
      %v511 = vld [vmem:[%s2 + $0x8] sm:$0xff]
      %v512 = vld [vmem:[%s2 + $0x10] sm:$0xff]
      %v513 = vld [vmem:[%s2 + $0x18] sm:$0xff]
      %v514 = vld [vmem:[%s3] sm:$0xff]
      %v515 = vld [vmem:[%s3 + $0x8] sm:$0xff]
      %v516 = vld [vmem:[%s3 + $0x10] sm:$0xff]
      %v517 = vld [vmem:[%s3 + $0x18] sm:$0xff]
      %vm518 = vcmask 261120
      %v520 = vsel %vm518, %v514, 0
      %v523 = vsel %vm518, %v515, 0
      %v526 = vsel %vm518, %v516, 0
      %v529 = vsel %vm518, %v517, 0
      %531 = vmatprep.subr.mxu0 0.0
      %532 = vmatpush1.msra.mxu0 %v492
      %533 = vmatprep.subr.mxu0 0.0
      %534 = vmatpush1.msra.mxu0 %v497
      %535 = vmatprep.subr.mxu0 0.0
      %536 = vmatpush1.msra.mxu0 %v502
      %537 = vmatprep.subr.mxu0 0.0
      %538 = vmatpush1.msra.mxu0 %v507
      %539 = vmatprep.subr.mxu0 0.0
      %540 = vmatpush1.msra.mxu0 0.0
      %541 = vmatprep.subr.mxu0 0.0
      %542 = vmatpush1.msra.mxu0 0.0
      %543 = vmatprep.subr.mxu0 0.0
      %544 = vmatpush1.msra.mxu0 0.0
      %545 = vmatprep.subr.mxu0 0.0
      %546 = vmatpush1.msra.mxu0 0.0
      %547 = vmatprep.subr.mxu0 0.0
      %548 = vmatpush1.msra.mxu0 0.0
      %549 = vmatprep.subr.mxu0 0.0
      %550 = vmatpush1.msra.mxu0 0.0
      %551 = vmatprep.subr.mxu0 0.0
      %552 = vmatpush1.msra.mxu0 0.0
      %553 = vmatprep.subr.mxu0 0.0
      %554 = vmatpush1.msra.mxu0 0.0
      %555 = vmatprep.subr.mxu0 0.0
      %556 = vmatpush1.msra.mxu0 0.0
      %557 = vmatprep.subr.mxu0 0.0
      %558 = vmatpush1.msra.mxu0 0.0
      %559 = vmatprep.subr.mxu0 0.0
      %560 = vmatpush1.msra.mxu0 0.0
      %561 = vmatprep.subr.mxu0 0.0
      %562 = vmatpush1.msra.mxu0 0.0
      %563 = vmatprep.subr.mxu0 0.0
      %564 = vmatpush1.msra.mxu0 0.0
      %565 = vmatprep.subr.mxu0 0.0
      %566 = vmatpush1.msra.mxu0 0.0
      %567 = vmatprep.subr.mxu0 0.0
      %568 = vmatpush1.msra.mxu0 0.0
      %569 = vmatprep.subr.mxu0 0.0
      %570 = vmatpush1.msra.mxu0 0.0
      %571 = vmatprep.subr.mxu0 0.0
      %572 = vmatpush1.msra.mxu0 0.0
      %573 = vmatprep.subr.mxu0 0.0
      %574 = vmatpush1.msra.mxu0 0.0
      %575 = vmatprep.subr.mxu0 0.0
      %576 = vmatpush1.msra.mxu0 0.0
      %577 = vmatprep.subr.mxu0 0.0
      %578 = vmatpush1.msra.mxu0 0.0
      %579 = vmatprep.subr.mxu0 0.0
      %580 = vmatpush1.msra.mxu0 0.0
      %581 = vmatprep.subr.mxu0 0.0
      %582 = vmatpush1.msra.mxu0 0.0
      %583 = vmatprep.subr.mxu0 0.0
      %584 = vmatpush1.msra.mxu0 0.0
      %585 = vmatprep.subr.mxu0 0.0
      %586 = vmatpush1.msra.mxu0 0.0
      %587 = vmatprep.subr.mxu0 0.0
      %588 = vmatpush1.msra.mxu0 0.0
      %589 = vmatprep.subr.mxu0 0.0
      %590 = vmatpush1.msra.mxu0 0.0
      %591 = vmatprep.subr.mxu0 0.0
      %592 = vmatpush1.msra.mxu0 0.0
      %593 = vmatprep.subr.mxu0 0.0
      %594 = vmatpush1.msra.mxu0 0.0
      %595 = vmatprep.mubr.f32.mxu0 0.0
      %596 = vmatmul.mubr.f32.gmra.mrb[0].mxu0 %v520
      %v597 = vpop.f32.mrb[0].mxu0
      %v598 = vadd.f32 0.0, %v597
      %v599 = vpop.f32.mrb[0].mxu0
      %600 = vmatprep.mubr.f32.mxu0 0.0
      %601 = vmatmul.mubr.f32.gmra.mrb[0].mxu0 %v523
      %v602 = vpop.f32.mrb[0].mxu0
      %v603 = vadd.f32 0.0, %v602
      %v604 = vpop.f32.mrb[0].mxu0
      %605 = vmatprep.mubr.f32.mxu0 0.0
      %606 = vmatmul.mubr.f32.gmra.mrb[0].mxu0 %v526
      %v607 = vpop.f32.mrb[0].mxu0
      %v608 = vadd.f32 0.0, %v607
      %v609 = vpop.f32.mrb[0].mxu0
      %610 = vmatprep.mubr.f32.mxu0 0.0
      %611 = vmatmul.mubr.f32.gmra.mrb[0].mxu0 %v529
      %v612 = vpop.f32.mrb[0].mxu0
      %v613 = vadd.f32 0.0, %v612
      %v614 = vpop.f32.mrb[0].mxu0
      %615 = vdwg.mxu0
      %v617 = vsel %vm518, %v510, 0
      %v620 = vsel %vm518, %v511, 0
      %v623 = vsel %vm518, %v512, 0
      %v626 = vsel %vm518, %v513, 0
      %628 = vmatprep.subr.mxu0 0.0
      %629 = vmatpush1.msra.mxu0 %v405
      %630 = vmatprep.subr.mxu0 0.0
      %631 = vmatpush1.msra.mxu0 %v406
      %632 = vmatprep.subr.mxu0 0.0
      %633 = vmatpush1.msra.mxu0 %v407
      %634 = vmatprep.subr.mxu0 0.0
      %635 = vmatpush1.msra.mxu0 %v408
      %636 = vmatprep.subr.mxu0 0.0
      %637 = vmatpush1.msra.mxu0 0.0
      %638 = vmatprep.subr.mxu0 0.0
      %639 = vmatpush1.msra.mxu0 0.0
      %640 = vmatprep.subr.mxu0 0.0
      %641 = vmatpush1.msra.mxu0 0.0
      %642 = vmatprep.subr.mxu0 0.0
      %643 = vmatpush1.msra.mxu0 0.0
      %644 = vmatprep.subr.mxu0 0.0
      %645 = vmatpush1.msra.mxu0 0.0
      %646 = vmatprep.subr.mxu0 0.0
      %647 = vmatpush1.msra.mxu0 0.0
      %648 = vmatprep.subr.mxu0 0.0
      %649 = vmatpush1.msra.mxu0 0.0
      %650 = vmatprep.subr.mxu0 0.0
      %651 = vmatpush1.msra.mxu0 0.0
      %652 = vmatprep.subr.mxu0 0.0
      %653 = vmatpush1.msra.mxu0 0.0
      %654 = vmatprep.subr.mxu0 0.0
      %655 = vmatpush1.msra.mxu0 0.0
      %656 = vmatprep.subr.mxu0 0.0
      %657 = vmatpush1.msra.mxu0 0.0
      %658 = vmatprep.subr.mxu0 0.0
      %659 = vmatpush1.msra.mxu0 0.0
      %660 = vmatprep.subr.mxu0 0.0
      %661 = vmatpush1.msra.mxu0 0.0
      %662 = vmatprep.subr.mxu0 0.0
      %663 = vmatpush1.msra.mxu0 0.0
      %664 = vmatprep.subr.mxu0 0.0
      %665 = vmatpush1.msra.mxu0 0.0
      %666 = vmatprep.subr.mxu0 0.0
      %667 = vmatpush1.msra.mxu0 0.0
      %668 = vmatprep.subr.mxu0 0.0
      %669 = vmatpush1.msra.mxu0 0.0
      %670 = vmatprep.subr.mxu0 0.0
      %671 = vmatpush1.msra.mxu0 0.0
      %672 = vmatprep.subr.mxu0 0.0
      %673 = vmatpush1.msra.mxu0 0.0
      %674 = vmatprep.subr.mxu0 0.0
      %675 = vmatpush1.msra.mxu0 0.0
      %676 = vmatprep.subr.mxu0 0.0
      %677 = vmatpush1.msra.mxu0 0.0
      %678 = vmatprep.subr.mxu0 0.0
      %679 = vmatpush1.msra.mxu0 0.0
      %680 = vmatprep.subr.mxu0 0.0
      %681 = vmatpush1.msra.mxu0 0.0
      %682 = vmatprep.subr.mxu0 0.0
      %683 = vmatpush1.msra.mxu0 0.0
      %684 = vmatprep.subr.mxu0 0.0
      %685 = vmatpush1.msra.mxu0 0.0
      %686 = vmatprep.subr.mxu0 0.0
      %687 = vmatpush1.msra.mxu0 0.0
      %688 = vmatprep.subr.mxu0 0.0
      %689 = vmatpush1.msra.mxu0 0.0
      %690 = vmatprep.subr.mxu0 0.0
      %691 = vmatpush1.msra.mxu0 0.0
      %692 = vmatprep.mubr.f32.mxu0 0.0
      %693 = vmatmul.mubr.f32.gmra.mrb[0].mxu0 %v617
      %v694 = vpop.f32.mrb[0].mxu0
      %v695 = vadd.f32 %v598, %v694
      %v696 = vpop.f32.mrb[0].mxu0
      %697 = vmatprep.mubr.f32.mxu0 0.0
      %698 = vmatmul.mubr.f32.gmra.mrb[0].mxu0 %v620
      %v699 = vpop.f32.mrb[0].mxu0
      %v700 = vadd.f32 %v603, %v699
      %v701 = vpop.f32.mrb[0].mxu0
      %702 = vmatprep.mubr.f32.mxu0 0.0
      %703 = vmatmul.mubr.f32.gmra.mrb[0].mxu0 %v623
      %v704 = vpop.f32.mrb[0].mxu0
      %v705 = vadd.f32 %v608, %v704
      %v706 = vpop.f32.mrb[0].mxu0
      %707 = vmatprep.mubr.f32.mxu0 0.0
      %708 = vmatmul.mubr.f32.gmra.mrb[0].mxu0 %v626
      %v709 = vpop.f32.mrb[0].mxu0
      %v710 = vadd.f32 %v613, %v709
      %v711 = vpop.f32.mrb[0].mxu0
      %712 = vdwg.mxu0
      %v713 = vmul.f32 %v695, 0.2
      %v714 = vmul.f32 %v700, 0.2
      %v715 = vmul.f32 %v705, 0.2
      %v716 = vmul.f32 %v710, 0.2
      %v717 = vld [vmem:[%s387] sm:$0xff]
      %v718 = vld [vmem:[%s387 + $0x8] sm:$0xff]
      %v719 = vld [vmem:[%s387 + $0x10] sm:$0xff]
      %v720 = vld [vmem:[%s387 + $0x18] sm:$0xff]
      %v721 = vadd.f32 %v713, %v717
      %v722 = vadd.f32 %v714, %v718
      %v723 = vadd.f32 %v715, %v719
      %v724 = vadd.f32 %v716, %v720
      %725 = vst [vmem:[%s396] sm:$0xff] %v721
      %726 = vst [vmem:[%s396 + $0x8] sm:$0xff] %v722
      %727 = vst [vmem:[%s396 + $0x10] sm:$0xff] %v723
      %728 = vst [vmem:[%s396 + $0x18] sm:$0xff] %v724
      %v729 = vld [vmem:[%s4] sm:$0x7]
      %v730 = vld [vmem:[%s5] sm:$0x7]
      %v732 = vsel %vm518, %v730, 0
      %734 = vmatprep.subr.mxu0 0.0
      %735 = vmatpush1.msra.mxu0 %v492
      %736 = vmatprep.subr.mxu0 0.0
      %737 = vmatpush1.msra.mxu0 %v497
      %738 = vmatprep.subr.mxu0 0.0
      %739 = vmatpush1.msra.mxu0 %v502
      %740 = vmatprep.subr.mxu0 0.0
      %741 = vmatpush1.msra.mxu0 %v507
      %742 = vmatprep.subr.mxu0 0.0
      %743 = vmatpush1.msra.mxu0 0.0
      %744 = vmatprep.subr.mxu0 0.0
      %745 = vmatpush1.msra.mxu0 0.0
      %746 = vmatprep.subr.mxu0 0.0
      %747 = vmatpush1.msra.mxu0 0.0
      %748 = vmatprep.subr.mxu0 0.0
      %749 = vmatpush1.msra.mxu0 0.0
      %750 = vmatprep.subr.mxu0 0.0
      %751 = vmatpush1.msra.mxu0 0.0
      %752 = vmatprep.subr.mxu0 0.0
      %753 = vmatpush1.msra.mxu0 0.0
      %754 = vmatprep.subr.mxu0 0.0
      %755 = vmatpush1.msra.mxu0 0.0
      %756 = vmatprep.subr.mxu0 0.0
      %757 = vmatpush1.msra.mxu0 0.0
      %758 = vmatprep.subr.mxu0 0.0
      %759 = vmatpush1.msra.mxu0 0.0
      %760 = vmatprep.subr.mxu0 0.0
      %761 = vmatpush1.msra.mxu0 0.0
      %762 = vmatprep.subr.mxu0 0.0
      %763 = vmatpush1.msra.mxu0 0.0
      %764 = vmatprep.subr.mxu0 0.0
      %765 = vmatpush1.msra.mxu0 0.0
      %766 = vmatprep.subr.mxu0 0.0
      %767 = vmatpush1.msra.mxu0 0.0
      %768 = vmatprep.subr.mxu0 0.0
      %769 = vmatpush1.msra.mxu0 0.0
      %770 = vmatprep.subr.mxu0 0.0
      %771 = vmatpush1.msra.mxu0 0.0
      %772 = vmatprep.subr.mxu0 0.0
      %773 = vmatpush1.msra.mxu0 0.0
      %774 = vmatprep.subr.mxu0 0.0
      %775 = vmatpush1.msra.mxu0 0.0
      %776 = vmatprep.subr.mxu0 0.0
      %777 = vmatpush1.msra.mxu0 0.0
      %778 = vmatprep.subr.mxu0 0.0
      %779 = vmatpush1.msra.mxu0 0.0
      %780 = vmatprep.subr.mxu0 0.0
      %781 = vmatpush1.msra.mxu0 0.0
      %782 = vmatprep.subr.mxu0 0.0
      %783 = vmatpush1.msra.mxu0 0.0
      %784 = vmatprep.subr.mxu0 0.0
      %785 = vmatpush1.msra.mxu0 0.0
      %786 = vmatprep.subr.mxu0 0.0
      %787 = vmatpush1.msra.mxu0 0.0
      %788 = vmatprep.subr.mxu0 0.0
      %789 = vmatpush1.msra.mxu0 0.0
      %790 = vmatprep.subr.mxu0 0.0
      %791 = vmatpush1.msra.mxu0 0.0
      %792 = vmatprep.subr.mxu0 0.0
      %793 = vmatpush1.msra.mxu0 0.0
      %794 = vmatprep.subr.mxu0 0.0
      %795 = vmatpush1.msra.mxu0 0.0
      %796 = vmatprep.subr.mxu0 0.0
      %797 = vmatpush1.msra.mxu0 0.0
      %798 = vmatprep.mubr.f32.mxu0 0.0
      %799 = vmatmul.mubr.f32.gmra.mrb[0].mxu0 %v732
      %v800 = vpop.f32.mrb[0].mxu0
      %v801 = vadd.f32 0.0, %v800
      %v802 = vpop.f32.mrb[0].mxu0
      %803 = vdwg.mxu0
      %v805 = vsel %vm518, %v729, 0
      %807 = vmatprep.subr.mxu0 0.0
      %808 = vmatpush1.msra.mxu0 %v405
      %809 = vmatprep.subr.mxu0 0.0
      %810 = vmatpush1.msra.mxu0 %v406
      %811 = vmatprep.subr.mxu0 0.0
      %812 = vmatpush1.msra.mxu0 %v407
      %813 = vmatprep.subr.mxu0 0.0
      %814 = vmatpush1.msra.mxu0 %v408
      %815 = vmatprep.subr.mxu0 0.0
      %816 = vmatpush1.msra.mxu0 0.0
      %817 = vmatprep.subr.mxu0 0.0
      %818 = vmatpush1.msra.mxu0 0.0
      %819 = vmatprep.subr.mxu0 0.0
      %820 = vmatpush1.msra.mxu0 0.0
      %821 = vmatprep.subr.mxu0 0.0
      %822 = vmatpush1.msra.mxu0 0.0
      %823 = vmatprep.subr.mxu0 0.0
      %824 = vmatpush1.msra.mxu0 0.0
      %825 = vmatprep.subr.mxu0 0.0
      %826 = vmatpush1.msra.mxu0 0.0
      %827 = vmatprep.subr.mxu0 0.0
      %828 = vmatpush1.msra.mxu0 0.0
      %829 = vmatprep.subr.mxu0 0.0
      %830 = vmatpush1.msra.mxu0 0.0
      %831 = vmatprep.subr.mxu0 0.0
      %832 = vmatpush1.msra.mxu0 0.0
      %833 = vmatprep.subr.mxu0 0.0
      %834 = vmatpush1.msra.mxu0 0.0
      %835 = vmatprep.subr.mxu0 0.0
      %836 = vmatpush1.msra.mxu0 0.0
      %837 = vmatprep.subr.mxu0 0.0
      %838 = vmatpush1.msra.mxu0 0.0
      %839 = vmatprep.subr.mxu0 0.0
      %840 = vmatpush1.msra.mxu0 0.0
      %841 = vmatprep.subr.mxu0 0.0
      %842 = vmatpush1.msra.mxu0 0.0
      %843 = vmatprep.subr.mxu0 0.0
      %844 = vmatpush1.msra.mxu0 0.0
      %845 = vmatprep.subr.mxu0 0.0
      %846 = vmatpush1.msra.mxu0 0.0
      %847 = vmatprep.subr.mxu0 0.0
      %848 = vmatpush1.msra.mxu0 0.0
      %849 = vmatprep.subr.mxu0 0.0
      %850 = vmatpush1.msra.mxu0 0.0
      %851 = vmatprep.subr.mxu0 0.0
      %852 = vmatpush1.msra.mxu0 0.0
      %853 = vmatprep.subr.mxu0 0.0
      %854 = vmatpush1.msra.mxu0 0.0
      %855 = vmatprep.subr.mxu0 0.0
      %856 = vmatpush1.msra.mxu0 0.0
      %857 = vmatprep.subr.mxu0 0.0
      %858 = vmatpush1.msra.mxu0 0.0
      %859 = vmatprep.subr.mxu0 0.0
      %860 = vmatpush1.msra.mxu0 0.0
      %861 = vmatprep.subr.mxu0 0.0
      %862 = vmatpush1.msra.mxu0 0.0
      %863 = vmatprep.subr.mxu0 0.0
      %864 = vmatpush1.msra.mxu0 0.0
      %865 = vmatprep.subr.mxu0 0.0
      %866 = vmatpush1.msra.mxu0 0.0
      %867 = vmatprep.subr.mxu0 0.0
      %868 = vmatpush1.msra.mxu0 0.0
      %869 = vmatprep.subr.mxu0 0.0
      %870 = vmatpush1.msra.mxu0 0.0
      %871 = vmatprep.mubr.f32.mxu0 0.0
      %872 = vmatmul.mubr.f32.gmra.mrb[0].mxu0 %v805
      %v873 = vpop.f32.mrb[0].mxu0
      %v874 = vadd.f32 %v801, %v873
      %v875 = vpop.f32.mrb[0].mxu0
      %876 = vdwg.mxu0
      %v877 = vmul.f32 %v874, 0.2
      %v878 = vld [vmem:[%s391] sm:$0x7]
      %v879 = vadd.f32 %v877, %v878
      %880 = vst [vmem:[%s400] sm:$0x7] %v879
      %p881 = scmp.lt.s32.totalorder %s21, 1
      %s882 = scalar_select %p881, %s21, 1
      %s883 = smul.addr %s882, 4
      %s884 = smul.addr %s883, 8
      %s885 = scalar_lea.vmem %s8, %s884
      %p886 = scmp.lt.s32.totalorder %s21, 1
      %s887 = scalar_select %p886, %s21, 1
      %s888 = smul.addr %s887, 4
      %s889 = scalar_lea.vmem %s9, %s888
      // Predicated region
      $region53: #{generator_forward.43} parent=51 // pred_check
        %p890 = pneg %p227
      $region54: #{generator_forward.43} parent=51 // pred_check_branch
        %892 = sbr.rel (%p890) target = $region56
      $region55: #{generator_forward.43} parent=51 // pred_region
        _
      $region56: #{generator_forward.43} parent=51 // pred_fallthru
        _
      // Predicated region
      $region57: #{generator_forward.43} parent=51 // pred_check
        %p893 = pneg %p253
      $region58: #{generator_forward.43} parent=51 // pred_check_branch
        %895 = sbr.rel (%p893) target = $region60
      $region59: #{generator_forward.43} parent=51 // pred_region
        _
      $region60: #{generator_forward.43} parent=51 // pred_fallthru
        _
    $region52: #{generator_forward.43} parent=5 // pred_fallthru
      _
    %p896 = scmp.le.s32.totalorder 2, %s16
    // Predicated region
    $region61: #{generator_forward.43} parent=5 // pred_check
      %p897 = pneg %p896
    $region62: #{generator_forward.43} parent=5 // pred_check_branch
      %899 = sbr.rel (%p897) target = $region64
    $region63: #{generator_forward.43} parent=5 // pred_region
      %s900 = ssub.s32 %s16, 2
      // Predicated region
      $region65: #{generator_forward.43} parent=63 // pred_check
        %p901 = pneg %p233
      $region66: #{generator_forward.43} parent=63 // pred_check_branch
        %903 = sbr.rel (%p901) target = $region68
      $region67: #{generator_forward.43} parent=63 // pred_region
        %p904 = scmp.lt.s32.totalorder %s22, 1
        %s905 = scalar_select %p904, %s22, 1
        %s906 = smul.addr %s905, 4
        %s907 = smul.addr %s906, 8
        %s908 = scalar_lea.vmem %s8, %s907
      $region68: #{generator_forward.43} parent=63 // pred_fallthru
        _
      // Predicated region
      $region69: #{generator_forward.43} parent=63 // pred_check
        %p909 = pneg %p259
      $region70: #{generator_forward.43} parent=63 // pred_check_branch
        %911 = sbr.rel (%p909) target = $region72
      $region71: #{generator_forward.43} parent=63 // pred_region
        %p912 = scmp.lt.s32.totalorder %s22, 1
        %s913 = scalar_select %p912, %s22, 1
        %s914 = smul.addr %s913, 4
        %s915 = scalar_lea.vmem %s9, %s914
      $region72: #{generator_forward.43} parent=63 // pred_fallthru
        _
    $region64: #{generator_forward.43} parent=5 // pred_fallthru
      _
  $region6: #{generator_forward.43} parent=0 // loop_footer
    %s20 = sadd.s32 1, %s16
  $region7: #{generator_forward.43} parent=0 // loop_footer_branch
    %15 = sbr.rel target = $region3
  $region8: #{generator_forward.43} parent=0 // loop_exit
    _

</llo_original>
